<compile_context>
chip_gen: v6e
topology: v6e:2x2x1
jax: 0.10.0
libtpu: 0.0.40
codegen_flags: <defaults>
</compile_context>

<pallas_src>
import functools

import jax
import jax.numpy as jnp
from jax import lax
from jax.experimental import pallas as pl
from jax.experimental.pallas import tpu as pltpu


def _round_up(x, m):
    return (x + m - 1) // m * m


@functools.lru_cache(maxsize=None)
def _vmem_capacity():
    try:
        return int(pltpu.get_tpu_info().vmem_capacity_bytes)
    except Exception:
        return 64 * 1024 * 1024          # conservative (v7x-sized) fallback


def _vmem_budget():
    # Leave headroom for Mosaic internal scratch: ~3/4 of physical, capped.
    cap = _vmem_capacity()
    return int(min(cap - cap // 4, 96 * 1024 * 1024))


def _default_tile_m():
    # 128 MiB VMEM (v5e/v6e): big row tiles.  64 MiB (v7x): smaller, so the
    # fused-downsample conv3 working set (w3 + wd + activations, double
    # buffered) stays comfortably resident.
    return 1024 if _vmem_capacity() >= (100 << 20) else 256
    # TODO(synk): pipeline_mode=pl.Buffered(1) on the constant-index weight /
    # shift BlockSpecs would reclaim their second buffers on v7x.


def _pick_row_tile(M, max_tile):
    """Largest 8-aligned divisor of M that is <= max_tile; else pad fallback."""
    cap = min(max_tile, M)
    for d in range(cap - cap % 8, 7, -8):
        if M % d == 0:
            return d, M                                   # no padding needed
    # TODO(synk): handle one ragged last block instead of jnp.pad round trip.
    tile = min(max_tile, _round_up(M, 8))
    return tile, _round_up(M, tile)


# ----------------------------------------------------------------------------
# Kernel 1: fused 1x1 conv (matmul, BN-scale pre-folded into w) + shift +
#           optional residual / fused-downsample branch + ReLU
# ----------------------------------------------------------------------------
def _conv1x1_kernel(do_relu, has_res, has_ds, x_ref, w_ref, t_ref, *rest):
    idx = 0
    res_ref = None
    if has_res:
        res_ref = rest[idx]
        idx += 1
    if has_ds:
        xr_ref, wd_ref, td_ref = rest[idx:idx + 3]
        idx += 3
    o_ref = rest[idx]

    acc = jnp.dot(x_ref[...], w_ref[...],
                  preferred_element_type=jnp.float32) + t_ref[...]
    if has_ds:
        # identity = relu(BNd(x_strided @ wd)) — this module's downsample has
        # a ReLU (ConvModule2d act_layer=nn.ReLU).
        ident = jnp.dot(xr_ref[...], wd_ref[...],
                        preferred_element_type=jnp.float32) + td_ref[...]
        acc = acc + jnp.maximum(ident, 0.0)
    if has_res:
        acc = acc + res_ref[...].astype(jnp.float32)
    if do_relu:
        acc = jnp.maximum(acc, 0.0)
    o_ref[...] = acc.astype(o_ref.dtype)


def conv1x1_bn(x_flat, w, shift, *, relu, residual=None, downsample=None,
               tile_m=None):
    """x_flat: (M, Cin); w: (Cin, Cout) with BN scale folded in; shift: (Cout,).

    residual  : optional (M, Cout) added before the final ReLU.
    downsample: optional (x_strided_flat (M, Cd), wd (Cd, Cout), shift_d) for an
                in-kernel fused  relu(x_strided @ wd + shift_d)  identity.
    """
    M, Cin = x_flat.shape
    Cout = w.shape[1]
    if tile_m is None:
        tile_m = _default_tile_m()
    tile, Mp = _pick_row_tile(M, tile_m)
    grid = (Mp // tile,)

    def padded(a):
        return a if a.shape[0] == Mp else jnp.pad(a, ((0, Mp - a.shape[0]), (0, 0)))

    args = [padded(x_flat), w, shift.reshape(1, Cout).astype(jnp.float32)]
    in_specs = [
        pl.BlockSpec((tile, Cin), lambda i: (i, 0)),
        pl.BlockSpec((Cin, Cout), lambda i: (0, 0)),
        pl.BlockSpec((1, Cout), lambda i: (0, 0)),
    ]

    has_res = residual is not None
    has_ds = downsample is not None
    if has_res:
        args.append(padded(residual))
        in_specs.append(pl.BlockSpec((tile, Cout), lambda i: (i, 0)))
    if has_ds:
        xr, wd, td = downsample
        Cd = xr.shape[1]
        args += [padded(xr), wd, td.reshape(1, Cout).astype(jnp.float32)]
        in_specs += [
            pl.BlockSpec((tile, Cd), lambda i: (i, 0)),
            pl.BlockSpec((Cd, Cout), lambda i: (0, 0)),
            pl.BlockSpec((1, Cout), lambda i: (0, 0)),
        ]

    kernel = functools.partial(_conv1x1_kernel, relu, has_res, has_ds)
    out = pl.pallas_call(
        kernel,
        out_shape=jax.ShapeDtypeStruct((Mp, Cout), x_flat.dtype),
        grid=grid,
        in_specs=in_specs,
        out_specs=pl.BlockSpec((tile, Cout), lambda i: (i, 0)),
        compiler_params=pltpu.CompilerParams(
            dimension_semantics=("parallel",),
            vmem_limit_bytes=_vmem_budget()),
    )(*args)
    return out[:M] if Mp != M else out


# ----------------------------------------------------------------------------
# Kernel 2: fused  conv1 (1x1 + shift + ReLU, recomputed per row tile w/ halo)
#           -> conv2 (3x3 pad=1 stride s, single im2col MXU contraction)
#           -> shift + ReLU
#   grid = (batch, output-row tiles); output is a lane-dense (rows, Cout) slab.
# ----------------------------------------------------------------------------
def _conv12_kernel(s2, tile_ho, Wout, Hp, x_ref, w1_ref, t1_ref, w2_ref, t2_ref,
                   o_ref):
    # x_ref : (Hp, Wp, Cin)   spatially zero-padded conv1 input (batch squeezed)
    # w1_ref: (Cin, Cmid)     conv1 1x1 weight (BN1 scale folded in)
    # t1_ref: (1, Cmid)       conv1 bias + BN1 shift
    # w2_ref: (9*Cmid, Cout)  conv2 3x3 weight, (ky,kx,cin)-major (BN2 scale folded)
    # t2_ref: (1, Cout)
    # o_ref : (tile_ho*Wout, Cout)
    Wp = x_ref.shape[1]
    Cin = x_ref.shape[2]
    Cmid = w1_ref.shape[1]
    hb = pl.program_id(1)

    rows_in = (tile_ho - 1) * s2 + 3
    r0 = hb * (tile_ho * s2)
    xr = x_ref[pl.ds(r0, rows_in), :, :]                  # (rows_in, Wp, Cin)

    # ---- conv1 1x1 on the padded rows (halo recompute), zero the pad border ----
    h1 = jnp.dot(xr.reshape(rows_in * Wp, Cin), w1_ref[...],
                 preferred_element_type=jnp.float32) + t1_ref[...]
    h1 = jnp.maximum(h1, 0.0).reshape(rows_in, Wp, Cmid)
    grow = r0 + lax.broadcasted_iota(jnp.int32, (rows_in, Wp, 1), 0)
    gcol = lax.broadcasted_iota(jnp.int32, (rows_in, Wp, 1), 1)
    interior = (grow > 0) & (grow < Hp - 1) & (gcol > 0) & (gcol < Wp - 1)
    h1 = jnp.where(interior, h1, 0.0).astype(w2_ref.dtype)

    # ---- conv2 3x3: staged im2col slab, ONE K=9*Cmid contraction ----
    parts = []
    for ky in range(3):
        for kx in range(3):
            if s2 == 1:
                patch = h1[ky:ky + tile_ho, kx:kx + Wout, :]
            else:
                # TODO(synk): restructure strided access as a (W/s, s) reshape +
                # unit-axis slice to avoid XLU sublane gathers.
                patch = lax.slice(
                    h1, (ky, kx, 0),
                    (ky + (tile_ho - 1) * s2 + 1,
                     kx + (Wout - 1) * s2 + 1, Cmid),
                    (s2, s2, 1))
            parts.append(patch)
    slab = jnp.concatenate(parts, axis=-1).reshape(tile_ho * Wout, 9 * Cmid)
    acc = jnp.dot(slab, w2_ref[...],
                  preferred_element_type=jnp.float32) + t2_ref[...]
    o_ref[...] = jnp.maximum(acc, 0.0).astype(o_ref.dtype)


def conv12_fused(x1_nhwc, w1, t1, w2_hwio, t2, *, stride=1, max_tile_rows=None):
    """Fused conv1(1x1)+BN+ReLU -> conv2(3x3,pad=1,stride)+BN+ReLU.

    x1_nhwc: (N, H1, W1, Cin) — conv1 input (already strided if conv1 strides).
    Returns lane-dense flattened output (N*H2*W2, Cout) and (N, H2, W2).
    """
    N, H1, W1, Cin = x1_nhwc.shape
    Cmid = w1.shape[1]
    Cout = w2_hwio.shape[3]
    H2 = (H1 - 1) // stride + 1
    W2 = (W1 - 1) // stride + 1
    Hp, Wp = H1 + 2, W1 + 2

    x_pad = jnp.pad(x1_nhwc, ((0, 0), (1, 1), (1, 1), (0, 0)))
    w2_flat = w2_hwio.reshape(9 * Cmid, Cout)

    if max_tile_rows is None:
        max_tile_rows = 2048 if _vmem_capacity() >= (100 << 20) else 1024
    itemsize = jnp.dtype(x1_nhwc.dtype).itemsize
    rows_cap = max(W2, min(max_tile_rows,
                           (12 << 20) // max(1, 9 * Cmid * itemsize)))

    # Largest divisor of H2 with an 8-aligned, budget-fitting output slab.
    tile_ho = None
    for d in range(H2, 0, -1):
        if H2 % d == 0 and d * W2 <= rows_cap and (d * W2) % 8 == 0:
            tile_ho = d
            break
    if tile_ho is None:
        # TODO(synk): pad output rows to 8-alignment instead of accepting
        # masked partial stores for shapes like 7x7 / 14x14.
        for d in range(H2, 0, -1):
            if H2 % d == 0 and d * W2 <= rows_cap:
                tile_ho = d
                break
    num_hb = H2 // tile_ho

    # TODO(synk): for early stages with Cout < 128, pad channels to 128 for
    # lane-dense (unmasked) stores.
    kernel = functools.partial(_conv12_kernel, stride, tile_ho, W2, Hp)
    out = pl.pallas_call(
        kernel,
        out_shape=jax.ShapeDtypeStruct((N * H2 * W2, Cout), x1_nhwc.dtype),
        grid=(N, num_hb),
        in_specs=[
            # Full padded image of batch n, resident across the row-tile axis.
            pl.BlockSpec((None, Hp, Wp, Cin), lambda n, h: (n, 0, 0, 0)),
            pl.BlockSpec((Cin, Cmid), lambda n, h: (0, 0)),
            pl.BlockSpec((1, Cmid), lambda n, h: (0, 0)),
            pl.BlockSpec((9 * Cmid, Cout), lambda n, h: (0, 0)),
            pl.BlockSpec((1, Cout), lambda n, h: (0, 0)),
        ],
        out_specs=pl.BlockSpec((tile_ho * W2, Cout),
                               lambda n, h: (n * num_hb + h, 0)),
        compiler_params=pltpu.CompilerParams(
            # No cross-h accumulator; both axes independent -> both parallel
            # (uses both TensorCores on v7x even at N=1).
            dimension_semantics=("parallel", "parallel"),
            vmem_limit_bytes=_vmem_budget()),
    )(x_pad, w1,
      t1.reshape(1, Cmid).astype(jnp.float32),
      w2_flat,
      t2.reshape(1, Cout).astype(jnp.float32))
    return out, (N, H2, W2)


# ----------------------------------------------------------------------------
# BottleNeck forward
# ----------------------------------------------------------------------------
def bottleneck_forward_nhwc(x, params, *, stride=1, stride_change=False):
    N, H, W, Cin = x.shape
    s1 = 1 if stride_change else stride      # stride of conv1 (1x1)
    s2 = stride if stride_change else 1      # stride of conv2 (3x3)

    # Host-side folding:
    #   BN(conv(x) + b) = (x @ (w*scale)) + (b*scale + shift)
    w1 = params["w1"] * params["scale1"][None, :]
    t1 = params["shift1"] + params["b1"] * params["scale1"]
    w2 = params["w2"] * params["scale2"][None, None, None, :]
    t2 = params["shift2"] + params["b2"] * params["scale2"]
    w3 = params["w3"] * params["scale3"][None, :]
    t3 = params["shift3"] + params["b3"] * params["scale3"]

    # --- conv1 (1x1, stride s1) + BN + ReLU fused into the 3x3 conv2 kernel ---
    # TODO(synk): push the s1 / downsample strides into the kernel index_map
    # instead of host-side strided slices.
    x1 = x[:, ::s1, ::s1, :] if s1 != 1 else x
    h2_flat, (N2, H2, W2) = conv12_fused(x1, w1, t1, w2, t2, stride=s2)

    # --- conv3 (1x1) + BN, fused identity/downsample add + final ReLU ---
    Cexp = params["w3"].shape[1]
    if params.get("wd") is not None:
        wd = params["wd"] * params["scaled"][None, :]
        td = params["shiftd"] + params["bd"] * params["scaled"]
        xi = x[:, ::stride, ::stride, :] if stride != 1 else x
        assert xi.shape[1] == H2 and xi.shape[2] == W2
        out_flat = conv1x1_bn(h2_flat, w3, t3, relu=True,
                              downsample=(xi.reshape(-1, Cin), wd, td))
    else:
        if stride != 1 or Cin != Cexp:
            raise ValueError("downsample params are required when stride != 1 "
                             "or in_channels != out_channels * expansion")
        out_flat = conv1x1_bn(h2_flat, w3, t3, relu=True,
                              residual=x.reshape(-1, Cin))
    return out_flat.reshape(N2, H2, W2, Cexp)


def bottleneck_forward(x_nchw, params, *, stride=1, stride_change=False):
    # NCHW wrapper for parity with the PyTorch module; chain blocks via the
    # NHWC entry point to avoid per-block transposes.
    x = jnp.transpose(x_nchw, (0, 2, 3, 1))
    out = bottleneck_forward_nhwc(x, params, stride=stride,
                                  stride_change=stride_change)
    return jnp.transpose(out, (0, 3, 1, 2))


# ----------------------------------------------------------------------------
# Deterministic parameter init (inference-mode BN folded to scale/shift)
# ----------------------------------------------------------------------------
def init_params(key, in_channels, out_channels, expansion=4, downsample=True,
                dtype=jnp.float32):
    def bn_fold(k, c):
        k1, k2, k3, k4 = jax.random.split(k, 4)
        gamma = jax.random.uniform(k1, (c,), minval=0.5, maxval=1.5)
        beta = jax.random.normal(k2, (c,)) * 0.1
        mean = jax.random.normal(k3, (c,)) * 0.1
        var = jax.random.uniform(k4, (c,), minval=0.5, maxval=1.5)
        scale = gamma / jnp.sqrt(var + 1e-5)
        shift = beta - mean * scale
        return scale.astype(dtype), shift.astype(dtype)

    keys = jax.random.split(key, 12)
    cexp = out_channels * expansion
    p = {}
    p["w1"] = (jax.random.normal(keys[0], (in_channels, out_channels)) * 0.2).astype(dtype)
    p["b1"] = (jax.random.normal(keys[1], (out_channels,)) * 0.05).astype(dtype)
    p["scale1"], p["shift1"] = bn_fold(keys[2], out_channels)
    p["w2"] = (jax.random.normal(keys[3], (3, 3, out_channels, out_channels)) * 0.1).astype(dtype)
    p["b2"] = (jax.random.normal(keys[4], (out_channels,)) * 0.05).astype(dtype)
    p["scale2"], p["shift2"] = bn_fold(keys[5], out_channels)
    p["w3"] = (jax.random.normal(keys[6], (out_channels, cexp)) * 0.2).astype(dtype)
    p["b3"] = (jax.random.normal(keys[7], (cexp,)) * 0.05).astype(dtype)
    p["scale3"], p["shift3"] = bn_fold(keys[8], cexp)
    if downsample:
        p["wd"] = (jax.random.normal(keys[9], (in_channels, cexp)) * 0.2).astype(dtype)
        p["bd"] = (jax.random.normal(keys[10], (cexp,)) * 0.05).astype(dtype)
        p["scaled"], p["shiftd"] = bn_fold(keys[11], cexp)
    else:
        p["wd"] = None
    return p


# ----------------------------------------------------------------------------
# Pure-JAX reference (ground truth at HIGHEST precision)
# ----------------------------------------------------------------------------
def ref_forward(x_nchw, params, *, stride=1, stride_change=False):
    prec = jax.lax.Precision.HIGHEST

    def conv2d(x, w_hwio, b, s, pad):
        y = jax.lax.conv_general_dilated(
            x, w_hwio, (s, s), [(pad, pad), (pad, pad)],
            dimension_numbers=("NCHW", "HWIO", "NCHW"), precision=prec)
        return y + b.reshape(1, -1, 1, 1)

    def bn(x, scale, shift):
        return x * scale.reshape(1, -1, 1, 1) + shift.reshape(1, -1, 1, 1)

    s1 = 1 if stride_change else stride
    s2 = stride if stride_change else 1
    h = jax.nn.relu(bn(conv2d(x_nchw, params["w1"][None, None], params["b1"], s1, 0),
                       params["scale1"], params["shift1"]))
    h = jax.nn.relu(bn(conv2d(h, params["w2"], params["b2"], s2, 1),
                       params["scale2"], params["shift2"]))
    h = bn(conv2d(h, params["w3"][None, None], params["b3"], 1, 0),
           params["scale3"], params["shift3"])
    if params["wd"] is not None:
        ident = jax.nn.relu(bn(conv2d(x_nchw, params["wd"][None, None], params["bd"], stride, 0),
                               params["scaled"], params["shiftd"]))
    else:
        ident = x_nchw
    return jax.nn.relu(h + ident)


if __name__ == "__main__":
    key = jax.random.PRNGKey(0)
    kx1, kp1, kx2, kp2 = jax.random.split(key, 4)

    # --- Test 1: downsample path (Cin != Cexp), stride=1 ---
    N, Cin, H, W = 2, 8, 16, 16
    out_channels, expansion, stride = 8, 4, 1
    x = jax.random.normal(kx1, (N, Cin, H, W), dtype=jnp.float32)
    params = init_params(kp1, Cin, out_channels, expansion, downsample=True)

    out = jax.block_until_ready(
        bottleneck_forward(x, params, stride=stride, stride_change=False))
    ref = ref_forward(x, params, stride=stride, stride_change=False)
    assert out.shape == ref.shape, (out.shape, ref.shape)
    err1 = float(jnp.max(jnp.abs(out - ref)))
    # DEFAULT MXU precision (bf16 passes) vs f32 HIGHEST reference -> loosened tol.
    assert jnp.allclose(out, ref, atol=5e-2, rtol=5e-2), err1

    # --- Test 2: identity/residual path (Cin == Cexp, no downsample) ---
    Cin2 = out_channels * expansion
    x2 = jax.random.normal(kx2, (N, Cin2, H, W), dtype=jnp.float32)
    params2 = init_params(kp2, Cin2, out_channels, expansion, downsample=False)

    out2 = jax.block_until_ready(
        bottleneck_forward(x2, params2, stride=1, stride_change=False))
    ref2 = ref_forward(x2, params2, stride=1, stride_change=False)
    assert out2.shape == ref2.shape, (out2.shape, ref2.shape)
    err2 = float(jnp.max(jnp.abs(out2 - ref2)))
    assert jnp.allclose(out2, ref2, atol=5e-2, rtol=5e-2), err2

    print("KERNEL_OK")
</pallas_src>

<mosaic_0001>
module attributes {stable_mosaic.version = 11 : i64} {
  func.func @_conv12_kernel(%arg0: i32, %arg1: i32, %arg2: memref<1x18x18x8xf32, #tpu.memory_space<vmem>>, %arg3: memref<8x8xf32, #tpu.memory_space<vmem>>, %arg4: memref<1x8xf32, #tpu.memory_space<vmem>>, %arg5: memref<72x8xf32, #tpu.memory_space<vmem>>, %arg6: memref<1x8xf32, #tpu.memory_space<vmem>>, %arg7: memref<256x8xf32, #tpu.memory_space<vmem>>) attributes {dimension_semantics = [#tpu.dimension_semantics<parallel>, #tpu.dimension_semantics<parallel>], iteration_bounds = array<i64: 2, 1>, scalar_prefetch = 0 : i64, scratch_operands = 0 : i64, tpu.core_type = #tpu.core_type<tc>, window_params = [{transform_indices = @transform_0, window_bounds = array<i64: 1, 18, 18, 8>}, {pipeline_mode = #tpu.pipeline_mode<synchronous>, transform_indices = @transform_1, window_bounds = array<i64: 8, 8>}, {pipeline_mode = #tpu.pipeline_mode<synchronous>, transform_indices = @transform_2, window_bounds = array<i64: 1, 8>}, {pipeline_mode = #tpu.pipeline_mode<synchronous>, transform_indices = @transform_3, window_bounds = array<i64: 72, 8>}, {pipeline_mode = #tpu.pipeline_mode<synchronous>, transform_indices = @transform_4, window_bounds = array<i64: 1, 8>}, {transform_indices = @transform_5, window_bounds = array<i64: 256, 8>}]} {
    %c16_i32 = arith.constant 16 : i32
    %0 = arith.muli %arg1, %c16_i32 : i32
    %c0 = arith.constant 0 : index
    %1 = arith.index_cast %0 : i32 to index
    %c0_0 = arith.constant 0 : index
    %c0_1 = arith.constant 0 : index
    %2 = vector.load %arg2[%c0, %1, %c0_0, %c0_1] : memref<1x18x18x8xf32, #tpu.memory_space<vmem>>, vector<1x18x18x8xf32>
    %3 = vector.shape_cast %2 : vector<1x18x18x8xf32> to vector<18x18x8xf32>
    %4 = vector.shape_cast %3 : vector<18x18x8xf32> to vector<324x8xf32>
    %c0_2 = arith.constant 0 : index
    %c0_3 = arith.constant 0 : index
    %5 = vector.load %arg3[%c0_2, %c0_3] : memref<8x8xf32, #tpu.memory_space<vmem>>, vector<8x8xf32>
    %cst = arith.constant dense<0.000000e+00> : vector<324x8xf32>
    %6 = tpu.matmul %4, %5, %cst {dimension_numbers = #tpu.dot_dimension_numbers<[1], [0], [0], [1], [0, 0, 1, 1], [], []>} : vector<324x8xf32>, vector<8x8xf32>, vector<324x8xf32> -> vector<324x8xf32>
    %c0_4 = arith.constant 0 : index
    %c0_5 = arith.constant 0 : index
    %7 = vector.load %arg4[%c0_4, %c0_5] : memref<1x8xf32, #tpu.memory_space<vmem>>, vector<1x8xf32>
    %8 = vector.broadcast %7 : vector<1x8xf32> to vector<324x8xf32>
    %9 = arith.addf %6, %8 : vector<324x8xf32>
    %cst_6 = arith.constant 0.000000e+00 : f32
    %10 = vector.broadcast %cst_6 : f32 to vector<324x8xf32>
    %11 = arith.maximumf %9, %10 : vector<324x8xf32>
    %12 = vector.shape_cast %11 : vector<324x8xf32> to vector<18x18x8xf32>
    %13 = tpu.iota {dimensions = array<i32: 0>} : vector<18x18x1xi32>
    %14 = vector.broadcast %0 : i32 to vector<18x18x1xi32>
    %15 = arith.addi %14, %13 : vector<18x18x1xi32>
    %16 = tpu.iota {dimensions = array<i32: 1>} : vector<18x18x1xi32>
    %c0_i32 = arith.constant 0 : i32
    %17 = vector.broadcast %c0_i32 : i32 to vector<18x18x1xi32>
    %18 = arith.cmpi sgt, %15, %17 : vector<18x18x1xi32>
    %c17_i32 = arith.constant 17 : i32
    %19 = vector.broadcast %c17_i32 : i32 to vector<18x18x1xi32>
    %20 = arith.cmpi slt, %15, %19 : vector<18x18x1xi32>
    %21 = arith.andi %18, %20 : vector<18x18x1xi1>
    %c0_i32_7 = arith.constant 0 : i32
    %22 = vector.broadcast %c0_i32_7 : i32 to vector<18x18x1xi32>
    %23 = arith.cmpi sgt, %16, %22 : vector<18x18x1xi32>
    %24 = arith.andi %21, %23 : vector<18x18x1xi1>
    %c17_i32_8 = arith.constant 17 : i32
    %25 = vector.broadcast %c17_i32_8 : i32 to vector<18x18x1xi32>
    %26 = arith.cmpi slt, %16, %25 : vector<18x18x1xi32>
    %27 = arith.andi %24, %26 : vector<18x18x1xi1>
    %cst_9 = arith.constant 0.000000e+00 : f32
    %28 = vector.shape_cast %27 : vector<18x18x1xi1> to vector<18x18x1xi1>
    %29 = vector.broadcast %28 : vector<18x18x1xi1> to vector<18x18x8xi1>
    %30 = vector.broadcast %cst_9 : f32 to vector<18x18x8xf32>
    %31 = arith.select %29, %12, %30 : vector<18x18x8xi1>, vector<18x18x8xf32>
    %32 = vector.extract_strided_slice %31 {offsets = [0, 0, 0], sizes = [16, 16, 8], strides = [1, 1, 1]} : vector<18x18x8xf32> to vector<16x16x8xf32>
    %33 = vector.extract_strided_slice %31 {offsets = [0, 1, 0], sizes = [16, 16, 8], strides = [1, 1, 1]} : vector<18x18x8xf32> to vector<16x16x8xf32>
    %34 = vector.extract_strided_slice %31 {offsets = [0, 2, 0], sizes = [16, 16, 8], strides = [1, 1, 1]} : vector<18x18x8xf32> to vector<16x16x8xf32>
    %35 = vector.extract_strided_slice %31 {offsets = [1, 0, 0], sizes = [16, 16, 8], strides = [1, 1, 1]} : vector<18x18x8xf32> to vector<16x16x8xf32>
    %36 = vector.extract_strided_slice %31 {offsets = [1, 1, 0], sizes = [16, 16, 8], strides = [1, 1, 1]} : vector<18x18x8xf32> to vector<16x16x8xf32>
    %37 = vector.extract_strided_slice %31 {offsets = [1, 2, 0], sizes = [16, 16, 8], strides = [1, 1, 1]} : vector<18x18x8xf32> to vector<16x16x8xf32>
    %38 = vector.extract_strided_slice %31 {offsets = [2, 0, 0], sizes = [16, 16, 8], strides = [1, 1, 1]} : vector<18x18x8xf32> to vector<16x16x8xf32>
    %39 = vector.extract_strided_slice %31 {offsets = [2, 1, 0], sizes = [16, 16, 8], strides = [1, 1, 1]} : vector<18x18x8xf32> to vector<16x16x8xf32>
    %40 = vector.extract_strided_slice %31 {offsets = [2, 2, 0], sizes = [16, 16, 8], strides = [1, 1, 1]} : vector<18x18x8xf32> to vector<16x16x8xf32>
    %41 = tpu.concatenate %32, %33, %34, %35, %36, %37, %38, %39, %40 in 2 : vector<16x16x8xf32>, vector<16x16x8xf32>, vector<16x16x8xf32>, vector<16x16x8xf32>, vector<16x16x8xf32>, vector<16x16x8xf32>, vector<16x16x8xf32>, vector<16x16x8xf32>, vector<16x16x8xf32> -> vector<16x16x72xf32>
    %42 = vector.shape_cast %41 : vector<16x16x72xf32> to vector<256x72xf32>
    %c0_10 = arith.constant 0 : index
    %c0_11 = arith.constant 0 : index
    %43 = vector.load %arg5[%c0_10, %c0_11] : memref<72x8xf32, #tpu.memory_space<vmem>>, vector<72x8xf32>
    %cst_12 = arith.constant dense<0.000000e+00> : vector<256x8xf32>
    %44 = tpu.matmul %42, %43, %cst_12 {dimension_numbers = #tpu.dot_dimension_numbers<[1], [0], [0], [1], [0, 0, 1, 1], [], []>} : vector<256x72xf32>, vector<72x8xf32>, vector<256x8xf32> -> vector<256x8xf32>
    %c0_13 = arith.constant 0 : index
    %c0_14 = arith.constant 0 : index
    %45 = vector.load %arg6[%c0_13, %c0_14] : memref<1x8xf32, #tpu.memory_space<vmem>>, vector<1x8xf32>
    %46 = vector.broadcast %45 : vector<1x8xf32> to vector<256x8xf32>
    %47 = arith.addf %44, %46 : vector<256x8xf32>
    %cst_15 = arith.constant 0.000000e+00 : f32
    %48 = vector.broadcast %cst_15 : f32 to vector<256x8xf32>
    %49 = arith.maximumf %47, %48 : vector<256x8xf32>
    %c0_16 = arith.constant 0 : index
    %c0_17 = arith.constant 0 : index
    %50 = vector.load %arg7[%c0_16, %c0_17] : memref<256x8xf32, #tpu.memory_space<vmem>>, vector<256x8xf32>
    tpu.vector_store %arg7[%c0_16, %c0_17], %49 {strides = array<i32>} : memref<256x8xf32, #tpu.memory_space<vmem>>, vector<256x8xf32>,
    return
  }
  func.func @transform_0(%arg0: i32, %arg1: i32) -> (i32, i32, i32, i32) {
    %c0_i32 = arith.constant 0 : i32
    %c0_i32_0 = arith.constant 0 : i32
    %c0_i32_1 = arith.constant 0 : i32
    %c0_i32_2 = arith.constant 0 : i32
    return %arg0, %c0_i32, %c0_i32_0, %c0_i32_1 : i32, i32, i32, i32
  }
  func.func @transform_1(%arg0: i32, %arg1: i32) -> (i32, i32) {
    %c0_i32 = arith.constant 0 : i32
    %c0_i32_0 = arith.constant 0 : i32
    %c0_i32_1 = arith.constant 0 : i32
    return %c0_i32, %c0_i32_0 : i32, i32
  }
  func.func @transform_2(%arg0: i32, %arg1: i32) -> (i32, i32) {
    %c0_i32 = arith.constant 0 : i32
    %c0_i32_0 = arith.constant 0 : i32
    %c0_i32_1 = arith.constant 0 : i32
    return %c0_i32, %c0_i32_0 : i32, i32
  }
  func.func @transform_3(%arg0: i32, %arg1: i32) -> (i32, i32) {
    %c0_i32 = arith.constant 0 : i32
    %c0_i32_0 = arith.constant 0 : i32
    %c0_i32_1 = arith.constant 0 : i32
    return %c0_i32, %c0_i32_0 : i32, i32
  }
  func.func @transform_4(%arg0: i32, %arg1: i32) -> (i32, i32) {
    %c0_i32 = arith.constant 0 : i32
    %c0_i32_0 = arith.constant 0 : i32
    %c0_i32_1 = arith.constant 0 : i32
    return %c0_i32, %c0_i32_0 : i32, i32
  }
  func.func @transform_5(%arg0: i32, %arg1: i32) -> (i32, i32) {
    %c1_i32 = arith.constant 1 : i32
    %0 = arith.muli %arg0, %c1_i32 : i32
    %1 = arith.addi %0, %arg1 : i32
    %c0_i32 = arith.constant 0 : i32
    %c0_i32_0 = arith.constant 0 : i32
    return %1, %c0_i32 : i32, i32
  }
}

</mosaic_0001>

<llo_original>
// kernel: tpu_custom_call.1
$region0: #{tpu_custom_call.1}
  #allocation0 [shape = 'u32[]', space=smem, size = 0x4, offset = 0x4, fixed_abs, tag = 'smem constant byte address 0x4 - core index']
  #allocation1 [shape = 'u32[144,128]{1,0:T(1,128)}', space=vmem, size = 0x12000, scoped, tag = 'internal scratch']
  %s0 = inlined_call_operand.vmem [shape: f32[2,18,18,8], index: 0, kind: input, shape index: {}]
  %s1 = inlined_call_operand.vmem [shape: f32[8,8], index: 1, kind: input, shape index: {}]
  %s2 = inlined_call_operand.vmem [shape: f32[1,8], index: 2, kind: input, shape index: {}]
  %s3 = inlined_call_operand.vmem [shape: f32[72,8], index: 3, kind: input, shape index: {}]
  %s4 = inlined_call_operand.vmem [shape: f32[1,8], index: 4, kind: input, shape index: {}]
  %s5 = inlined_call_operand.vmem [shape: f32[512,8], index: 5, kind: output, shape index: {}]
  %s6 = sld [smem:[#allocation0]]
  $region53: #{tpu_custom_call.1} parent=0
    _
  %s8 = ssub.s32 1, %s6
  %s9 = scalar_select 0, %s8, %s6
  loop: start=0, step=1, limit=4
  $region2: #{tpu_custom_call.1} parent=0 // loop_pre_header
    _
  $region3: #{tpu_custom_call.1} parent=0 // loop_header
    %s11 = sphi 0, %s15
    %p12 = scmp.ge.s32.totalorder %s11, 4
    %s18 = sphi 0, %s30
    %s19 = sphi 0, %s26
    %s20 = sphi 0, %s18
    %s21 = sphi 0, %s19
    %s22 = sphi 0, %s20
    %s23 = sphi 0, %s21
    %s33 = sphi 0, %s35
    %s36 = sphi 0, %s33
    %s37 = sphi 0, %s36
    %s53 = sphi 0, %s37
    %s57 = sphi 0, %s57
    %s59 = sphi 0, %s57
    %s60 = sphi 0, %s59
    %s74 = sphi 0, %s60
    %s78 = sphi 0, %s78
    %s80 = sphi 0, %s78
    %s81 = sphi 0, %s80
    %s95 = sphi 0, %s81
    %s99 = sphi 0, %s99
    %s101 = sphi 0, %s99
    %s102 = sphi 0, %s101
    %s116 = sphi 0, %s102
    %s120 = sphi 0, %s120
    %s122 = sphi 0, %s120
    %s123 = sphi 0, %s122
    %s137 = sphi 0, %s123
    %s145 = sphi 0, %s147
    %s148 = sphi 0, %s145
    %s149 = sphi 0, %s148
    %s165 = sphi 0, %s149
  $region4: #{tpu_custom_call.1} parent=0 // loop_header_branch
    %14 = sbr.rel (%p12) target = $region8
  $region5: #{tpu_custom_call.1} parent=0 // loop_body
    %s16 = ssub.s32 %s11, 1
    %s17 = ssub.s32 %s11, 2
    %s24 = sadd.s32 1, %s19
    %p25 = scmp.ge.s32.totalorder %s24, 1
    %s26 = scalar_select %p25, 0, %s24
    %s27 = sadd.s32 1, %s18
    %s28 = scalar_select %p25, %s27, %s18
    %p29 = scmp.ge.s32.totalorder %s28, 2
    %s30 = scalar_select %p29, 0, %s28
    %s31 = ssub.s32 %s18, %s30
    %p32 = scmp.eq.s32.totalorder %s31, 0
    %s34 = sadd.s32 %s33, 1
    %s35 = scalar_select %p32, %s33, %s34
    %p38 = pneg %p32
    %p39 = scmp.eq.s32.totalorder %s11, 1
    %p40 = por %p38, %p39
    %p41 = scmp.ne.s32.totalorder %s33, %s36
    %p42 = scmp.eq.s32.totalorder %s11, 0
    %p43 = por %p41, %p42
    %p44 = scmp.ne.s32.totalorder %s33, %s36
    %p45 = scmp.eq.s32.totalorder %s16, 1
    %p46 = por %p44, %p45
    %p47 = scmp.ne.s32.totalorder %s36, %s37
    %p48 = scmp.eq.s32.totalorder %s16, 0
    %p49 = por %p47, %p48
    %p50 = scmp.ne.s32.totalorder %s36, %s37
    %p51 = scmp.eq.s32.totalorder %s17, 1
    %p52 = por %p50, %p51
    %p54 = scmp.ne.s32.totalorder %s37, %s53
    %p55 = scmp.eq.s32.totalorder %s17, 0
    %p56 = por %p54, %p55
    %s58 = sadd.s32 %s57, 1
    %p61 = scmp.eq.s32.totalorder %s11, 1
    %p62 = scmp.ne.s32.totalorder %s57, %s59
    %p63 = scmp.eq.s32.totalorder %s11, 0
    %p64 = por %p62, %p63
    %p65 = scmp.ne.s32.totalorder %s57, %s59
    %p66 = scmp.eq.s32.totalorder %s16, 1
    %p67 = por %p65, %p66
    %p68 = scmp.ne.s32.totalorder %s59, %s60
    %p69 = scmp.eq.s32.totalorder %s16, 0
    %p70 = por %p68, %p69
    %p71 = scmp.ne.s32.totalorder %s59, %s60
    %p72 = scmp.eq.s32.totalorder %s17, 1
    %p73 = por %p71, %p72
    %p75 = scmp.ne.s32.totalorder %s60, %s74
    %p76 = scmp.eq.s32.totalorder %s17, 0
    %p77 = por %p75, %p76
    %s79 = sadd.s32 %s78, 1
    %p82 = scmp.eq.s32.totalorder %s11, 1
    %p83 = scmp.ne.s32.totalorder %s78, %s80
    %p84 = scmp.eq.s32.totalorder %s11, 0
    %p85 = por %p83, %p84
    %p86 = scmp.ne.s32.totalorder %s78, %s80
    %p87 = scmp.eq.s32.totalorder %s16, 1
    %p88 = por %p86, %p87
    %p89 = scmp.ne.s32.totalorder %s80, %s81
    %p90 = scmp.eq.s32.totalorder %s16, 0
    %p91 = por %p89, %p90
    %p92 = scmp.ne.s32.totalorder %s80, %s81
    %p93 = scmp.eq.s32.totalorder %s17, 1
    %p94 = por %p92, %p93
    %p96 = scmp.ne.s32.totalorder %s81, %s95
    %p97 = scmp.eq.s32.totalorder %s17, 0
    %p98 = por %p96, %p97
    %s100 = sadd.s32 %s99, 1
    %p103 = scmp.eq.s32.totalorder %s11, 1
    %p104 = scmp.ne.s32.totalorder %s99, %s101
    %p105 = scmp.eq.s32.totalorder %s11, 0
    %p106 = por %p104, %p105
    %p107 = scmp.ne.s32.totalorder %s99, %s101
    %p108 = scmp.eq.s32.totalorder %s16, 1
    %p109 = por %p107, %p108
    %p110 = scmp.ne.s32.totalorder %s101, %s102
    %p111 = scmp.eq.s32.totalorder %s16, 0
    %p112 = por %p110, %p111
    %p113 = scmp.ne.s32.totalorder %s101, %s102
    %p114 = scmp.eq.s32.totalorder %s17, 1
    %p115 = por %p113, %p114
    %p117 = scmp.ne.s32.totalorder %s102, %s116
    %p118 = scmp.eq.s32.totalorder %s17, 0
    %p119 = por %p117, %p118
    %s121 = sadd.s32 %s120, 1
    %p124 = scmp.eq.s32.totalorder %s11, 1
    %p125 = scmp.ne.s32.totalorder %s120, %s122
    %p126 = scmp.eq.s32.totalorder %s11, 0
    %p127 = por %p125, %p126
    %p128 = scmp.ne.s32.totalorder %s120, %s122
    %p129 = scmp.eq.s32.totalorder %s16, 1
    %p130 = por %p128, %p129
    %p131 = scmp.ne.s32.totalorder %s122, %s123
    %p132 = scmp.eq.s32.totalorder %s16, 0
    %p133 = por %p131, %p132
    %p134 = scmp.ne.s32.totalorder %s122, %s123
    %p135 = scmp.eq.s32.totalorder %s17, 1
    %p136 = por %p134, %p135
    %p138 = scmp.ne.s32.totalorder %s123, %s137
    %p139 = scmp.eq.s32.totalorder %s17, 0
    %p140 = por %p138, %p139
    %s141 = sadd.s32 %s18, %s19
    %s142 = sadd.s32 %s30, %s26
    %s143 = ssub.s32 %s141, %s142
    %p144 = scmp.eq.s32.totalorder %s143, 0
    %s146 = sadd.s32 %s145, 1
    %s147 = scalar_select %p144, %s145, %s146
    %p150 = pneg %p144
    %p151 = scmp.eq.s32.totalorder %s11, 1
    %p152 = por %p150, %p151
    %p153 = scmp.ne.s32.totalorder %s145, %s148
    %p154 = scmp.eq.s32.totalorder %s11, 0
    %p155 = por %p153, %p154
    %p156 = scmp.ne.s32.totalorder %s145, %s148
    %p157 = scmp.eq.s32.totalorder %s16, 1
    %p158 = por %p156, %p157
    %p159 = scmp.ne.s32.totalorder %s148, %s149
    %p160 = scmp.eq.s32.totalorder %s16, 0
    %p161 = por %p159, %p160
    %p162 = scmp.ne.s32.totalorder %s148, %s149
    %p163 = scmp.eq.s32.totalorder %s17, 1
    %p164 = por %p162, %p163
    %p166 = scmp.ne.s32.totalorder %s149, %s165
    %p167 = scmp.eq.s32.totalorder %s17, 0
    %p168 = por %p166, %p167
    %p169 = scmp.le.s32.totalorder 1, %s11
    %p170 = scmp.lt.s32.totalorder %s11, 3
    %p171 = pnand %p169, %p170
    %p172 = pneg %p171
    // Predicated region
    $region9: #{tpu_custom_call.1} parent=5 // pred_check
      _
    $region10: #{tpu_custom_call.1} parent=5 // pred_check_branch
      %174 = sbr.rel (%p171) target = $region12
    $region11: #{tpu_custom_call.1} parent=5 // pred_region
      %s175 = ssub.s32 %s11, 1
      // Predicated region
      $region13: #{tpu_custom_call.1} parent=11 // pred_check
        %p176 = pneg %p70
      $region14: #{tpu_custom_call.1} parent=11 // pred_check_branch
        %178 = sbr.rel (%p176) target = $region16
      $region15: #{tpu_custom_call.1} parent=11 // pred_region
        _
      $region16: #{tpu_custom_call.1} parent=11 // pred_fallthru
        _
      // Predicated region
      $region17: #{tpu_custom_call.1} parent=11 // pred_check
        %p179 = pneg %p91
      $region18: #{tpu_custom_call.1} parent=11 // pred_check_branch
        %181 = sbr.rel (%p179) target = $region20
      $region19: #{tpu_custom_call.1} parent=11 // pred_region
        _
      $region20: #{tpu_custom_call.1} parent=11 // pred_fallthru
        _
      // Predicated region
      $region21: #{tpu_custom_call.1} parent=11 // pred_check
        %p182 = pneg %p112
      $region22: #{tpu_custom_call.1} parent=11 // pred_check_branch
        %184 = sbr.rel (%p182) target = $region24
      $region23: #{tpu_custom_call.1} parent=11 // pred_region
        _
      $region24: #{tpu_custom_call.1} parent=11 // pred_fallthru
        _
      // Predicated region
      $region25: #{tpu_custom_call.1} parent=11 // pred_check
        %p185 = pneg %p133
      $region26: #{tpu_custom_call.1} parent=11 // pred_check_branch
        %187 = sbr.rel (%p185) target = $region28
      $region27: #{tpu_custom_call.1} parent=11 // pred_region
        _
      $region28: #{tpu_custom_call.1} parent=11 // pred_fallthru
        _
    $region12: #{tpu_custom_call.1} parent=5 // pred_fallthru
      _
    %p188 = scmp.lt.s32.totalorder %s11, 2
    // Predicated region
    $region29: #{tpu_custom_call.1} parent=5 // pred_check
      %p189 = pneg %p188
    $region30: #{tpu_custom_call.1} parent=5 // pred_check_branch
      %191 = sbr.rel (%p189) target = $region32
    $region31: #{tpu_custom_call.1} parent=5 // pred_region
      // Predicated region
      $region33: #{tpu_custom_call.1} parent=31 // pred_check
        %p192 = pneg %p43
      $region34: #{tpu_custom_call.1} parent=31 // pred_check_branch
        %194 = sbr.rel (%p192) target = $region36
      $region35: #{tpu_custom_call.1} parent=31 // pred_region
        %p195 = scmp.lt.s32.totalorder %s18, 1
        %s196 = scalar_select %p195, %s18, 1
        %s197 = smul.addr %s196, 54
        %s198 = smul.addr %s197, 8
        %s199 = scalar_lea.vmem %s0, %s198
      $region36: #{tpu_custom_call.1} parent=31 // pred_fallthru
        _
    $region32: #{tpu_custom_call.1} parent=5 // pred_fallthru
      _
    %p200 = scmp.le.s32.totalorder 1, %s11
    %p201 = scmp.lt.s32.totalorder %s11, 3
    %p202 = pnand %p200, %p201
    %p203 = pneg %p202
    // Predicated region
    $region37: #{tpu_custom_call.1} parent=5 // pred_check
      _
    $region38: #{tpu_custom_call.1} parent=5 // pred_check_branch
      %205 = sbr.rel (%p202) target = $region40
    $region39: #{tpu_custom_call.1} parent=5 // pred_region
      %s206 = ssub.s32 %s11, 1
      %p207 = scmp.lt.s32.totalorder %s20, 1
      %s208 = scalar_select %p207, %s20, 1
      %s209 = smul.addr %s208, 54
      %s210 = smul.addr %s209, 8
      %s211 = scalar_lea.vmem %s0, %s210
      %p212 = pneg %p49
      %p213 = pneg %p46
      %p214 = pneg %p70
      %p215 = pneg %p67
      %p216 = pneg %p91
      %p217 = pneg %p88
      %p218 = pneg %p112
      %p219 = pneg %p109
      %p220 = pneg %p133
      %p221 = pneg %p130
      %p222 = pneg %p161
      %p223 = pneg %p158
      %s224 = sadd.s32 %s20, %s21
      %s225 = smul.u32 32, %s224
      %p226 = scmp.lt.s32.totalorder %s225, 63
      %s227 = scalar_select %p226, %s225, 63
      %s228 = smul.addr %s227, 8
      %s229 = scalar_lea.vmem %s5, %s228
      %p230 = scmp.lt.s32.totalorder %s20, 1
      %s231 = scalar_select %p230, %s20, 1
      %s232 = smul.addr %s231, 54
      %s233 = smul.addr %s232, 8
      %s234 = scalar_lea.vmem %s0, %s233
      %s235 = sadd.s32 %s20, %s21
      %s236 = smul.u32 32, %s235
      %p237 = scmp.lt.s32.totalorder %s236, 63
      %s238 = scalar_select %p237, %s236, 63
      %s239 = smul.addr %s238, 8
      %s240 = scalar_lea.vmem %s5, %s239
      %s241 = sadd.s32 %s20, %s21
      %s242 = smul.u32 32, %s241
      %s243 = smul.u32 %s21, 16
      %s244 = smul.u32 %s243, 24
      %s245 = scalar_lea.vmem %s234, %s244
      %v246 = vld [vmem:[%s245] sm:$0xff]
      %v247 = vld [vmem:[%s245 + $0x8] sm:$0xff]
      %v248 = vld [vmem:[%s245 + $0x10] sm:$0x3]
      %v249 = vld [vmem:[%s245 + $0x18] sm:$0xff]
      %v250 = vld [vmem:[%s245 + $0x20] sm:$0xff]
      %v251 = vld [vmem:[%s245 + $0x28] sm:$0x3]
      %v252 = vld [vmem:[%s245 + $0x30] sm:$0xff]
      %v253 = vld [vmem:[%s245 + $0x38] sm:$0xff]
      %v254 = vld [vmem:[%s245 + $0x40] sm:$0x3]
      %v255 = vld [vmem:[%s245 + $0x48] sm:$0xff]
      %v256 = vld [vmem:[%s245 + $0x50] sm:$0xff]
      %v257 = vld [vmem:[%s245 + $0x58] sm:$0x3]
      %v258 = vld [vmem:[%s245 + $0x60] sm:$0xff]
      %v259 = vld [vmem:[%s245 + $0x68] sm:$0xff]
      %v260 = vld [vmem:[%s245 + $0x70] sm:$0x3]
      %v261 = vld [vmem:[%s245 + $0x78] sm:$0xff]
      %v262 = vld [vmem:[%s245 + $0x80] sm:$0xff]
      %v263 = vld [vmem:[%s245 + $0x88] sm:$0x3]
      %v264 = vld [vmem:[%s245 + $0x90] sm:$0xff]
      %v265 = vld [vmem:[%s245 + $0x98] sm:$0xff]
      %v266 = vld [vmem:[%s245 + $0xa0] sm:$0x3]
      %v267 = vld [vmem:[%s245 + $0xa8] sm:$0xff]
      %v268 = vld [vmem:[%s245 + $0xb0] sm:$0xff]
      %v269 = vld [vmem:[%s245 + $0xb8] sm:$0x3]
      %v270 = vld [vmem:[%s245 + $0xc0] sm:$0xff]
      %v271 = vld [vmem:[%s245 + $0xc8] sm:$0xff]
      %v272 = vld [vmem:[%s245 + $0xd0] sm:$0x3]
      %v273 = vld [vmem:[%s245 + $0xd8] sm:$0xff]
      %v274 = vld [vmem:[%s245 + $0xe0] sm:$0xff]
      %v275 = vld [vmem:[%s245 + $0xe8] sm:$0x3]
      %v276 = vld [vmem:[%s245 + $0xf0] sm:$0xff]
      %v277 = vld [vmem:[%s245 + $0xf8] sm:$0xff]
      %v278 = vld [vmem:[%s245 + $0x100] sm:$0x3]
      %v279 = vld [vmem:[%s245 + $0x108] sm:$0xff]
      %v280 = vld [vmem:[%s245 + $0x110] sm:$0xff]
      %v281 = vld [vmem:[%s245 + $0x118] sm:$0x3]
      %v282 = vld [vmem:[%s245 + $0x120] sm:$0xff]
      %v283 = vld [vmem:[%s245 + $0x128] sm:$0xff]
      %v284 = vld [vmem:[%s245 + $0x130] sm:$0x3]
      %v285 = vld [vmem:[%s245 + $0x138] sm:$0xff]
      %v286 = vld [vmem:[%s245 + $0x140] sm:$0xff]
      %v287 = vld [vmem:[%s245 + $0x148] sm:$0x3]
      %v288 = vld [vmem:[%s245 + $0x150] sm:$0xff]
      %v289 = vld [vmem:[%s245 + $0x158] sm:$0xff]
      %v290 = vld [vmem:[%s245 + $0x160] sm:$0x3]
      %v291 = vld [vmem:[%s245 + $0x168] sm:$0xff]
      %v292 = vld [vmem:[%s245 + $0x170] sm:$0xff]
      %v293 = vld [vmem:[%s245 + $0x178] sm:$0x3]
      %v294 = vld [vmem:[%s245 + $0x180] sm:$0xff]
      %v295 = vld [vmem:[%s245 + $0x188] sm:$0xff]
      %v296 = vld [vmem:[%s245 + $0x190] sm:$0x3]
      %v297 = vld [vmem:[%s245 + $0x198] sm:$0xff]
      %v298 = vld [vmem:[%s245 + $0x1a0] sm:$0xff]
      %v299 = vld [vmem:[%s245 + $0x1a8] sm:$0x3]
      %v354 = vcombine.high %v246, %v246
      %v356 = vunpack.c.l.s4 1983009808
      %v357 = vunpack.c.0.s8 %v356
      %v358 = vlaneseq
      %v359 = vshrl.u32 %v358, 7
      %v360 = vsub.s32 %v357, %v359
      %v361 = vrot.slane %v246, %v360
      %v363 = vunpack.c.l.s4 1983009808
      %v364 = vunpack.c.0.s8 %v363
      %v365 = vlaneseq
      %v366 = vshrl.u32 %v365, 7
      %v367 = vsub.s32 %v364, %v366
      %v368 = vrot.slane %v354, %v367
      %v369 = vcombine.high %v361, %v361
      %v370 = vcombine.high %v368, %v368
      %v371 = vcombine.high %v247, %v247
      %v373 = vunpack.c.l.s4 1983009808
      %v374 = vunpack.c.0.s8 %v373
      %v375 = vlaneseq
      %v376 = vshrl.u32 %v375, 7
      %v377 = vsub.s32 %v374, %v376
      %v378 = vrot.slane %v247, %v377
      %v380 = vunpack.c.l.s4 1983009808
      %v381 = vunpack.c.0.s8 %v380
      %v382 = vlaneseq
      %v383 = vshrl.u32 %v382, 7
      %v384 = vsub.s32 %v381, %v383
      %v385 = vrot.slane %v371, %v384
      %v386 = vcombine.high %v378, %v378
      %v387 = vcombine.high %v385, %v385
      %v389 = vunpack.c.l.s4 1983009808
      %v390 = vunpack.c.0.s8 %v389
      %v391 = vlaneseq
      %v392 = vshrl.u32 %v391, 7
      %v393 = vsub.s32 %v390, %v392
      %v394 = vrot.slane %v248, %v393
      %v395 = vcombine.high %v249, %v249
      %v397 = vunpack.c.l.s4 1983009808
      %v398 = vunpack.c.0.s8 %v397
      %v399 = vlaneseq
      %v400 = vshrl.u32 %v399, 7
      %v401 = vsub.s32 %v398, %v400
      %v402 = vrot.slane %v249, %v401
      %v404 = vunpack.c.l.s4 1983009808
      %v405 = vunpack.c.0.s8 %v404
      %v406 = vlaneseq
      %v407 = vshrl.u32 %v406, 7
      %v408 = vsub.s32 %v405, %v407
      %v409 = vrot.slane %v395, %v408
      %v410 = vcombine.high %v402, %v402
      %v411 = vcombine.high %v409, %v409
      %v412 = vcombine.high %v250, %v250
      %v414 = vunpack.c.l.s4 1983009808
      %v415 = vunpack.c.0.s8 %v414
      %v416 = vlaneseq
      %v417 = vshrl.u32 %v416, 7
      %v418 = vsub.s32 %v415, %v417
      %v419 = vrot.slane %v250, %v418
      %v421 = vunpack.c.l.s4 1983009808
      %v422 = vunpack.c.0.s8 %v421
      %v423 = vlaneseq
      %v424 = vshrl.u32 %v423, 7
      %v425 = vsub.s32 %v422, %v424
      %v426 = vrot.slane %v412, %v425
      %v427 = vcombine.high %v419, %v419
      %v428 = vcombine.high %v426, %v426
      %v430 = vunpack.c.l.s4 1983009808
      %v431 = vunpack.c.0.s8 %v430
      %v432 = vlaneseq
      %v433 = vshrl.u32 %v432, 7
      %v434 = vsub.s32 %v431, %v433
      %v435 = vrot.slane %v251, %v434
      %v436 = vcombine.high %v252, %v252
      %v438 = vunpack.c.l.s4 1983009808
      %v439 = vunpack.c.0.s8 %v438
      %v440 = vlaneseq
      %v441 = vshrl.u32 %v440, 7
      %v442 = vsub.s32 %v439, %v441
      %v443 = vrot.slane %v252, %v442
      %v445 = vunpack.c.l.s4 1983009808
      %v446 = vunpack.c.0.s8 %v445
      %v447 = vlaneseq
      %v448 = vshrl.u32 %v447, 7
      %v449 = vsub.s32 %v446, %v448
      %v450 = vrot.slane %v436, %v449
      %v451 = vcombine.high %v443, %v443
      %v452 = vcombine.high %v450, %v450
      %v453 = vcombine.high %v253, %v253
      %v455 = vunpack.c.l.s4 1983009808
      %v456 = vunpack.c.0.s8 %v455
      %v457 = vlaneseq
      %v458 = vshrl.u32 %v457, 7
      %v459 = vsub.s32 %v456, %v458
      %v460 = vrot.slane %v253, %v459
      %v462 = vunpack.c.l.s4 1983009808
      %v463 = vunpack.c.0.s8 %v462
      %v464 = vlaneseq
      %v465 = vshrl.u32 %v464, 7
      %v466 = vsub.s32 %v463, %v465
      %v467 = vrot.slane %v453, %v466
      %v468 = vcombine.high %v460, %v460
      %v469 = vcombine.high %v467, %v467
      %v471 = vunpack.c.l.s4 1983009808
      %v472 = vunpack.c.0.s8 %v471
      %v473 = vlaneseq
      %v474 = vshrl.u32 %v473, 7
      %v475 = vsub.s32 %v472, %v474
      %v476 = vrot.slane %v254, %v475
      %v477 = vcombine.high %v255, %v255
      %v479 = vunpack.c.l.s4 1983009808
      %v480 = vunpack.c.0.s8 %v479
      %v481 = vlaneseq
      %v482 = vshrl.u32 %v481, 7
      %v483 = vsub.s32 %v480, %v482
      %v484 = vrot.slane %v255, %v483
      %v486 = vunpack.c.l.s4 1983009808
      %v487 = vunpack.c.0.s8 %v486
      %v488 = vlaneseq
      %v489 = vshrl.u32 %v488, 7
      %v490 = vsub.s32 %v487, %v489
      %v491 = vrot.slane %v477, %v490
      %v492 = vcombine.high %v484, %v484
      %v493 = vcombine.high %v491, %v491
      %v494 = vcombine.high %v256, %v256
      %v496 = vunpack.c.l.s4 1983009808
      %v497 = vunpack.c.0.s8 %v496
      %v498 = vlaneseq
      %v499 = vshrl.u32 %v498, 7
      %v500 = vsub.s32 %v497, %v499
      %v501 = vrot.slane %v256, %v500
      %v503 = vunpack.c.l.s4 1983009808
      %v504 = vunpack.c.0.s8 %v503
      %v505 = vlaneseq
      %v506 = vshrl.u32 %v505, 7
      %v507 = vsub.s32 %v504, %v506
      %v508 = vrot.slane %v494, %v507
      %v509 = vcombine.high %v501, %v501
      %v510 = vcombine.high %v508, %v508
      %v512 = vunpack.c.l.s4 1983009808
      %v513 = vunpack.c.0.s8 %v512
      %v514 = vlaneseq
      %v515 = vshrl.u32 %v514, 7
      %v516 = vsub.s32 %v513, %v515
      %v517 = vrot.slane %v257, %v516
      %v518 = vcombine.high %v258, %v258
      %v520 = vunpack.c.l.s4 1983009808
      %v521 = vunpack.c.0.s8 %v520
      %v522 = vlaneseq
      %v523 = vshrl.u32 %v522, 7
      %v524 = vsub.s32 %v521, %v523
      %v525 = vrot.slane %v258, %v524
      %v527 = vunpack.c.l.s4 1983009808
      %v528 = vunpack.c.0.s8 %v527
      %v529 = vlaneseq
      %v530 = vshrl.u32 %v529, 7
      %v531 = vsub.s32 %v528, %v530
      %v532 = vrot.slane %v518, %v531
      %v533 = vcombine.high %v525, %v525
      %v534 = vcombine.high %v532, %v532
      %v535 = vcombine.high %v259, %v259
      %v537 = vunpack.c.l.s4 1983009808
      %v538 = vunpack.c.0.s8 %v537
      %v539 = vlaneseq
      %v540 = vshrl.u32 %v539, 7
      %v541 = vsub.s32 %v538, %v540
      %v542 = vrot.slane %v259, %v541
      %v544 = vunpack.c.l.s4 1983009808
      %v545 = vunpack.c.0.s8 %v544
      %v546 = vlaneseq
      %v547 = vshrl.u32 %v546, 7
      %v548 = vsub.s32 %v545, %v547
      %v549 = vrot.slane %v535, %v548
      %v550 = vcombine.high %v542, %v542
      %v551 = vcombine.high %v549, %v549
      %v553 = vunpack.c.l.s4 1983009808
      %v554 = vunpack.c.0.s8 %v553
      %v555 = vlaneseq
      %v556 = vshrl.u32 %v555, 7
      %v557 = vsub.s32 %v554, %v556
      %v558 = vrot.slane %v260, %v557
      %v559 = vcombine.high %v261, %v261
      %v561 = vunpack.c.l.s4 1983009808
      %v562 = vunpack.c.0.s8 %v561
      %v563 = vlaneseq
      %v564 = vshrl.u32 %v563, 7
      %v565 = vsub.s32 %v562, %v564
      %v566 = vrot.slane %v261, %v565
      %v568 = vunpack.c.l.s4 1983009808
      %v569 = vunpack.c.0.s8 %v568
      %v570 = vlaneseq
      %v571 = vshrl.u32 %v570, 7
      %v572 = vsub.s32 %v569, %v571
      %v573 = vrot.slane %v559, %v572
      %v574 = vcombine.high %v566, %v566
      %v575 = vcombine.high %v573, %v573
      %v576 = vcombine.high %v262, %v262
      %v578 = vunpack.c.l.s4 1983009808
      %v579 = vunpack.c.0.s8 %v578
      %v580 = vlaneseq
      %v581 = vshrl.u32 %v580, 7
      %v582 = vsub.s32 %v579, %v581
      %v583 = vrot.slane %v262, %v582
      %v585 = vunpack.c.l.s4 1983009808
      %v586 = vunpack.c.0.s8 %v585
      %v587 = vlaneseq
      %v588 = vshrl.u32 %v587, 7
      %v589 = vsub.s32 %v586, %v588
      %v590 = vrot.slane %v576, %v589
      %v591 = vcombine.high %v583, %v583
      %v592 = vcombine.high %v590, %v590
      %v594 = vunpack.c.l.s4 1983009808
      %v595 = vunpack.c.0.s8 %v594
      %v596 = vlaneseq
      %v597 = vshrl.u32 %v596, 7
      %v598 = vsub.s32 %v595, %v597
      %v599 = vrot.slane %v263, %v598
      %v600 = vcombine.high %v264, %v264
      %v602 = vunpack.c.l.s4 1983009808
      %v603 = vunpack.c.0.s8 %v602
      %v604 = vlaneseq
      %v605 = vshrl.u32 %v604, 7
      %v606 = vsub.s32 %v603, %v605
      %v607 = vrot.slane %v264, %v606
      %v609 = vunpack.c.l.s4 1983009808
      %v610 = vunpack.c.0.s8 %v609
      %v611 = vlaneseq
      %v612 = vshrl.u32 %v611, 7
      %v613 = vsub.s32 %v610, %v612
      %v614 = vrot.slane %v600, %v613
      %v615 = vcombine.high %v607, %v607
      %v616 = vcombine.high %v614, %v614
      %v617 = vcombine.high %v265, %v265
      %v619 = vunpack.c.l.s4 1983009808
      %v620 = vunpack.c.0.s8 %v619
      %v621 = vlaneseq
      %v622 = vshrl.u32 %v621, 7
      %v623 = vsub.s32 %v620, %v622
      %v624 = vrot.slane %v265, %v623
      %v626 = vunpack.c.l.s4 1983009808
      %v627 = vunpack.c.0.s8 %v626
      %v628 = vlaneseq
      %v629 = vshrl.u32 %v628, 7
      %v630 = vsub.s32 %v627, %v629
      %v631 = vrot.slane %v617, %v630
      %v632 = vcombine.high %v624, %v624
      %v633 = vcombine.high %v631, %v631
      %v635 = vunpack.c.l.s4 1983009808
      %v636 = vunpack.c.0.s8 %v635
      %v637 = vlaneseq
      %v638 = vshrl.u32 %v637, 7
      %v639 = vsub.s32 %v636, %v638
      %v640 = vrot.slane %v266, %v639
      %v641 = vcombine.high %v267, %v267
      %v643 = vunpack.c.l.s4 1983009808
      %v644 = vunpack.c.0.s8 %v643
      %v645 = vlaneseq
      %v646 = vshrl.u32 %v645, 7
      %v647 = vsub.s32 %v644, %v646
      %v648 = vrot.slane %v267, %v647
      %v650 = vunpack.c.l.s4 1983009808
      %v651 = vunpack.c.0.s8 %v650
      %v652 = vlaneseq
      %v653 = vshrl.u32 %v652, 7
      %v654 = vsub.s32 %v651, %v653
      %v655 = vrot.slane %v641, %v654
      %v656 = vcombine.high %v648, %v648
      %v657 = vcombine.high %v655, %v655
      %v658 = vcombine.high %v268, %v268
      %v660 = vunpack.c.l.s4 1983009808
      %v661 = vunpack.c.0.s8 %v660
      %v662 = vlaneseq
      %v663 = vshrl.u32 %v662, 7
      %v664 = vsub.s32 %v661, %v663
      %v665 = vrot.slane %v268, %v664
      %v667 = vunpack.c.l.s4 1983009808
      %v668 = vunpack.c.0.s8 %v667
      %v669 = vlaneseq
      %v670 = vshrl.u32 %v669, 7
      %v671 = vsub.s32 %v668, %v670
      %v672 = vrot.slane %v658, %v671
      %v673 = vcombine.high %v665, %v665
      %v674 = vcombine.high %v672, %v672
      %v676 = vunpack.c.l.s4 1983009808
      %v677 = vunpack.c.0.s8 %v676
      %v678 = vlaneseq
      %v679 = vshrl.u32 %v678, 7
      %v680 = vsub.s32 %v677, %v679
      %v681 = vrot.slane %v269, %v680
      %v682 = vcombine.high %v270, %v270
      %v684 = vunpack.c.l.s4 1983009808
      %v685 = vunpack.c.0.s8 %v684
      %v686 = vlaneseq
      %v687 = vshrl.u32 %v686, 7
      %v688 = vsub.s32 %v685, %v687
      %v689 = vrot.slane %v270, %v688
      %v691 = vunpack.c.l.s4 1983009808
      %v692 = vunpack.c.0.s8 %v691
      %v693 = vlaneseq
      %v694 = vshrl.u32 %v693, 7
      %v695 = vsub.s32 %v692, %v694
      %v696 = vrot.slane %v682, %v695
      %v697 = vcombine.high %v689, %v689
      %v698 = vcombine.high %v696, %v696
      %v699 = vcombine.high %v271, %v271
      %v701 = vunpack.c.l.s4 1983009808
      %v702 = vunpack.c.0.s8 %v701
      %v703 = vlaneseq
      %v704 = vshrl.u32 %v703, 7
      %v705 = vsub.s32 %v702, %v704
      %v706 = vrot.slane %v271, %v705
      %v708 = vunpack.c.l.s4 1983009808
      %v709 = vunpack.c.0.s8 %v708
      %v710 = vlaneseq
      %v711 = vshrl.u32 %v710, 7
      %v712 = vsub.s32 %v709, %v711
      %v713 = vrot.slane %v699, %v712
      %v714 = vcombine.high %v706, %v706
      %v715 = vcombine.high %v713, %v713
      %v717 = vunpack.c.l.s4 1983009808
      %v718 = vunpack.c.0.s8 %v717
      %v719 = vlaneseq
      %v720 = vshrl.u32 %v719, 7
      %v721 = vsub.s32 %v718, %v720
      %v722 = vrot.slane %v272, %v721
      %v723 = vcombine.high %v273, %v273
      %v725 = vunpack.c.l.s4 1983009808
      %v726 = vunpack.c.0.s8 %v725
      %v727 = vlaneseq
      %v728 = vshrl.u32 %v727, 7
      %v729 = vsub.s32 %v726, %v728
      %v730 = vrot.slane %v273, %v729
      %v732 = vunpack.c.l.s4 1983009808
      %v733 = vunpack.c.0.s8 %v732
      %v734 = vlaneseq
      %v735 = vshrl.u32 %v734, 7
      %v736 = vsub.s32 %v733, %v735
      %v737 = vrot.slane %v723, %v736
      %v738 = vcombine.high %v730, %v730
      %v739 = vcombine.high %v737, %v737
      %v740 = vcombine.high %v274, %v274
      %v742 = vunpack.c.l.s4 1983009808
      %v743 = vunpack.c.0.s8 %v742
      %v744 = vlaneseq
      %v745 = vshrl.u32 %v744, 7
      %v746 = vsub.s32 %v743, %v745
      %v747 = vrot.slane %v274, %v746
      %v749 = vunpack.c.l.s4 1983009808
      %v750 = vunpack.c.0.s8 %v749
      %v751 = vlaneseq
      %v752 = vshrl.u32 %v751, 7
      %v753 = vsub.s32 %v750, %v752
      %v754 = vrot.slane %v740, %v753
      %v755 = vcombine.high %v747, %v747
      %v756 = vcombine.high %v754, %v754
      %v758 = vunpack.c.l.s4 1983009808
      %v759 = vunpack.c.0.s8 %v758
      %v760 = vlaneseq
      %v761 = vshrl.u32 %v760, 7
      %v762 = vsub.s32 %v759, %v761
      %v763 = vrot.slane %v275, %v762
      %v764 = vcombine.high %v276, %v276
      %v766 = vunpack.c.l.s4 1983009808
      %v767 = vunpack.c.0.s8 %v766
      %v768 = vlaneseq
      %v769 = vshrl.u32 %v768, 7
      %v770 = vsub.s32 %v767, %v769
      %v771 = vrot.slane %v276, %v770
      %v773 = vunpack.c.l.s4 1983009808
      %v774 = vunpack.c.0.s8 %v773
      %v775 = vlaneseq
      %v776 = vshrl.u32 %v775, 7
      %v777 = vsub.s32 %v774, %v776
      %v778 = vrot.slane %v764, %v777
      %v779 = vcombine.high %v771, %v771
      %v780 = vcombine.high %v778, %v778
      %v781 = vcombine.high %v277, %v277
      %v783 = vunpack.c.l.s4 1983009808
      %v784 = vunpack.c.0.s8 %v783
      %v785 = vlaneseq
      %v786 = vshrl.u32 %v785, 7
      %v787 = vsub.s32 %v784, %v786
      %v788 = vrot.slane %v277, %v787
      %v790 = vunpack.c.l.s4 1983009808
      %v791 = vunpack.c.0.s8 %v790
      %v792 = vlaneseq
      %v793 = vshrl.u32 %v792, 7
      %v794 = vsub.s32 %v791, %v793
      %v795 = vrot.slane %v781, %v794
      %v796 = vcombine.high %v788, %v788
      %v797 = vcombine.high %v795, %v795
      %v799 = vunpack.c.l.s4 1983009808
      %v800 = vunpack.c.0.s8 %v799
      %v801 = vlaneseq
      %v802 = vshrl.u32 %v801, 7
      %v803 = vsub.s32 %v800, %v802
      %v804 = vrot.slane %v278, %v803
      %v805 = vcombine.high %v279, %v279
      %v807 = vunpack.c.l.s4 1983009808
      %v808 = vunpack.c.0.s8 %v807
      %v809 = vlaneseq
      %v810 = vshrl.u32 %v809, 7
      %v811 = vsub.s32 %v808, %v810
      %v812 = vrot.slane %v279, %v811
      %v814 = vunpack.c.l.s4 1983009808
      %v815 = vunpack.c.0.s8 %v814
      %v816 = vlaneseq
      %v817 = vshrl.u32 %v816, 7
      %v818 = vsub.s32 %v815, %v817
      %v819 = vrot.slane %v805, %v818
      %v820 = vcombine.high %v812, %v812
      %v821 = vcombine.high %v819, %v819
      %v822 = vcombine.high %v280, %v280
      %v824 = vunpack.c.l.s4 1983009808
      %v825 = vunpack.c.0.s8 %v824
      %v826 = vlaneseq
      %v827 = vshrl.u32 %v826, 7
      %v828 = vsub.s32 %v825, %v827
      %v829 = vrot.slane %v280, %v828
      %v831 = vunpack.c.l.s4 1983009808
      %v832 = vunpack.c.0.s8 %v831
      %v833 = vlaneseq
      %v834 = vshrl.u32 %v833, 7
      %v835 = vsub.s32 %v832, %v834
      %v836 = vrot.slane %v822, %v835
      %v837 = vcombine.high %v829, %v829
      %v838 = vcombine.high %v836, %v836
      %v840 = vunpack.c.l.s4 1983009808
      %v841 = vunpack.c.0.s8 %v840
      %v842 = vlaneseq
      %v843 = vshrl.u32 %v842, 7
      %v844 = vsub.s32 %v841, %v843
      %v845 = vrot.slane %v281, %v844
      %v846 = vcombine.high %v282, %v282
      %v848 = vunpack.c.l.s4 1983009808
      %v849 = vunpack.c.0.s8 %v848
      %v850 = vlaneseq
      %v851 = vshrl.u32 %v850, 7
      %v852 = vsub.s32 %v849, %v851
      %v853 = vrot.slane %v282, %v852
      %v855 = vunpack.c.l.s4 1983009808
      %v856 = vunpack.c.0.s8 %v855
      %v857 = vlaneseq
      %v858 = vshrl.u32 %v857, 7
      %v859 = vsub.s32 %v856, %v858
      %v860 = vrot.slane %v846, %v859
      %v861 = vcombine.high %v853, %v853
      %v862 = vcombine.high %v860, %v860
      %v863 = vcombine.high %v283, %v283
      %v865 = vunpack.c.l.s4 1983009808
      %v866 = vunpack.c.0.s8 %v865
      %v867 = vlaneseq
      %v868 = vshrl.u32 %v867, 7
      %v869 = vsub.s32 %v866, %v868
      %v870 = vrot.slane %v283, %v869
      %v872 = vunpack.c.l.s4 1983009808
      %v873 = vunpack.c.0.s8 %v872
      %v874 = vlaneseq
      %v875 = vshrl.u32 %v874, 7
      %v876 = vsub.s32 %v873, %v875
      %v877 = vrot.slane %v863, %v876
      %v878 = vcombine.high %v870, %v870
      %v879 = vcombine.high %v877, %v877
      %v881 = vunpack.c.l.s4 1983009808
      %v882 = vunpack.c.0.s8 %v881
      %v883 = vlaneseq
      %v884 = vshrl.u32 %v883, 7
      %v885 = vsub.s32 %v882, %v884
      %v886 = vrot.slane %v284, %v885
      %v887 = vcombine.high %v285, %v285
      %v889 = vunpack.c.l.s4 1983009808
      %v890 = vunpack.c.0.s8 %v889
      %v891 = vlaneseq
      %v892 = vshrl.u32 %v891, 7
      %v893 = vsub.s32 %v890, %v892
      %v894 = vrot.slane %v285, %v893
      %v896 = vunpack.c.l.s4 1983009808
      %v897 = vunpack.c.0.s8 %v896
      %v898 = vlaneseq
      %v899 = vshrl.u32 %v898, 7
      %v900 = vsub.s32 %v897, %v899
      %v901 = vrot.slane %v887, %v900
      %v902 = vcombine.high %v894, %v894
      %v903 = vcombine.high %v901, %v901
      %v904 = vcombine.high %v286, %v286
      %v906 = vunpack.c.l.s4 1983009808
      %v907 = vunpack.c.0.s8 %v906
      %v908 = vlaneseq
      %v909 = vshrl.u32 %v908, 7
      %v910 = vsub.s32 %v907, %v909
      %v911 = vrot.slane %v286, %v910
      %v913 = vunpack.c.l.s4 1983009808
      %v914 = vunpack.c.0.s8 %v913
      %v915 = vlaneseq
      %v916 = vshrl.u32 %v915, 7
      %v917 = vsub.s32 %v914, %v916
      %v918 = vrot.slane %v904, %v917
      %v919 = vcombine.high %v911, %v911
      %v920 = vcombine.high %v918, %v918
      %v922 = vunpack.c.l.s4 1983009808
      %v923 = vunpack.c.0.s8 %v922
      %v924 = vlaneseq
      %v925 = vshrl.u32 %v924, 7
      %v926 = vsub.s32 %v923, %v925
      %v927 = vrot.slane %v287, %v926
      %v928 = vcombine.high %v288, %v288
      %v930 = vunpack.c.l.s4 1983009808
      %v931 = vunpack.c.0.s8 %v930
      %v932 = vlaneseq
      %v933 = vshrl.u32 %v932, 7
      %v934 = vsub.s32 %v931, %v933
      %v935 = vrot.slane %v288, %v934
      %v937 = vunpack.c.l.s4 1983009808
      %v938 = vunpack.c.0.s8 %v937
      %v939 = vlaneseq
      %v940 = vshrl.u32 %v939, 7
      %v941 = vsub.s32 %v938, %v940
      %v942 = vrot.slane %v928, %v941
      %v943 = vcombine.high %v935, %v935
      %v944 = vcombine.high %v942, %v942
      %v945 = vcombine.high %v289, %v289
      %v947 = vunpack.c.l.s4 1983009808
      %v948 = vunpack.c.0.s8 %v947
      %v949 = vlaneseq
      %v950 = vshrl.u32 %v949, 7
      %v951 = vsub.s32 %v948, %v950
      %v952 = vrot.slane %v289, %v951
      %v954 = vunpack.c.l.s4 1983009808
      %v955 = vunpack.c.0.s8 %v954
      %v956 = vlaneseq
      %v957 = vshrl.u32 %v956, 7
      %v958 = vsub.s32 %v955, %v957
      %v959 = vrot.slane %v945, %v958
      %v960 = vcombine.high %v952, %v952
      %v961 = vcombine.high %v959, %v959
      %v963 = vunpack.c.l.s4 1983009808
      %v964 = vunpack.c.0.s8 %v963
      %v965 = vlaneseq
      %v966 = vshrl.u32 %v965, 7
      %v967 = vsub.s32 %v964, %v966
      %v968 = vrot.slane %v290, %v967
      %v969 = vcombine.high %v291, %v291
      %v971 = vunpack.c.l.s4 1983009808
      %v972 = vunpack.c.0.s8 %v971
      %v973 = vlaneseq
      %v974 = vshrl.u32 %v973, 7
      %v975 = vsub.s32 %v972, %v974
      %v976 = vrot.slane %v291, %v975
      %v978 = vunpack.c.l.s4 1983009808
      %v979 = vunpack.c.0.s8 %v978
      %v980 = vlaneseq
      %v981 = vshrl.u32 %v980, 7
      %v982 = vsub.s32 %v979, %v981
      %v983 = vrot.slane %v969, %v982
      %v984 = vcombine.high %v976, %v976
      %v985 = vcombine.high %v983, %v983
      %v986 = vcombine.high %v292, %v292
      %v988 = vunpack.c.l.s4 1983009808
      %v989 = vunpack.c.0.s8 %v988
      %v990 = vlaneseq
      %v991 = vshrl.u32 %v990, 7
      %v992 = vsub.s32 %v989, %v991
      %v993 = vrot.slane %v292, %v992
      %v995 = vunpack.c.l.s4 1983009808
      %v996 = vunpack.c.0.s8 %v995
      %v997 = vlaneseq
      %v998 = vshrl.u32 %v997, 7
      %v999 = vsub.s32 %v996, %v998
      %v1000 = vrot.slane %v986, %v999
      %v1001 = vcombine.high %v993, %v993
      %v1002 = vcombine.high %v1000, %v1000
      %v1004 = vunpack.c.l.s4 1983009808
      %v1005 = vunpack.c.0.s8 %v1004
      %v1006 = vlaneseq
      %v1007 = vshrl.u32 %v1006, 7
      %v1008 = vsub.s32 %v1005, %v1007
      %v1009 = vrot.slane %v293, %v1008
      %v1010 = vcombine.high %v294, %v294
      %v1012 = vunpack.c.l.s4 1983009808
      %v1013 = vunpack.c.0.s8 %v1012
      %v1014 = vlaneseq
      %v1015 = vshrl.u32 %v1014, 7
      %v1016 = vsub.s32 %v1013, %v1015
      %v1017 = vrot.slane %v294, %v1016
      %v1019 = vunpack.c.l.s4 1983009808
      %v1020 = vunpack.c.0.s8 %v1019
      %v1021 = vlaneseq
      %v1022 = vshrl.u32 %v1021, 7
      %v1023 = vsub.s32 %v1020, %v1022
      %v1024 = vrot.slane %v1010, %v1023
      %v1025 = vcombine.high %v1017, %v1017
      %v1026 = vcombine.high %v1024, %v1024
      %v1027 = vcombine.high %v295, %v295
      %v1029 = vunpack.c.l.s4 1983009808
      %v1030 = vunpack.c.0.s8 %v1029
      %v1031 = vlaneseq
      %v1032 = vshrl.u32 %v1031, 7
      %v1033 = vsub.s32 %v1030, %v1032
      %v1034 = vrot.slane %v295, %v1033
      %v1036 = vunpack.c.l.s4 1983009808
      %v1037 = vunpack.c.0.s8 %v1036
      %v1038 = vlaneseq
      %v1039 = vshrl.u32 %v1038, 7
      %v1040 = vsub.s32 %v1037, %v1039
      %v1041 = vrot.slane %v1027, %v1040
      %v1042 = vcombine.high %v1034, %v1034
      %v1043 = vcombine.high %v1041, %v1041
      %v1045 = vunpack.c.l.s4 1983009808
      %v1046 = vunpack.c.0.s8 %v1045
      %v1047 = vlaneseq
      %v1048 = vshrl.u32 %v1047, 7
      %v1049 = vsub.s32 %v1046, %v1048
      %v1050 = vrot.slane %v296, %v1049
      %v1051 = vcombine.high %v297, %v297
      %v1053 = vunpack.c.l.s4 1983009808
      %v1054 = vunpack.c.0.s8 %v1053
      %v1055 = vlaneseq
      %v1056 = vshrl.u32 %v1055, 7
      %v1057 = vsub.s32 %v1054, %v1056
      %v1058 = vrot.slane %v297, %v1057
      %v1060 = vunpack.c.l.s4 1983009808
      %v1061 = vunpack.c.0.s8 %v1060
      %v1062 = vlaneseq
      %v1063 = vshrl.u32 %v1062, 7
      %v1064 = vsub.s32 %v1061, %v1063
      %v1065 = vrot.slane %v1051, %v1064
      %v1066 = vcombine.high %v1058, %v1058
      %v1067 = vcombine.high %v1065, %v1065
      %v1068 = vcombine.high %v298, %v298
      %v1070 = vunpack.c.l.s4 1983009808
      %v1071 = vunpack.c.0.s8 %v1070
      %v1072 = vlaneseq
      %v1073 = vshrl.u32 %v1072, 7
      %v1074 = vsub.s32 %v1071, %v1073
      %v1075 = vrot.slane %v298, %v1074
      %v1077 = vunpack.c.l.s4 1983009808
      %v1078 = vunpack.c.0.s8 %v1077
      %v1079 = vlaneseq
      %v1080 = vshrl.u32 %v1079, 7
      %v1081 = vsub.s32 %v1078, %v1080
      %v1082 = vrot.slane %v1068, %v1081
      %v1083 = vcombine.high %v1075, %v1075
      %v1084 = vcombine.high %v1082, %v1082
      %v1086 = vunpack.c.l.s4 1983009808
      %v1087 = vunpack.c.0.s8 %v1086
      %v1088 = vlaneseq
      %v1089 = vshrl.u32 %v1088, 7
      %v1090 = vsub.s32 %v1087, %v1089
      %v1091 = vrot.slane %v299, %v1090
      %v1092 = vld [vmem:[%s1] sm:$0xff]
      %v1093 = vld [vmem:[%s2] sm:$0x1]
      %v1095 = vlaneseq
      %v1096 = vshrl.u32 %v1095, 7
      %v1097 = vsub.s32 0, %v1096
      %v1098 = vrot.slane %v1093, %v1097
      %v1100 = vcombine.low %v361, %v369
      %v1101 = vcombine.low %v368, %v370
      %v1103 = vunpack.c.l.s4 1983009808
      %v1104 = vunpack.c.0.s8 %v1103
      %v1105 = vlaneseq
      %v1106 = vshrl.u32 %v1105, 7
      %v1107 = vsub.s32 %v1104, %v1106
      %v1108 = vrot.slane %v1100, %v1107
      %v1110 = vunpack.c.l.s4 1983009808
      %v1111 = vunpack.c.0.s8 %v1110
      %v1112 = vlaneseq
      %v1113 = vshrl.u32 %v1112, 7
      %v1114 = vsub.s32 %v1111, %v1113
      %v1115 = vrot.slane %v1101, %v1114
      %v1116 = vcombine.low %v1108, %v1115
      %v1117 = vcombine.low %v378, %v386
      %v1118 = vcombine.low %v385, %v387
      %v1120 = vunpack.c.l.s4 1983009808
      %v1121 = vunpack.c.0.s8 %v1120
      %v1122 = vlaneseq
      %v1123 = vshrl.u32 %v1122, 7
      %v1124 = vsub.s32 %v1121, %v1123
      %v1125 = vrot.slane %v1117, %v1124
      %v1127 = vunpack.c.l.s4 1983009808
      %v1128 = vunpack.c.0.s8 %v1127
      %v1129 = vlaneseq
      %v1130 = vshrl.u32 %v1129, 7
      %v1131 = vsub.s32 %v1128, %v1130
      %v1132 = vrot.slane %v1118, %v1131
      %v1133 = vcombine.low %v1125, %v1132
      %v1134 = vcombine.low %v394, %v402
      %v1135 = vcombine.low %v410, %v409
      %v1137 = vunpack.c.l.s4 1983009808
      %v1138 = vunpack.c.0.s8 %v1137
      %v1139 = vlaneseq
      %v1140 = vshrl.u32 %v1139, 7
      %v1141 = vsub.s32 %v1138, %v1140
      %v1142 = vrot.slane %v1134, %v1141
      %v1144 = vunpack.c.l.s4 1983009808
      %v1145 = vunpack.c.0.s8 %v1144
      %v1146 = vlaneseq
      %v1147 = vshrl.u32 %v1146, 7
      %v1148 = vsub.s32 %v1145, %v1147
      %v1149 = vrot.slane %v1135, %v1148
      %v1150 = vcombine.low %v1142, %v1149
      %v1151 = vcombine.low %v411, %v419
      %v1152 = vcombine.low %v427, %v426
      %v1154 = vunpack.c.l.s4 1983009808
      %v1155 = vunpack.c.0.s8 %v1154
      %v1156 = vlaneseq
      %v1157 = vshrl.u32 %v1156, 7
      %v1158 = vsub.s32 %v1155, %v1157
      %v1159 = vrot.slane %v1151, %v1158
      %v1161 = vunpack.c.l.s4 1983009808
      %v1162 = vunpack.c.0.s8 %v1161
      %v1163 = vlaneseq
      %v1164 = vshrl.u32 %v1163, 7
      %v1165 = vsub.s32 %v1162, %v1164
      %v1166 = vrot.slane %v1152, %v1165
      %v1167 = vcombine.low %v1159, %v1166
      %v1168 = vcombine.low %v428, %v435
      %v1169 = vcombine.low %v443, %v451
      %v1171 = vunpack.c.l.s4 1983009808
      %v1172 = vunpack.c.0.s8 %v1171
      %v1173 = vlaneseq
      %v1174 = vshrl.u32 %v1173, 7
      %v1175 = vsub.s32 %v1172, %v1174
      %v1176 = vrot.slane %v1168, %v1175
      %v1178 = vunpack.c.l.s4 1983009808
      %v1179 = vunpack.c.0.s8 %v1178
      %v1180 = vlaneseq
      %v1181 = vshrl.u32 %v1180, 7
      %v1182 = vsub.s32 %v1179, %v1181
      %v1183 = vrot.slane %v1169, %v1182
      %v1184 = vcombine.low %v1176, %v1183
      %v1185 = vcombine.low %v450, %v452
      %v1186 = vcombine.low %v460, %v468
      %v1188 = vunpack.c.l.s4 1983009808
      %v1189 = vunpack.c.0.s8 %v1188
      %v1190 = vlaneseq
      %v1191 = vshrl.u32 %v1190, 7
      %v1192 = vsub.s32 %v1189, %v1191
      %v1193 = vrot.slane %v1185, %v1192
      %v1195 = vunpack.c.l.s4 1983009808
      %v1196 = vunpack.c.0.s8 %v1195
      %v1197 = vlaneseq
      %v1198 = vshrl.u32 %v1197, 7
      %v1199 = vsub.s32 %v1196, %v1198
      %v1200 = vrot.slane %v1186, %v1199
      %v1201 = vcombine.low %v1193, %v1200
      %v1202 = vcombine.low %v467, %v469
      %v1203 = vcombine.low %v476, %v484
      %v1205 = vunpack.c.l.s4 1983009808
      %v1206 = vunpack.c.0.s8 %v1205
      %v1207 = vlaneseq
      %v1208 = vshrl.u32 %v1207, 7
      %v1209 = vsub.s32 %v1206, %v1208
      %v1210 = vrot.slane %v1202, %v1209
      %v1212 = vunpack.c.l.s4 1983009808
      %v1213 = vunpack.c.0.s8 %v1212
      %v1214 = vlaneseq
      %v1215 = vshrl.u32 %v1214, 7
      %v1216 = vsub.s32 %v1213, %v1215
      %v1217 = vrot.slane %v1203, %v1216
      %v1218 = vcombine.low %v1210, %v1217
      %v1219 = vcombine.low %v492, %v491
      %v1220 = vcombine.low %v493, %v501
      %v1222 = vunpack.c.l.s4 1983009808
      %v1223 = vunpack.c.0.s8 %v1222
      %v1224 = vlaneseq
      %v1225 = vshrl.u32 %v1224, 7
      %v1226 = vsub.s32 %v1223, %v1225
      %v1227 = vrot.slane %v1219, %v1226
      %v1229 = vunpack.c.l.s4 1983009808
      %v1230 = vunpack.c.0.s8 %v1229
      %v1231 = vlaneseq
      %v1232 = vshrl.u32 %v1231, 7
      %v1233 = vsub.s32 %v1230, %v1232
      %v1234 = vrot.slane %v1220, %v1233
      %v1235 = vcombine.low %v1227, %v1234
      %v1236 = vcombine.low %v509, %v508
      %v1237 = vcombine.low %v510, %v517
      %v1239 = vunpack.c.l.s4 1983009808
      %v1240 = vunpack.c.0.s8 %v1239
      %v1241 = vlaneseq
      %v1242 = vshrl.u32 %v1241, 7
      %v1243 = vsub.s32 %v1240, %v1242
      %v1244 = vrot.slane %v1236, %v1243
      %v1246 = vunpack.c.l.s4 1983009808
      %v1247 = vunpack.c.0.s8 %v1246
      %v1248 = vlaneseq
      %v1249 = vshrl.u32 %v1248, 7
      %v1250 = vsub.s32 %v1247, %v1249
      %v1251 = vrot.slane %v1237, %v1250
      %v1252 = vcombine.low %v1244, %v1251
      %v1253 = vcombine.low %v525, %v533
      %v1254 = vcombine.low %v532, %v534
      %v1256 = vunpack.c.l.s4 1983009808
      %v1257 = vunpack.c.0.s8 %v1256
      %v1258 = vlaneseq
      %v1259 = vshrl.u32 %v1258, 7
      %v1260 = vsub.s32 %v1257, %v1259
      %v1261 = vrot.slane %v1253, %v1260
      %v1263 = vunpack.c.l.s4 1983009808
      %v1264 = vunpack.c.0.s8 %v1263
      %v1265 = vlaneseq
      %v1266 = vshrl.u32 %v1265, 7
      %v1267 = vsub.s32 %v1264, %v1266
      %v1268 = vrot.slane %v1254, %v1267
      %v1269 = vcombine.low %v1261, %v1268
      %v1270 = vcombine.low %v542, %v550
      %v1271 = vcombine.low %v549, %v551
      %v1273 = vunpack.c.l.s4 1983009808
      %v1274 = vunpack.c.0.s8 %v1273
      %v1275 = vlaneseq
      %v1276 = vshrl.u32 %v1275, 7
      %v1277 = vsub.s32 %v1274, %v1276
      %v1278 = vrot.slane %v1270, %v1277
      %v1280 = vunpack.c.l.s4 1983009808
      %v1281 = vunpack.c.0.s8 %v1280
      %v1282 = vlaneseq
      %v1283 = vshrl.u32 %v1282, 7
      %v1284 = vsub.s32 %v1281, %v1283
      %v1285 = vrot.slane %v1271, %v1284
      %v1286 = vcombine.low %v1278, %v1285
      %v1287 = vcombine.low %v558, %v566
      %v1288 = vcombine.low %v574, %v573
      %v1290 = vunpack.c.l.s4 1983009808
      %v1291 = vunpack.c.0.s8 %v1290
      %v1292 = vlaneseq
      %v1293 = vshrl.u32 %v1292, 7
      %v1294 = vsub.s32 %v1291, %v1293
      %v1295 = vrot.slane %v1287, %v1294
      %v1297 = vunpack.c.l.s4 1983009808
      %v1298 = vunpack.c.0.s8 %v1297
      %v1299 = vlaneseq
      %v1300 = vshrl.u32 %v1299, 7
      %v1301 = vsub.s32 %v1298, %v1300
      %v1302 = vrot.slane %v1288, %v1301
      %v1303 = vcombine.low %v1295, %v1302
      %v1304 = vcombine.low %v575, %v583
      %v1305 = vcombine.low %v591, %v590
      %v1307 = vunpack.c.l.s4 1983009808
      %v1308 = vunpack.c.0.s8 %v1307
      %v1309 = vlaneseq
      %v1310 = vshrl.u32 %v1309, 7
      %v1311 = vsub.s32 %v1308, %v1310
      %v1312 = vrot.slane %v1304, %v1311
      %v1314 = vunpack.c.l.s4 1983009808
      %v1315 = vunpack.c.0.s8 %v1314
      %v1316 = vlaneseq
      %v1317 = vshrl.u32 %v1316, 7
      %v1318 = vsub.s32 %v1315, %v1317
      %v1319 = vrot.slane %v1305, %v1318
      %v1320 = vcombine.low %v1312, %v1319
      %v1321 = vcombine.low %v592, %v599
      %v1322 = vcombine.low %v607, %v615
      %v1324 = vunpack.c.l.s4 1983009808
      %v1325 = vunpack.c.0.s8 %v1324
      %v1326 = vlaneseq
      %v1327 = vshrl.u32 %v1326, 7
      %v1328 = vsub.s32 %v1325, %v1327
      %v1329 = vrot.slane %v1321, %v1328
      %v1331 = vunpack.c.l.s4 1983009808
      %v1332 = vunpack.c.0.s8 %v1331
      %v1333 = vlaneseq
      %v1334 = vshrl.u32 %v1333, 7
      %v1335 = vsub.s32 %v1332, %v1334
      %v1336 = vrot.slane %v1322, %v1335
      %v1337 = vcombine.low %v1329, %v1336
      %v1338 = vcombine.low %v614, %v616
      %v1339 = vcombine.low %v624, %v632
      %v1341 = vunpack.c.l.s4 1983009808
      %v1342 = vunpack.c.0.s8 %v1341
      %v1343 = vlaneseq
      %v1344 = vshrl.u32 %v1343, 7
      %v1345 = vsub.s32 %v1342, %v1344
      %v1346 = vrot.slane %v1338, %v1345
      %v1348 = vunpack.c.l.s4 1983009808
      %v1349 = vunpack.c.0.s8 %v1348
      %v1350 = vlaneseq
      %v1351 = vshrl.u32 %v1350, 7
      %v1352 = vsub.s32 %v1349, %v1351
      %v1353 = vrot.slane %v1339, %v1352
      %v1354 = vcombine.low %v1346, %v1353
      %v1355 = vcombine.low %v631, %v633
      %v1356 = vcombine.low %v640, %v648
      %v1358 = vunpack.c.l.s4 1983009808
      %v1359 = vunpack.c.0.s8 %v1358
      %v1360 = vlaneseq
      %v1361 = vshrl.u32 %v1360, 7
      %v1362 = vsub.s32 %v1359, %v1361
      %v1363 = vrot.slane %v1355, %v1362
      %v1365 = vunpack.c.l.s4 1983009808
      %v1366 = vunpack.c.0.s8 %v1365
      %v1367 = vlaneseq
      %v1368 = vshrl.u32 %v1367, 7
      %v1369 = vsub.s32 %v1366, %v1368
      %v1370 = vrot.slane %v1356, %v1369
      %v1371 = vcombine.low %v1363, %v1370
      %v1372 = vcombine.low %v656, %v655
      %v1373 = vcombine.low %v657, %v665
      %v1375 = vunpack.c.l.s4 1983009808
      %v1376 = vunpack.c.0.s8 %v1375
      %v1377 = vlaneseq
      %v1378 = vshrl.u32 %v1377, 7
      %v1379 = vsub.s32 %v1376, %v1378
      %v1380 = vrot.slane %v1372, %v1379
      %v1382 = vunpack.c.l.s4 1983009808
      %v1383 = vunpack.c.0.s8 %v1382
      %v1384 = vlaneseq
      %v1385 = vshrl.u32 %v1384, 7
      %v1386 = vsub.s32 %v1383, %v1385
      %v1387 = vrot.slane %v1373, %v1386
      %v1388 = vcombine.low %v1380, %v1387
      %v1389 = vcombine.low %v673, %v672
      %v1390 = vcombine.low %v674, %v681
      %v1392 = vunpack.c.l.s4 1983009808
      %v1393 = vunpack.c.0.s8 %v1392
      %v1394 = vlaneseq
      %v1395 = vshrl.u32 %v1394, 7
      %v1396 = vsub.s32 %v1393, %v1395
      %v1397 = vrot.slane %v1389, %v1396
      %v1399 = vunpack.c.l.s4 1983009808
      %v1400 = vunpack.c.0.s8 %v1399
      %v1401 = vlaneseq
      %v1402 = vshrl.u32 %v1401, 7
      %v1403 = vsub.s32 %v1400, %v1402
      %v1404 = vrot.slane %v1390, %v1403
      %v1405 = vcombine.low %v1397, %v1404
      %v1406 = vcombine.low %v689, %v697
      %v1407 = vcombine.low %v696, %v698
      %v1409 = vunpack.c.l.s4 1983009808
      %v1410 = vunpack.c.0.s8 %v1409
      %v1411 = vlaneseq
      %v1412 = vshrl.u32 %v1411, 7
      %v1413 = vsub.s32 %v1410, %v1412
      %v1414 = vrot.slane %v1406, %v1413
      %v1416 = vunpack.c.l.s4 1983009808
      %v1417 = vunpack.c.0.s8 %v1416
      %v1418 = vlaneseq
      %v1419 = vshrl.u32 %v1418, 7
      %v1420 = vsub.s32 %v1417, %v1419
      %v1421 = vrot.slane %v1407, %v1420
      %v1422 = vcombine.low %v1414, %v1421
      %v1423 = vcombine.low %v706, %v714
      %v1424 = vcombine.low %v713, %v715
      %v1426 = vunpack.c.l.s4 1983009808
      %v1427 = vunpack.c.0.s8 %v1426
      %v1428 = vlaneseq
      %v1429 = vshrl.u32 %v1428, 7
      %v1430 = vsub.s32 %v1427, %v1429
      %v1431 = vrot.slane %v1423, %v1430
      %v1433 = vunpack.c.l.s4 1983009808
      %v1434 = vunpack.c.0.s8 %v1433
      %v1435 = vlaneseq
      %v1436 = vshrl.u32 %v1435, 7
      %v1437 = vsub.s32 %v1434, %v1436
      %v1438 = vrot.slane %v1424, %v1437
      %v1439 = vcombine.low %v1431, %v1438
      %v1440 = vcombine.low %v722, %v730
      %v1441 = vcombine.low %v738, %v737
      %v1443 = vunpack.c.l.s4 1983009808
      %v1444 = vunpack.c.0.s8 %v1443
      %v1445 = vlaneseq
      %v1446 = vshrl.u32 %v1445, 7
      %v1447 = vsub.s32 %v1444, %v1446
      %v1448 = vrot.slane %v1440, %v1447
      %v1450 = vunpack.c.l.s4 1983009808
      %v1451 = vunpack.c.0.s8 %v1450
      %v1452 = vlaneseq
      %v1453 = vshrl.u32 %v1452, 7
      %v1454 = vsub.s32 %v1451, %v1453
      %v1455 = vrot.slane %v1441, %v1454
      %v1456 = vcombine.low %v1448, %v1455
      %v1457 = vcombine.low %v739, %v747
      %v1458 = vcombine.low %v755, %v754
      %v1460 = vunpack.c.l.s4 1983009808
      %v1461 = vunpack.c.0.s8 %v1460
      %v1462 = vlaneseq
      %v1463 = vshrl.u32 %v1462, 7
      %v1464 = vsub.s32 %v1461, %v1463
      %v1465 = vrot.slane %v1457, %v1464
      %v1467 = vunpack.c.l.s4 1983009808
      %v1468 = vunpack.c.0.s8 %v1467
      %v1469 = vlaneseq
      %v1470 = vshrl.u32 %v1469, 7
      %v1471 = vsub.s32 %v1468, %v1470
      %v1472 = vrot.slane %v1458, %v1471
      %v1473 = vcombine.low %v1465, %v1472
      %v1474 = vcombine.low %v756, %v763
      %v1475 = vcombine.low %v771, %v779
      %v1477 = vunpack.c.l.s4 1983009808
      %v1478 = vunpack.c.0.s8 %v1477
      %v1479 = vlaneseq
      %v1480 = vshrl.u32 %v1479, 7
      %v1481 = vsub.s32 %v1478, %v1480
      %v1482 = vrot.slane %v1474, %v1481
      %v1484 = vunpack.c.l.s4 1983009808
      %v1485 = vunpack.c.0.s8 %v1484
      %v1486 = vlaneseq
      %v1487 = vshrl.u32 %v1486, 7
      %v1488 = vsub.s32 %v1485, %v1487
      %v1489 = vrot.slane %v1475, %v1488
      %v1490 = vcombine.low %v1482, %v1489
      %v1491 = vcombine.low %v778, %v780
      %v1492 = vcombine.low %v788, %v796
      %v1494 = vunpack.c.l.s4 1983009808
      %v1495 = vunpack.c.0.s8 %v1494
      %v1496 = vlaneseq
      %v1497 = vshrl.u32 %v1496, 7
      %v1498 = vsub.s32 %v1495, %v1497
      %v1499 = vrot.slane %v1491, %v1498
      %v1501 = vunpack.c.l.s4 1983009808
      %v1502 = vunpack.c.0.s8 %v1501
      %v1503 = vlaneseq
      %v1504 = vshrl.u32 %v1503, 7
      %v1505 = vsub.s32 %v1502, %v1504
      %v1506 = vrot.slane %v1492, %v1505
      %v1507 = vcombine.low %v1499, %v1506
      %v1508 = vcombine.low %v795, %v797
      %v1509 = vcombine.low %v804, %v812
      %v1511 = vunpack.c.l.s4 1983009808
      %v1512 = vunpack.c.0.s8 %v1511
      %v1513 = vlaneseq
      %v1514 = vshrl.u32 %v1513, 7
      %v1515 = vsub.s32 %v1512, %v1514
      %v1516 = vrot.slane %v1508, %v1515
      %v1518 = vunpack.c.l.s4 1983009808
      %v1519 = vunpack.c.0.s8 %v1518
      %v1520 = vlaneseq
      %v1521 = vshrl.u32 %v1520, 7
      %v1522 = vsub.s32 %v1519, %v1521
      %v1523 = vrot.slane %v1509, %v1522
      %v1524 = vcombine.low %v1516, %v1523
      %v1525 = vcombine.low %v820, %v819
      %v1526 = vcombine.low %v821, %v829
      %v1528 = vunpack.c.l.s4 1983009808
      %v1529 = vunpack.c.0.s8 %v1528
      %v1530 = vlaneseq
      %v1531 = vshrl.u32 %v1530, 7
      %v1532 = vsub.s32 %v1529, %v1531
      %v1533 = vrot.slane %v1525, %v1532
      %v1535 = vunpack.c.l.s4 1983009808
      %v1536 = vunpack.c.0.s8 %v1535
      %v1537 = vlaneseq
      %v1538 = vshrl.u32 %v1537, 7
      %v1539 = vsub.s32 %v1536, %v1538
      %v1540 = vrot.slane %v1526, %v1539
      %v1541 = vcombine.low %v1533, %v1540
      %v1542 = vcombine.low %v837, %v836
      %v1543 = vcombine.low %v838, %v845
      %v1545 = vunpack.c.l.s4 1983009808
      %v1546 = vunpack.c.0.s8 %v1545
      %v1547 = vlaneseq
      %v1548 = vshrl.u32 %v1547, 7
      %v1549 = vsub.s32 %v1546, %v1548
      %v1550 = vrot.slane %v1542, %v1549
      %v1552 = vunpack.c.l.s4 1983009808
      %v1553 = vunpack.c.0.s8 %v1552
      %v1554 = vlaneseq
      %v1555 = vshrl.u32 %v1554, 7
      %v1556 = vsub.s32 %v1553, %v1555
      %v1557 = vrot.slane %v1543, %v1556
      %v1558 = vcombine.low %v1550, %v1557
      %v1559 = vcombine.low %v853, %v861
      %v1560 = vcombine.low %v860, %v862
      %v1562 = vunpack.c.l.s4 1983009808
      %v1563 = vunpack.c.0.s8 %v1562
      %v1564 = vlaneseq
      %v1565 = vshrl.u32 %v1564, 7
      %v1566 = vsub.s32 %v1563, %v1565
      %v1567 = vrot.slane %v1559, %v1566
      %v1569 = vunpack.c.l.s4 1983009808
      %v1570 = vunpack.c.0.s8 %v1569
      %v1571 = vlaneseq
      %v1572 = vshrl.u32 %v1571, 7
      %v1573 = vsub.s32 %v1570, %v1572
      %v1574 = vrot.slane %v1560, %v1573
      %v1575 = vcombine.low %v1567, %v1574
      %v1576 = vcombine.low %v870, %v878
      %v1577 = vcombine.low %v877, %v879
      %v1579 = vunpack.c.l.s4 1983009808
      %v1580 = vunpack.c.0.s8 %v1579
      %v1581 = vlaneseq
      %v1582 = vshrl.u32 %v1581, 7
      %v1583 = vsub.s32 %v1580, %v1582
      %v1584 = vrot.slane %v1576, %v1583
      %v1586 = vunpack.c.l.s4 1983009808
      %v1587 = vunpack.c.0.s8 %v1586
      %v1588 = vlaneseq
      %v1589 = vshrl.u32 %v1588, 7
      %v1590 = vsub.s32 %v1587, %v1589
      %v1591 = vrot.slane %v1577, %v1590
      %v1592 = vcombine.low %v1584, %v1591
      %v1593 = vcombine.low %v886, %v894
      %v1594 = vcombine.low %v902, %v901
      %v1596 = vunpack.c.l.s4 1983009808
      %v1597 = vunpack.c.0.s8 %v1596
      %v1598 = vlaneseq
      %v1599 = vshrl.u32 %v1598, 7
      %v1600 = vsub.s32 %v1597, %v1599
      %v1601 = vrot.slane %v1593, %v1600
      %v1603 = vunpack.c.l.s4 1983009808
      %v1604 = vunpack.c.0.s8 %v1603
      %v1605 = vlaneseq
      %v1606 = vshrl.u32 %v1605, 7
      %v1607 = vsub.s32 %v1604, %v1606
      %v1608 = vrot.slane %v1594, %v1607
      %v1609 = vcombine.low %v1601, %v1608
      %v1610 = vcombine.low %v903, %v911
      %v1611 = vcombine.low %v919, %v918
      %v1613 = vunpack.c.l.s4 1983009808
      %v1614 = vunpack.c.0.s8 %v1613
      %v1615 = vlaneseq
      %v1616 = vshrl.u32 %v1615, 7
      %v1617 = vsub.s32 %v1614, %v1616
      %v1618 = vrot.slane %v1610, %v1617
      %v1620 = vunpack.c.l.s4 1983009808
      %v1621 = vunpack.c.0.s8 %v1620
      %v1622 = vlaneseq
      %v1623 = vshrl.u32 %v1622, 7
      %v1624 = vsub.s32 %v1621, %v1623
      %v1625 = vrot.slane %v1611, %v1624
      %v1626 = vcombine.low %v1618, %v1625
      %v1627 = vcombine.low %v920, %v927
      %v1628 = vcombine.low %v935, %v943
      %v1630 = vunpack.c.l.s4 1983009808
      %v1631 = vunpack.c.0.s8 %v1630
      %v1632 = vlaneseq
      %v1633 = vshrl.u32 %v1632, 7
      %v1634 = vsub.s32 %v1631, %v1633
      %v1635 = vrot.slane %v1627, %v1634
      %v1637 = vunpack.c.l.s4 1983009808
      %v1638 = vunpack.c.0.s8 %v1637
      %v1639 = vlaneseq
      %v1640 = vshrl.u32 %v1639, 7
      %v1641 = vsub.s32 %v1638, %v1640
      %v1642 = vrot.slane %v1628, %v1641
      %v1643 = vcombine.low %v1635, %v1642
      %v1644 = vcombine.low %v942, %v944
      %v1645 = vcombine.low %v952, %v960
      %v1647 = vunpack.c.l.s4 1983009808
      %v1648 = vunpack.c.0.s8 %v1647
      %v1649 = vlaneseq
      %v1650 = vshrl.u32 %v1649, 7
      %v1651 = vsub.s32 %v1648, %v1650
      %v1652 = vrot.slane %v1644, %v1651
      %v1654 = vunpack.c.l.s4 1983009808
      %v1655 = vunpack.c.0.s8 %v1654
      %v1656 = vlaneseq
      %v1657 = vshrl.u32 %v1656, 7
      %v1658 = vsub.s32 %v1655, %v1657
      %v1659 = vrot.slane %v1645, %v1658
      %v1660 = vcombine.low %v1652, %v1659
      %v1661 = vcombine.low %v959, %v961
      %v1662 = vcombine.low %v968, %v976
      %v1664 = vunpack.c.l.s4 1983009808
      %v1665 = vunpack.c.0.s8 %v1664
      %v1666 = vlaneseq
      %v1667 = vshrl.u32 %v1666, 7
      %v1668 = vsub.s32 %v1665, %v1667
      %v1669 = vrot.slane %v1661, %v1668
      %v1671 = vunpack.c.l.s4 1983009808
      %v1672 = vunpack.c.0.s8 %v1671
      %v1673 = vlaneseq
      %v1674 = vshrl.u32 %v1673, 7
      %v1675 = vsub.s32 %v1672, %v1674
      %v1676 = vrot.slane %v1662, %v1675
      %v1677 = vcombine.low %v1669, %v1676
      %v1678 = vcombine.low %v984, %v983
      %v1679 = vcombine.low %v985, %v993
      %v1681 = vunpack.c.l.s4 1983009808
      %v1682 = vunpack.c.0.s8 %v1681
      %v1683 = vlaneseq
      %v1684 = vshrl.u32 %v1683, 7
      %v1685 = vsub.s32 %v1682, %v1684
      %v1686 = vrot.slane %v1678, %v1685
      %v1688 = vunpack.c.l.s4 1983009808
      %v1689 = vunpack.c.0.s8 %v1688
      %v1690 = vlaneseq
      %v1691 = vshrl.u32 %v1690, 7
      %v1692 = vsub.s32 %v1689, %v1691
      %v1693 = vrot.slane %v1679, %v1692
      %v1694 = vcombine.low %v1686, %v1693
      %v1695 = vcombine.low %v1001, %v1000
      %v1696 = vcombine.low %v1002, %v1009
      %v1698 = vunpack.c.l.s4 1983009808
      %v1699 = vunpack.c.0.s8 %v1698
      %v1700 = vlaneseq
      %v1701 = vshrl.u32 %v1700, 7
      %v1702 = vsub.s32 %v1699, %v1701
      %v1703 = vrot.slane %v1695, %v1702
      %v1705 = vunpack.c.l.s4 1983009808
      %v1706 = vunpack.c.0.s8 %v1705
      %v1707 = vlaneseq
      %v1708 = vshrl.u32 %v1707, 7
      %v1709 = vsub.s32 %v1706, %v1708
      %v1710 = vrot.slane %v1696, %v1709
      %v1711 = vcombine.low %v1703, %v1710
      %v1712 = vcombine.low %v1017, %v1025
      %v1713 = vcombine.low %v1024, %v1026
      %v1715 = vunpack.c.l.s4 1983009808
      %v1716 = vunpack.c.0.s8 %v1715
      %v1717 = vlaneseq
      %v1718 = vshrl.u32 %v1717, 7
      %v1719 = vsub.s32 %v1716, %v1718
      %v1720 = vrot.slane %v1712, %v1719
      %v1722 = vunpack.c.l.s4 1983009808
      %v1723 = vunpack.c.0.s8 %v1722
      %v1724 = vlaneseq
      %v1725 = vshrl.u32 %v1724, 7
      %v1726 = vsub.s32 %v1723, %v1725
      %v1727 = vrot.slane %v1713, %v1726
      %v1728 = vcombine.low %v1720, %v1727
      %v1729 = vcombine.low %v1034, %v1042
      %v1730 = vcombine.low %v1041, %v1043
      %v1732 = vunpack.c.l.s4 1983009808
      %v1733 = vunpack.c.0.s8 %v1732
      %v1734 = vlaneseq
      %v1735 = vshrl.u32 %v1734, 7
      %v1736 = vsub.s32 %v1733, %v1735
      %v1737 = vrot.slane %v1729, %v1736
      %v1739 = vunpack.c.l.s4 1983009808
      %v1740 = vunpack.c.0.s8 %v1739
      %v1741 = vlaneseq
      %v1742 = vshrl.u32 %v1741, 7
      %v1743 = vsub.s32 %v1740, %v1742
      %v1744 = vrot.slane %v1730, %v1743
      %v1745 = vcombine.low %v1737, %v1744
      %v1746 = vcombine.low %v1050, %v1058
      %v1747 = vcombine.low %v1066, %v1065
      %v1749 = vunpack.c.l.s4 1983009808
      %v1750 = vunpack.c.0.s8 %v1749
      %v1751 = vlaneseq
      %v1752 = vshrl.u32 %v1751, 7
      %v1753 = vsub.s32 %v1750, %v1752
      %v1754 = vrot.slane %v1746, %v1753
      %v1756 = vunpack.c.l.s4 1983009808
      %v1757 = vunpack.c.0.s8 %v1756
      %v1758 = vlaneseq
      %v1759 = vshrl.u32 %v1758, 7
      %v1760 = vsub.s32 %v1757, %v1759
      %v1761 = vrot.slane %v1747, %v1760
      %v1762 = vcombine.low %v1754, %v1761
      %v1763 = vcombine.low %v1067, %v1075
      %v1764 = vcombine.low %v1083, %v1082
      %v1766 = vunpack.c.l.s4 1983009808
      %v1767 = vunpack.c.0.s8 %v1766
      %v1768 = vlaneseq
      %v1769 = vshrl.u32 %v1768, 7
      %v1770 = vsub.s32 %v1767, %v1769
      %v1771 = vrot.slane %v1763, %v1770
      %v1773 = vunpack.c.l.s4 1983009808
      %v1774 = vunpack.c.0.s8 %v1773
      %v1775 = vlaneseq
      %v1776 = vshrl.u32 %v1775, 7
      %v1777 = vsub.s32 %v1774, %v1776
      %v1778 = vrot.slane %v1764, %v1777
      %v1779 = vcombine.low %v1771, %v1778
      %v1780 = vcombine.low %v1084, %v1091
      %v1782 = vunpack.c.l.s4 1983009808
      %v1783 = vunpack.c.0.s8 %v1782
      %v1784 = vlaneseq
      %v1785 = vshrl.u32 %v1784, 7
      %v1786 = vsub.s32 %v1783, %v1785
      %v1787 = vrot.slane %v1780, %v1786
      %vm1788 = vcmask 64512
      %v1789 = vsel %vm1788, %v1116, 0
      %v1791 = vsel %vm1788, %v1133, 0
      %v1793 = vsel %vm1788, %v1150, 0
      %v1795 = vsel %vm1788, %v1167, 0
      %v1797 = vsel %vm1788, %v1184, 0
      %v1799 = vsel %vm1788, %v1201, 0
      %v1801 = vsel %vm1788, %v1218, 0
      %v1803 = vsel %vm1788, %v1235, 0
      %v1805 = vsel %vm1788, %v1252, 0
      %v1807 = vsel %vm1788, %v1269, 0
      %v1809 = vsel %vm1788, %v1286, 0
      %v1811 = vsel %vm1788, %v1303, 0
      %v1813 = vsel %vm1788, %v1320, 0
      %v1815 = vsel %vm1788, %v1337, 0
      %v1817 = vsel %vm1788, %v1354, 0
      %v1819 = vsel %vm1788, %v1371, 0
      %v1821 = vsel %vm1788, %v1388, 0
      %v1823 = vsel %vm1788, %v1405, 0
      %v1825 = vsel %vm1788, %v1422, 0
      %v1827 = vsel %vm1788, %v1439, 0
      %v1829 = vsel %vm1788, %v1456, 0
      %v1831 = vsel %vm1788, %v1473, 0
      %v1833 = vsel %vm1788, %v1490, 0
      %v1835 = vsel %vm1788, %v1507, 0
      %v1837 = vsel %vm1788, %v1524, 0
      %v1839 = vsel %vm1788, %v1541, 0
      %v1841 = vsel %vm1788, %v1558, 0
      %v1843 = vsel %vm1788, %v1575, 0
      %v1845 = vsel %vm1788, %v1592, 0
      %v1847 = vsel %vm1788, %v1609, 0
      %v1849 = vsel %vm1788, %v1626, 0
      %v1851 = vsel %vm1788, %v1643, 0
      %v1853 = vsel %vm1788, %v1660, 0
      %v1855 = vsel %vm1788, %v1677, 0
      %v1857 = vsel %vm1788, %v1694, 0
      %v1859 = vsel %vm1788, %v1711, 0
      %v1861 = vsel %vm1788, %v1728, 0
      %v1863 = vsel %vm1788, %v1745, 0
      %v1865 = vsel %vm1788, %v1762, 0
      %v1867 = vsel %vm1788, %v1779, 0
      %v1869 = vsel %vm1788, %v1787, 0
      %1871 = vmatprep.subr.mxu0 0.0
      %1872 = vmatpush1.msra.mxu0 0.0
      %1873 = vmatprep.subr.mxu0 0.0
      %1874 = vmatpush1.msra.mxu0 0.0
      %1875 = vmatprep.subr.mxu0 0.0
      %1876 = vmatpush1.msra.mxu0 0.0
      %1877 = vmatprep.subr.mxu0 0.0
      %1878 = vmatpush1.msra.mxu0 0.0
      %1879 = vmatprep.subr.mxu0 0.0
      %1880 = vmatpush1.msra.mxu0 0.0
      %1881 = vmatprep.subr.mxu0 0.0
      %1882 = vmatpush1.msra.mxu0 0.0
      %1883 = vmatprep.subr.mxu0 0.0
      %1884 = vmatpush1.msra.mxu0 0.0
      %1885 = vmatprep.subr.mxu0 0.0
      %1886 = vmatpush1.msra.mxu0 0.0
      %1887 = vmatprep.subr.mxu0 0.0
      %1888 = vmatpush1.msra.mxu0 0.0
      %1889 = vmatprep.subr.mxu0 0.0
      %1890 = vmatpush1.msra.mxu0 0.0
      %1891 = vmatprep.subr.mxu0 0.0
      %1892 = vmatpush1.msra.mxu0 0.0
      %1893 = vmatprep.subr.mxu0 0.0
      %1894 = vmatpush1.msra.mxu0 0.0
      %1895 = vmatprep.subr.mxu0 0.0
      %1896 = vmatpush1.msra.mxu0 0.0
      %1897 = vmatprep.subr.mxu0 0.0
      %1898 = vmatpush1.msra.mxu0 0.0
      %1899 = vmatprep.subr.mxu0 0.0
      %1900 = vmatpush1.msra.mxu0 0.0
      %1901 = vmatprep.subr.mxu0 0.0
      %1902 = vmatpush1.msra.mxu0 %v1092
      %1903 = vmatprep.subr.mxu0 0.0
      %1904 = vmatpush2.msra.mxu0 0.0
      %1905 = vmatprep.subr.mxu0 0.0
      %1906 = vmatpush2.msra.mxu0 0.0
      %1907 = vmatprep.subr.mxu0 0.0
      %1908 = vmatpush2.msra.mxu0 0.0
      %1909 = vmatprep.subr.mxu0 0.0
      %1910 = vmatpush2.msra.mxu0 0.0
      %1911 = vmatprep.subr.mxu0 0.0
      %1912 = vmatpush2.msra.mxu0 0.0
      %1913 = vmatprep.subr.mxu0 0.0
      %1914 = vmatpush2.msra.mxu0 0.0
      %1915 = vmatprep.subr.mxu0 0.0
      %1916 = vmatpush2.msra.mxu0 0.0
      %1917 = vmatprep.subr.mxu0 0.0
      %1918 = vmatpush2.msra.mxu0 0.0
      %1919 = vmatprep.subr.mxu0 0.0
      %1920 = vmatpush2.msra.mxu0 0.0
      %1921 = vmatprep.subr.mxu0 0.0
      %1922 = vmatpush2.msra.mxu0 0.0
      %1923 = vmatprep.subr.mxu0 0.0
      %1924 = vmatpush2.msra.mxu0 0.0
      %1925 = vmatprep.subr.mxu0 0.0
      %1926 = vmatpush2.msra.mxu0 0.0
      %1927 = vmatprep.subr.mxu0 0.0
      %1928 = vmatpush2.msra.mxu0 0.0
      %1929 = vmatprep.subr.mxu0 0.0
      %1930 = vmatpush2.msra.mxu0 0.0
      %1931 = vmatprep.subr.mxu0 0.0
      %1932 = vmatpush2.msra.mxu0 0.0
      %1933 = vmatprep.subr.mxu0 0.0
      %1934 = vmatpush2.msra.mxu0 0.0
      %1935 = vmatprep.mubr.f32.mxu0 0.0
      %1936 = vmatmul.mubr.f32.gmra.mxu0 %v1789
      %v1937 = vpop.f32.mrf.mxu0
      %v1938 = vadd.f32 %v1098, %v1937
      %v1939 = vpop.f32.mrf.mxu0
      %1940 = vmatprep.mubr.f32.mxu0 0.0
      %1941 = vmatmul.mubr.f32.gmra.mxu0 %v1791
      %v1942 = vpop.f32.mrf.mxu0
      %v1943 = vadd.f32 %v1098, %v1942
      %v1944 = vpop.f32.mrf.mxu0
      %1945 = vmatprep.mubr.f32.mxu0 0.0
      %1946 = vmatmul.mubr.f32.gmra.mxu0 %v1793
      %v1947 = vpop.f32.mrf.mxu0
      %v1948 = vadd.f32 %v1098, %v1947
      %v1949 = vpop.f32.mrf.mxu0
      %1950 = vmatprep.mubr.f32.mxu0 0.0
      %1951 = vmatmul.mubr.f32.gmra.mxu0 %v1795
      %v1952 = vpop.f32.mrf.mxu0
      %v1953 = vadd.f32 %v1098, %v1952
      %v1954 = vpop.f32.mrf.mxu0
      %1955 = vmatprep.mubr.f32.mxu0 0.0
      %1956 = vmatmul.mubr.f32.gmra.mxu0 %v1797
      %v1957 = vpop.f32.mrf.mxu0
      %v1958 = vadd.f32 %v1098, %v1957
      %v1959 = vpop.f32.mrf.mxu0
      %1960 = vmatprep.mubr.f32.mxu0 0.0
      %1961 = vmatmul.mubr.f32.gmra.mxu0 %v1799
      %v1962 = vpop.f32.mrf.mxu0
      %v1963 = vadd.f32 %v1098, %v1962
      %v1964 = vpop.f32.mrf.mxu0
      %1965 = vmatprep.mubr.f32.mxu0 0.0
      %1966 = vmatmul.mubr.f32.gmra.mxu0 %v1801
      %v1967 = vpop.f32.mrf.mxu0
      %v1968 = vadd.f32 %v1098, %v1967
      %v1969 = vpop.f32.mrf.mxu0
      %1970 = vmatprep.mubr.f32.mxu0 0.0
      %1971 = vmatmul.mubr.f32.gmra.mxu0 %v1803
      %v1972 = vpop.f32.mrf.mxu0
      %v1973 = vadd.f32 %v1098, %v1972
      %v1974 = vpop.f32.mrf.mxu0
      %1975 = vmatprep.mubr.f32.mxu0 0.0
      %1976 = vmatmul.mubr.f32.gmra.mxu0 %v1805
      %v1977 = vpop.f32.mrf.mxu0
      %v1978 = vadd.f32 %v1098, %v1977
      %v1979 = vpop.f32.mrf.mxu0
      %1980 = vmatprep.mubr.f32.mxu0 0.0
      %1981 = vmatmul.mubr.f32.gmra.mxu0 %v1807
      %v1982 = vpop.f32.mrf.mxu0
      %v1983 = vadd.f32 %v1098, %v1982
      %v1984 = vpop.f32.mrf.mxu0
      %1985 = vmatprep.mubr.f32.mxu0 0.0
      %1986 = vmatmul.mubr.f32.gmra.mxu0 %v1809
      %v1987 = vpop.f32.mrf.mxu0
      %v1988 = vadd.f32 %v1098, %v1987
      %v1989 = vpop.f32.mrf.mxu0
      %1990 = vmatprep.mubr.f32.mxu0 0.0
      %1991 = vmatmul.mubr.f32.gmra.mxu0 %v1811
      %v1992 = vpop.f32.mrf.mxu0
      %v1993 = vadd.f32 %v1098, %v1992
      %v1994 = vpop.f32.mrf.mxu0
      %1995 = vmatprep.mubr.f32.mxu0 0.0
      %1996 = vmatmul.mubr.f32.gmra.mxu0 %v1813
      %v1997 = vpop.f32.mrf.mxu0
      %v1998 = vadd.f32 %v1098, %v1997
      %v1999 = vpop.f32.mrf.mxu0
      %2000 = vmatprep.mubr.f32.mxu0 0.0
      %2001 = vmatmul.mubr.f32.gmra.mxu0 %v1815
      %v2002 = vpop.f32.mrf.mxu0
      %v2003 = vadd.f32 %v1098, %v2002
      %v2004 = vpop.f32.mrf.mxu0
      %2005 = vmatprep.mubr.f32.mxu0 0.0
      %2006 = vmatmul.mubr.f32.gmra.mxu0 %v1817
      %v2007 = vpop.f32.mrf.mxu0
      %v2008 = vadd.f32 %v1098, %v2007
      %v2009 = vpop.f32.mrf.mxu0
      %2010 = vmatprep.mubr.f32.mxu0 0.0
      %2011 = vmatmul.mubr.f32.gmra.mxu0 %v1819
      %v2012 = vpop.f32.mrf.mxu0
      %v2013 = vadd.f32 %v1098, %v2012
      %v2014 = vpop.f32.mrf.mxu0
      %2015 = vmatprep.mubr.f32.mxu0 0.0
      %2016 = vmatmul.mubr.f32.gmra.mxu0 %v1821
      %v2017 = vpop.f32.mrf.mxu0
      %v2018 = vadd.f32 %v1098, %v2017
      %v2019 = vpop.f32.mrf.mxu0
      %2020 = vmatprep.mubr.f32.mxu0 0.0
      %2021 = vmatmul.mubr.f32.gmra.mxu0 %v1823
      %v2022 = vpop.f32.mrf.mxu0
      %v2023 = vadd.f32 %v1098, %v2022
      %v2024 = vpop.f32.mrf.mxu0
      %2025 = vmatprep.mubr.f32.mxu0 0.0
      %2026 = vmatmul.mubr.f32.gmra.mxu0 %v1825
      %v2027 = vpop.f32.mrf.mxu0
      %v2028 = vadd.f32 %v1098, %v2027
      %v2029 = vpop.f32.mrf.mxu0
      %2030 = vmatprep.mubr.f32.mxu0 0.0
      %2031 = vmatmul.mubr.f32.gmra.mxu0 %v1827
      %v2032 = vpop.f32.mrf.mxu0
      %v2033 = vadd.f32 %v1098, %v2032
      %v2034 = vpop.f32.mrf.mxu0
      %2035 = vmatprep.mubr.f32.mxu0 0.0
      %2036 = vmatmul.mubr.f32.gmra.mxu0 %v1829
      %v2037 = vpop.f32.mrf.mxu0
      %v2038 = vadd.f32 %v1098, %v2037
      %v2039 = vpop.f32.mrf.mxu0
      %2040 = vmatprep.mubr.f32.mxu0 0.0
      %2041 = vmatmul.mubr.f32.gmra.mxu0 %v1831
      %v2042 = vpop.f32.mrf.mxu0
      %v2043 = vadd.f32 %v1098, %v2042
      %v2044 = vpop.f32.mrf.mxu0
      %2045 = vmatprep.mubr.f32.mxu0 0.0
      %2046 = vmatmul.mubr.f32.gmra.mxu0 %v1833
      %v2047 = vpop.f32.mrf.mxu0
      %v2048 = vadd.f32 %v1098, %v2047
      %v2049 = vpop.f32.mrf.mxu0
      %2050 = vmatprep.mubr.f32.mxu0 0.0
      %2051 = vmatmul.mubr.f32.gmra.mxu0 %v1835
      %v2052 = vpop.f32.mrf.mxu0
      %v2053 = vadd.f32 %v1098, %v2052
      %v2054 = vpop.f32.mrf.mxu0
      %2055 = vmatprep.mubr.f32.mxu0 0.0
      %2056 = vmatmul.mubr.f32.gmra.mxu0 %v1837
      %v2057 = vpop.f32.mrf.mxu0
      %v2058 = vadd.f32 %v1098, %v2057
      %v2059 = vpop.f32.mrf.mxu0
      %2060 = vmatprep.mubr.f32.mxu0 0.0
      %2061 = vmatmul.mubr.f32.gmra.mxu0 %v1839
      %v2062 = vpop.f32.mrf.mxu0
      %v2063 = vadd.f32 %v1098, %v2062
      %v2064 = vpop.f32.mrf.mxu0
      %2065 = vmatprep.mubr.f32.mxu0 0.0
      %2066 = vmatmul.mubr.f32.gmra.mxu0 %v1841
      %v2067 = vpop.f32.mrf.mxu0
      %v2068 = vadd.f32 %v1098, %v2067
      %v2069 = vpop.f32.mrf.mxu0
      %2070 = vmatprep.mubr.f32.mxu0 0.0
      %2071 = vmatmul.mubr.f32.gmra.mxu0 %v1843
      %v2072 = vpop.f32.mrf.mxu0
      %v2073 = vadd.f32 %v1098, %v2072
      %v2074 = vpop.f32.mrf.mxu0
      %2075 = vmatprep.mubr.f32.mxu0 0.0
      %2076 = vmatmul.mubr.f32.gmra.mxu0 %v1845
      %v2077 = vpop.f32.mrf.mxu0
      %v2078 = vadd.f32 %v1098, %v2077
      %v2079 = vpop.f32.mrf.mxu0
      %2080 = vmatprep.mubr.f32.mxu0 0.0
      %2081 = vmatmul.mubr.f32.gmra.mxu0 %v1847
      %v2082 = vpop.f32.mrf.mxu0
      %v2083 = vadd.f32 %v1098, %v2082
      %v2084 = vpop.f32.mrf.mxu0
      %2085 = vmatprep.mubr.f32.mxu0 0.0
      %2086 = vmatmul.mubr.f32.gmra.mxu0 %v1849
      %v2087 = vpop.f32.mrf.mxu0
      %v2088 = vadd.f32 %v1098, %v2087
      %v2089 = vpop.f32.mrf.mxu0
      %2090 = vmatprep.mubr.f32.mxu0 0.0
      %2091 = vmatmul.mubr.f32.gmra.mxu0 %v1851
      %v2092 = vpop.f32.mrf.mxu0
      %v2093 = vadd.f32 %v1098, %v2092
      %v2094 = vpop.f32.mrf.mxu0
      %2095 = vmatprep.mubr.f32.mxu0 0.0
      %2096 = vmatmul.mubr.f32.gmra.mxu0 %v1853
      %v2097 = vpop.f32.mrf.mxu0
      %v2098 = vadd.f32 %v1098, %v2097
      %v2099 = vpop.f32.mrf.mxu0
      %2100 = vmatprep.mubr.f32.mxu0 0.0
      %2101 = vmatmul.mubr.f32.gmra.mxu0 %v1855
      %v2102 = vpop.f32.mrf.mxu0
      %v2103 = vadd.f32 %v1098, %v2102
      %v2104 = vpop.f32.mrf.mxu0
      %2105 = vmatprep.mubr.f32.mxu0 0.0
      %2106 = vmatmul.mubr.f32.gmra.mxu0 %v1857
      %v2107 = vpop.f32.mrf.mxu0
      %v2108 = vadd.f32 %v1098, %v2107
      %v2109 = vpop.f32.mrf.mxu0
      %2110 = vmatprep.mubr.f32.mxu0 0.0
      %2111 = vmatmul.mubr.f32.gmra.mxu0 %v1859
      %v2112 = vpop.f32.mrf.mxu0
      %v2113 = vadd.f32 %v1098, %v2112
      %v2114 = vpop.f32.mrf.mxu0
      %2115 = vmatprep.mubr.f32.mxu0 0.0
      %2116 = vmatmul.mubr.f32.gmra.mxu0 %v1861
      %v2117 = vpop.f32.mrf.mxu0
      %v2118 = vadd.f32 %v1098, %v2117
      %v2119 = vpop.f32.mrf.mxu0
      %2120 = vmatprep.mubr.f32.mxu0 0.0
      %2121 = vmatmul.mubr.f32.gmra.mxu0 %v1863
      %v2122 = vpop.f32.mrf.mxu0
      %v2123 = vadd.f32 %v1098, %v2122
      %v2124 = vpop.f32.mrf.mxu0
      %2125 = vmatprep.mubr.f32.mxu0 0.0
      %2126 = vmatmul.mubr.f32.gmra.mxu0 %v1865
      %v2127 = vpop.f32.mrf.mxu0
      %v2128 = vadd.f32 %v1098, %v2127
      %v2129 = vpop.f32.mrf.mxu0
      %2130 = vmatprep.mubr.f32.mxu0 0.0
      %2131 = vmatmul.mubr.f32.gmra.mxu0 %v1867
      %v2132 = vpop.f32.mrf.mxu0
      %v2133 = vadd.f32 %v1098, %v2132
      %v2134 = vpop.f32.mrf.mxu0
      %2135 = vmatprep.mubr.f32.mxu0 0.0
      %2136 = vmatmul.mubr.f32.gmra.mxu0 %v1869
      %v2137 = vpop.f32.mrf.mxu0
      %v2138 = vadd.f32 %v1098, %v2137
      %v2139 = vpop.f32.mrf.mxu0
      %2140 = vdwg.mxu0
      %v2141 = vmax.f32 %v1938, 0.0
      %v2142 = vmax.f32 %v1943, 0.0
      %v2143 = vmax.f32 %v1948, 0.0
      %v2144 = vmax.f32 %v1953, 0.0
      %v2145 = vmax.f32 %v1958, 0.0
      %v2146 = vmax.f32 %v1963, 0.0
      %v2147 = vmax.f32 %v1968, 0.0
      %v2148 = vmax.f32 %v1973, 0.0
      %v2149 = vmax.f32 %v1978, 0.0
      %v2150 = vmax.f32 %v1983, 0.0
      %v2151 = vmax.f32 %v1988, 0.0
      %v2152 = vmax.f32 %v1993, 0.0
      %v2153 = vmax.f32 %v1998, 0.0
      %v2154 = vmax.f32 %v2003, 0.0
      %v2155 = vmax.f32 %v2008, 0.0
      %v2156 = vmax.f32 %v2013, 0.0
      %v2157 = vmax.f32 %v2018, 0.0
      %v2158 = vmax.f32 %v2023, 0.0
      %v2159 = vmax.f32 %v2028, 0.0
      %v2160 = vmax.f32 %v2033, 0.0
      %v2161 = vmax.f32 %v2038, 0.0
      %v2162 = vmax.f32 %v2043, 0.0
      %v2163 = vmax.f32 %v2048, 0.0
      %v2164 = vmax.f32 %v2053, 0.0
      %v2165 = vmax.f32 %v2058, 0.0
      %v2166 = vmax.f32 %v2063, 0.0
      %v2167 = vmax.f32 %v2068, 0.0
      %v2168 = vmax.f32 %v2073, 0.0
      %v2169 = vmax.f32 %v2078, 0.0
      %v2170 = vmax.f32 %v2083, 0.0
      %v2171 = vmax.f32 %v2088, 0.0
      %v2172 = vmax.f32 %v2093, 0.0
      %v2173 = vmax.f32 %v2098, 0.0
      %v2174 = vmax.f32 %v2103, 0.0
      %v2175 = vmax.f32 %v2108, 0.0
      %v2176 = vmax.f32 %v2113, 0.0
      %v2177 = vmax.f32 %v2118, 0.0
      %v2178 = vmax.f32 %v2123, 0.0
      %v2179 = vmax.f32 %v2128, 0.0
      %v2180 = vmax.f32 %v2133, 0.0
      %v2181 = vmax.f32 %v2138, 0.0
      %v2223 = vcombine.high %v2141, %v2141
      %v2225 = vunpack.c.l.s4 1983009808
      %v2226 = vunpack.c.0.s8 %v2225
      %v2227 = vlaneseq
      %v2228 = vshrl.u32 %v2227, 7
      %v2229 = vsub.s32 %v2226, %v2228
      %v2230 = vrot.slane %v2141, %v2229
      %v2232 = vunpack.c.l.s4 1983009808
      %v2233 = vunpack.c.0.s8 %v2232
      %v2234 = vlaneseq
      %v2235 = vshrl.u32 %v2234, 7
      %v2236 = vsub.s32 %v2233, %v2235
      %v2237 = vrot.slane %v2223, %v2236
      %v2238 = vcombine.high %v2230, %v2230
      %v2239 = vcombine.high %v2237, %v2237
      %v2240 = vcombine.high %v2142, %v2142
      %v2242 = vunpack.c.l.s4 1983009808
      %v2243 = vunpack.c.0.s8 %v2242
      %v2244 = vlaneseq
      %v2245 = vshrl.u32 %v2244, 7
      %v2246 = vsub.s32 %v2243, %v2245
      %v2247 = vrot.slane %v2142, %v2246
      %v2249 = vunpack.c.l.s4 1983009808
      %v2250 = vunpack.c.0.s8 %v2249
      %v2251 = vlaneseq
      %v2252 = vshrl.u32 %v2251, 7
      %v2253 = vsub.s32 %v2250, %v2252
      %v2254 = vrot.slane %v2240, %v2253
      %v2255 = vcombine.high %v2247, %v2247
      %v2256 = vcombine.high %v2254, %v2254
      %v2257 = vcombine.high %v2143, %v2143
      %v2259 = vunpack.c.l.s4 1983009808
      %v2260 = vunpack.c.0.s8 %v2259
      %v2261 = vlaneseq
      %v2262 = vshrl.u32 %v2261, 7
      %v2263 = vsub.s32 %v2260, %v2262
      %v2264 = vrot.slane %v2143, %v2263
      %v2266 = vunpack.c.l.s4 1983009808
      %v2267 = vunpack.c.0.s8 %v2266
      %v2268 = vlaneseq
      %v2269 = vshrl.u32 %v2268, 7
      %v2270 = vsub.s32 %v2267, %v2269
      %v2271 = vrot.slane %v2257, %v2270
      %v2272 = vcombine.high %v2264, %v2264
      %v2273 = vcombine.high %v2271, %v2271
      %v2274 = vcombine.high %v2144, %v2144
      %v2276 = vunpack.c.l.s4 1983009808
      %v2277 = vunpack.c.0.s8 %v2276
      %v2278 = vlaneseq
      %v2279 = vshrl.u32 %v2278, 7
      %v2280 = vsub.s32 %v2277, %v2279
      %v2281 = vrot.slane %v2144, %v2280
      %v2283 = vunpack.c.l.s4 1983009808
      %v2284 = vunpack.c.0.s8 %v2283
      %v2285 = vlaneseq
      %v2286 = vshrl.u32 %v2285, 7
      %v2287 = vsub.s32 %v2284, %v2286
      %v2288 = vrot.slane %v2274, %v2287
      %v2289 = vcombine.high %v2281, %v2281
      %v2290 = vcombine.high %v2288, %v2288
      %v2291 = vcombine.high %v2145, %v2145
      %v2293 = vunpack.c.l.s4 1983009808
      %v2294 = vunpack.c.0.s8 %v2293
      %v2295 = vlaneseq
      %v2296 = vshrl.u32 %v2295, 7
      %v2297 = vsub.s32 %v2294, %v2296
      %v2298 = vrot.slane %v2145, %v2297
      %v2300 = vunpack.c.l.s4 1983009808
      %v2301 = vunpack.c.0.s8 %v2300
      %v2302 = vlaneseq
      %v2303 = vshrl.u32 %v2302, 7
      %v2304 = vsub.s32 %v2301, %v2303
      %v2305 = vrot.slane %v2291, %v2304
      %v2306 = vcombine.high %v2298, %v2298
      %v2307 = vcombine.high %v2305, %v2305
      %v2308 = vcombine.high %v2146, %v2146
      %v2310 = vunpack.c.l.s4 1983009808
      %v2311 = vunpack.c.0.s8 %v2310
      %v2312 = vlaneseq
      %v2313 = vshrl.u32 %v2312, 7
      %v2314 = vsub.s32 %v2311, %v2313
      %v2315 = vrot.slane %v2146, %v2314
      %v2317 = vunpack.c.l.s4 1983009808
      %v2318 = vunpack.c.0.s8 %v2317
      %v2319 = vlaneseq
      %v2320 = vshrl.u32 %v2319, 7
      %v2321 = vsub.s32 %v2318, %v2320
      %v2322 = vrot.slane %v2308, %v2321
      %v2323 = vcombine.high %v2315, %v2315
      %v2324 = vcombine.high %v2322, %v2322
      %v2325 = vcombine.high %v2147, %v2147
      %v2327 = vunpack.c.l.s4 1983009808
      %v2328 = vunpack.c.0.s8 %v2327
      %v2329 = vlaneseq
      %v2330 = vshrl.u32 %v2329, 7
      %v2331 = vsub.s32 %v2328, %v2330
      %v2332 = vrot.slane %v2147, %v2331
      %v2334 = vunpack.c.l.s4 1983009808
      %v2335 = vunpack.c.0.s8 %v2334
      %v2336 = vlaneseq
      %v2337 = vshrl.u32 %v2336, 7
      %v2338 = vsub.s32 %v2335, %v2337
      %v2339 = vrot.slane %v2325, %v2338
      %v2340 = vcombine.high %v2332, %v2332
      %v2341 = vcombine.high %v2339, %v2339
      %v2342 = vcombine.high %v2148, %v2148
      %v2344 = vunpack.c.l.s4 1983009808
      %v2345 = vunpack.c.0.s8 %v2344
      %v2346 = vlaneseq
      %v2347 = vshrl.u32 %v2346, 7
      %v2348 = vsub.s32 %v2345, %v2347
      %v2349 = vrot.slane %v2148, %v2348
      %v2351 = vunpack.c.l.s4 1983009808
      %v2352 = vunpack.c.0.s8 %v2351
      %v2353 = vlaneseq
      %v2354 = vshrl.u32 %v2353, 7
      %v2355 = vsub.s32 %v2352, %v2354
      %v2356 = vrot.slane %v2342, %v2355
      %v2357 = vcombine.high %v2349, %v2349
      %v2358 = vcombine.high %v2356, %v2356
      %v2359 = vcombine.high %v2149, %v2149
      %v2361 = vunpack.c.l.s4 1983009808
      %v2362 = vunpack.c.0.s8 %v2361
      %v2363 = vlaneseq
      %v2364 = vshrl.u32 %v2363, 7
      %v2365 = vsub.s32 %v2362, %v2364
      %v2366 = vrot.slane %v2149, %v2365
      %v2368 = vunpack.c.l.s4 1983009808
      %v2369 = vunpack.c.0.s8 %v2368
      %v2370 = vlaneseq
      %v2371 = vshrl.u32 %v2370, 7
      %v2372 = vsub.s32 %v2369, %v2371
      %v2373 = vrot.slane %v2359, %v2372
      %v2374 = vcombine.high %v2366, %v2366
      %v2375 = vcombine.high %v2373, %v2373
      %v2376 = vcombine.high %v2150, %v2150
      %v2378 = vunpack.c.l.s4 1983009808
      %v2379 = vunpack.c.0.s8 %v2378
      %v2380 = vlaneseq
      %v2381 = vshrl.u32 %v2380, 7
      %v2382 = vsub.s32 %v2379, %v2381
      %v2383 = vrot.slane %v2150, %v2382
      %v2385 = vunpack.c.l.s4 1983009808
      %v2386 = vunpack.c.0.s8 %v2385
      %v2387 = vlaneseq
      %v2388 = vshrl.u32 %v2387, 7
      %v2389 = vsub.s32 %v2386, %v2388
      %v2390 = vrot.slane %v2376, %v2389
      %v2391 = vcombine.high %v2383, %v2383
      %v2392 = vcombine.high %v2390, %v2390
      %v2393 = vcombine.high %v2151, %v2151
      %v2395 = vunpack.c.l.s4 1983009808
      %v2396 = vunpack.c.0.s8 %v2395
      %v2397 = vlaneseq
      %v2398 = vshrl.u32 %v2397, 7
      %v2399 = vsub.s32 %v2396, %v2398
      %v2400 = vrot.slane %v2151, %v2399
      %v2402 = vunpack.c.l.s4 1983009808
      %v2403 = vunpack.c.0.s8 %v2402
      %v2404 = vlaneseq
      %v2405 = vshrl.u32 %v2404, 7
      %v2406 = vsub.s32 %v2403, %v2405
      %v2407 = vrot.slane %v2393, %v2406
      %v2408 = vcombine.high %v2400, %v2400
      %v2409 = vcombine.high %v2407, %v2407
      %v2410 = vcombine.high %v2152, %v2152
      %v2412 = vunpack.c.l.s4 1983009808
      %v2413 = vunpack.c.0.s8 %v2412
      %v2414 = vlaneseq
      %v2415 = vshrl.u32 %v2414, 7
      %v2416 = vsub.s32 %v2413, %v2415
      %v2417 = vrot.slane %v2152, %v2416
      %v2419 = vunpack.c.l.s4 1983009808
      %v2420 = vunpack.c.0.s8 %v2419
      %v2421 = vlaneseq
      %v2422 = vshrl.u32 %v2421, 7
      %v2423 = vsub.s32 %v2420, %v2422
      %v2424 = vrot.slane %v2410, %v2423
      %v2425 = vcombine.high %v2417, %v2417
      %v2426 = vcombine.high %v2424, %v2424
      %v2427 = vcombine.high %v2153, %v2153
      %v2429 = vunpack.c.l.s4 1983009808
      %v2430 = vunpack.c.0.s8 %v2429
      %v2431 = vlaneseq
      %v2432 = vshrl.u32 %v2431, 7
      %v2433 = vsub.s32 %v2430, %v2432
      %v2434 = vrot.slane %v2153, %v2433
      %v2436 = vunpack.c.l.s4 1983009808
      %v2437 = vunpack.c.0.s8 %v2436
      %v2438 = vlaneseq
      %v2439 = vshrl.u32 %v2438, 7
      %v2440 = vsub.s32 %v2437, %v2439
      %v2441 = vrot.slane %v2427, %v2440
      %v2442 = vcombine.high %v2434, %v2434
      %v2443 = vcombine.high %v2441, %v2441
      %v2444 = vcombine.high %v2154, %v2154
      %v2446 = vunpack.c.l.s4 1983009808
      %v2447 = vunpack.c.0.s8 %v2446
      %v2448 = vlaneseq
      %v2449 = vshrl.u32 %v2448, 7
      %v2450 = vsub.s32 %v2447, %v2449
      %v2451 = vrot.slane %v2154, %v2450
      %v2453 = vunpack.c.l.s4 1983009808
      %v2454 = vunpack.c.0.s8 %v2453
      %v2455 = vlaneseq
      %v2456 = vshrl.u32 %v2455, 7
      %v2457 = vsub.s32 %v2454, %v2456
      %v2458 = vrot.slane %v2444, %v2457
      %v2459 = vcombine.high %v2451, %v2451
      %v2460 = vcombine.high %v2458, %v2458
      %v2461 = vcombine.high %v2155, %v2155
      %v2463 = vunpack.c.l.s4 1983009808
      %v2464 = vunpack.c.0.s8 %v2463
      %v2465 = vlaneseq
      %v2466 = vshrl.u32 %v2465, 7
      %v2467 = vsub.s32 %v2464, %v2466
      %v2468 = vrot.slane %v2155, %v2467
      %v2470 = vunpack.c.l.s4 1983009808
      %v2471 = vunpack.c.0.s8 %v2470
      %v2472 = vlaneseq
      %v2473 = vshrl.u32 %v2472, 7
      %v2474 = vsub.s32 %v2471, %v2473
      %v2475 = vrot.slane %v2461, %v2474
      %v2476 = vcombine.high %v2468, %v2468
      %v2477 = vcombine.high %v2475, %v2475
      %v2478 = vcombine.high %v2156, %v2156
      %v2480 = vunpack.c.l.s4 1983009808
      %v2481 = vunpack.c.0.s8 %v2480
      %v2482 = vlaneseq
      %v2483 = vshrl.u32 %v2482, 7
      %v2484 = vsub.s32 %v2481, %v2483
      %v2485 = vrot.slane %v2156, %v2484
      %v2487 = vunpack.c.l.s4 1983009808
      %v2488 = vunpack.c.0.s8 %v2487
      %v2489 = vlaneseq
      %v2490 = vshrl.u32 %v2489, 7
      %v2491 = vsub.s32 %v2488, %v2490
      %v2492 = vrot.slane %v2478, %v2491
      %v2493 = vcombine.high %v2485, %v2485
      %v2494 = vcombine.high %v2492, %v2492
      %v2495 = vcombine.high %v2157, %v2157
      %v2497 = vunpack.c.l.s4 1983009808
      %v2498 = vunpack.c.0.s8 %v2497
      %v2499 = vlaneseq
      %v2500 = vshrl.u32 %v2499, 7
      %v2501 = vsub.s32 %v2498, %v2500
      %v2502 = vrot.slane %v2157, %v2501
      %v2504 = vunpack.c.l.s4 1983009808
      %v2505 = vunpack.c.0.s8 %v2504
      %v2506 = vlaneseq
      %v2507 = vshrl.u32 %v2506, 7
      %v2508 = vsub.s32 %v2505, %v2507
      %v2509 = vrot.slane %v2495, %v2508
      %v2510 = vcombine.high %v2502, %v2502
      %v2511 = vcombine.high %v2509, %v2509
      %v2512 = vcombine.high %v2158, %v2158
      %v2514 = vunpack.c.l.s4 1983009808
      %v2515 = vunpack.c.0.s8 %v2514
      %v2516 = vlaneseq
      %v2517 = vshrl.u32 %v2516, 7
      %v2518 = vsub.s32 %v2515, %v2517
      %v2519 = vrot.slane %v2158, %v2518
      %v2521 = vunpack.c.l.s4 1983009808
      %v2522 = vunpack.c.0.s8 %v2521
      %v2523 = vlaneseq
      %v2524 = vshrl.u32 %v2523, 7
      %v2525 = vsub.s32 %v2522, %v2524
      %v2526 = vrot.slane %v2512, %v2525
      %v2527 = vcombine.high %v2519, %v2519
      %v2528 = vcombine.high %v2526, %v2526
      %v2529 = vcombine.high %v2159, %v2159
      %v2531 = vunpack.c.l.s4 1983009808
      %v2532 = vunpack.c.0.s8 %v2531
      %v2533 = vlaneseq
      %v2534 = vshrl.u32 %v2533, 7
      %v2535 = vsub.s32 %v2532, %v2534
      %v2536 = vrot.slane %v2159, %v2535
      %v2538 = vunpack.c.l.s4 1983009808
      %v2539 = vunpack.c.0.s8 %v2538
      %v2540 = vlaneseq
      %v2541 = vshrl.u32 %v2540, 7
      %v2542 = vsub.s32 %v2539, %v2541
      %v2543 = vrot.slane %v2529, %v2542
      %v2544 = vcombine.high %v2536, %v2536
      %v2545 = vcombine.high %v2543, %v2543
      %v2546 = vcombine.high %v2160, %v2160
      %v2548 = vunpack.c.l.s4 1983009808
      %v2549 = vunpack.c.0.s8 %v2548
      %v2550 = vlaneseq
      %v2551 = vshrl.u32 %v2550, 7
      %v2552 = vsub.s32 %v2549, %v2551
      %v2553 = vrot.slane %v2160, %v2552
      %v2555 = vunpack.c.l.s4 1983009808
      %v2556 = vunpack.c.0.s8 %v2555
      %v2557 = vlaneseq
      %v2558 = vshrl.u32 %v2557, 7
      %v2559 = vsub.s32 %v2556, %v2558
      %v2560 = vrot.slane %v2546, %v2559
      %v2561 = vcombine.high %v2553, %v2553
      %v2562 = vcombine.high %v2560, %v2560
      %v2563 = vcombine.high %v2161, %v2161
      %v2565 = vunpack.c.l.s4 1983009808
      %v2566 = vunpack.c.0.s8 %v2565
      %v2567 = vlaneseq
      %v2568 = vshrl.u32 %v2567, 7
      %v2569 = vsub.s32 %v2566, %v2568
      %v2570 = vrot.slane %v2161, %v2569
      %v2572 = vunpack.c.l.s4 1983009808
      %v2573 = vunpack.c.0.s8 %v2572
      %v2574 = vlaneseq
      %v2575 = vshrl.u32 %v2574, 7
      %v2576 = vsub.s32 %v2573, %v2575
      %v2577 = vrot.slane %v2563, %v2576
      %v2578 = vcombine.high %v2570, %v2570
      %v2579 = vcombine.high %v2577, %v2577
      %v2580 = vcombine.high %v2162, %v2162
      %v2582 = vunpack.c.l.s4 1983009808
      %v2583 = vunpack.c.0.s8 %v2582
      %v2584 = vlaneseq
      %v2585 = vshrl.u32 %v2584, 7
      %v2586 = vsub.s32 %v2583, %v2585
      %v2587 = vrot.slane %v2162, %v2586
      %v2589 = vunpack.c.l.s4 1983009808
      %v2590 = vunpack.c.0.s8 %v2589
      %v2591 = vlaneseq
      %v2592 = vshrl.u32 %v2591, 7
      %v2593 = vsub.s32 %v2590, %v2592
      %v2594 = vrot.slane %v2580, %v2593
      %v2595 = vcombine.high %v2587, %v2587
      %v2596 = vcombine.high %v2594, %v2594
      %v2597 = vcombine.high %v2163, %v2163
      %v2599 = vunpack.c.l.s4 1983009808
      %v2600 = vunpack.c.0.s8 %v2599
      %v2601 = vlaneseq
      %v2602 = vshrl.u32 %v2601, 7
      %v2603 = vsub.s32 %v2600, %v2602
      %v2604 = vrot.slane %v2163, %v2603
      %v2606 = vunpack.c.l.s4 1983009808
      %v2607 = vunpack.c.0.s8 %v2606
      %v2608 = vlaneseq
      %v2609 = vshrl.u32 %v2608, 7
      %v2610 = vsub.s32 %v2607, %v2609
      %v2611 = vrot.slane %v2597, %v2610
      %v2612 = vcombine.high %v2604, %v2604
      %v2613 = vcombine.high %v2611, %v2611
      %v2614 = vcombine.high %v2164, %v2164
      %v2616 = vunpack.c.l.s4 1983009808
      %v2617 = vunpack.c.0.s8 %v2616
      %v2618 = vlaneseq
      %v2619 = vshrl.u32 %v2618, 7
      %v2620 = vsub.s32 %v2617, %v2619
      %v2621 = vrot.slane %v2164, %v2620
      %v2623 = vunpack.c.l.s4 1983009808
      %v2624 = vunpack.c.0.s8 %v2623
      %v2625 = vlaneseq
      %v2626 = vshrl.u32 %v2625, 7
      %v2627 = vsub.s32 %v2624, %v2626
      %v2628 = vrot.slane %v2614, %v2627
      %v2629 = vcombine.high %v2621, %v2621
      %v2630 = vcombine.high %v2628, %v2628
      %v2631 = vcombine.high %v2165, %v2165
      %v2633 = vunpack.c.l.s4 1983009808
      %v2634 = vunpack.c.0.s8 %v2633
      %v2635 = vlaneseq
      %v2636 = vshrl.u32 %v2635, 7
      %v2637 = vsub.s32 %v2634, %v2636
      %v2638 = vrot.slane %v2165, %v2637
      %v2640 = vunpack.c.l.s4 1983009808
      %v2641 = vunpack.c.0.s8 %v2640
      %v2642 = vlaneseq
      %v2643 = vshrl.u32 %v2642, 7
      %v2644 = vsub.s32 %v2641, %v2643
      %v2645 = vrot.slane %v2631, %v2644
      %v2646 = vcombine.high %v2638, %v2638
      %v2647 = vcombine.high %v2645, %v2645
      %v2648 = vcombine.high %v2166, %v2166
      %v2650 = vunpack.c.l.s4 1983009808
      %v2651 = vunpack.c.0.s8 %v2650
      %v2652 = vlaneseq
      %v2653 = vshrl.u32 %v2652, 7
      %v2654 = vsub.s32 %v2651, %v2653
      %v2655 = vrot.slane %v2166, %v2654
      %v2657 = vunpack.c.l.s4 1983009808
      %v2658 = vunpack.c.0.s8 %v2657
      %v2659 = vlaneseq
      %v2660 = vshrl.u32 %v2659, 7
      %v2661 = vsub.s32 %v2658, %v2660
      %v2662 = vrot.slane %v2648, %v2661
      %v2663 = vcombine.high %v2655, %v2655
      %v2664 = vcombine.high %v2662, %v2662
      %v2665 = vcombine.high %v2167, %v2167
      %v2667 = vunpack.c.l.s4 1983009808
      %v2668 = vunpack.c.0.s8 %v2667
      %v2669 = vlaneseq
      %v2670 = vshrl.u32 %v2669, 7
      %v2671 = vsub.s32 %v2668, %v2670
      %v2672 = vrot.slane %v2167, %v2671
      %v2674 = vunpack.c.l.s4 1983009808
      %v2675 = vunpack.c.0.s8 %v2674
      %v2676 = vlaneseq
      %v2677 = vshrl.u32 %v2676, 7
      %v2678 = vsub.s32 %v2675, %v2677
      %v2679 = vrot.slane %v2665, %v2678
      %v2680 = vcombine.high %v2672, %v2672
      %v2681 = vcombine.high %v2679, %v2679
      %v2682 = vcombine.high %v2168, %v2168
      %v2684 = vunpack.c.l.s4 1983009808
      %v2685 = vunpack.c.0.s8 %v2684
      %v2686 = vlaneseq
      %v2687 = vshrl.u32 %v2686, 7
      %v2688 = vsub.s32 %v2685, %v2687
      %v2689 = vrot.slane %v2168, %v2688
      %v2691 = vunpack.c.l.s4 1983009808
      %v2692 = vunpack.c.0.s8 %v2691
      %v2693 = vlaneseq
      %v2694 = vshrl.u32 %v2693, 7
      %v2695 = vsub.s32 %v2692, %v2694
      %v2696 = vrot.slane %v2682, %v2695
      %v2697 = vcombine.high %v2689, %v2689
      %v2698 = vcombine.high %v2696, %v2696
      %v2699 = vcombine.high %v2169, %v2169
      %v2701 = vunpack.c.l.s4 1983009808
      %v2702 = vunpack.c.0.s8 %v2701
      %v2703 = vlaneseq
      %v2704 = vshrl.u32 %v2703, 7
      %v2705 = vsub.s32 %v2702, %v2704
      %v2706 = vrot.slane %v2169, %v2705
      %v2708 = vunpack.c.l.s4 1983009808
      %v2709 = vunpack.c.0.s8 %v2708
      %v2710 = vlaneseq
      %v2711 = vshrl.u32 %v2710, 7
      %v2712 = vsub.s32 %v2709, %v2711
      %v2713 = vrot.slane %v2699, %v2712
      %v2714 = vcombine.high %v2706, %v2706
      %v2715 = vcombine.high %v2713, %v2713
      %v2716 = vcombine.high %v2170, %v2170
      %v2718 = vunpack.c.l.s4 1983009808
      %v2719 = vunpack.c.0.s8 %v2718
      %v2720 = vlaneseq
      %v2721 = vshrl.u32 %v2720, 7
      %v2722 = vsub.s32 %v2719, %v2721
      %v2723 = vrot.slane %v2170, %v2722
      %v2725 = vunpack.c.l.s4 1983009808
      %v2726 = vunpack.c.0.s8 %v2725
      %v2727 = vlaneseq
      %v2728 = vshrl.u32 %v2727, 7
      %v2729 = vsub.s32 %v2726, %v2728
      %v2730 = vrot.slane %v2716, %v2729
      %v2731 = vcombine.high %v2723, %v2723
      %v2732 = vcombine.high %v2730, %v2730
      %v2733 = vcombine.high %v2171, %v2171
      %v2735 = vunpack.c.l.s4 1983009808
      %v2736 = vunpack.c.0.s8 %v2735
      %v2737 = vlaneseq
      %v2738 = vshrl.u32 %v2737, 7
      %v2739 = vsub.s32 %v2736, %v2738
      %v2740 = vrot.slane %v2171, %v2739
      %v2742 = vunpack.c.l.s4 1983009808
      %v2743 = vunpack.c.0.s8 %v2742
      %v2744 = vlaneseq
      %v2745 = vshrl.u32 %v2744, 7
      %v2746 = vsub.s32 %v2743, %v2745
      %v2747 = vrot.slane %v2733, %v2746
      %v2748 = vcombine.high %v2740, %v2740
      %v2749 = vcombine.high %v2747, %v2747
      %v2750 = vcombine.high %v2172, %v2172
      %v2752 = vunpack.c.l.s4 1983009808
      %v2753 = vunpack.c.0.s8 %v2752
      %v2754 = vlaneseq
      %v2755 = vshrl.u32 %v2754, 7
      %v2756 = vsub.s32 %v2753, %v2755
      %v2757 = vrot.slane %v2172, %v2756
      %v2759 = vunpack.c.l.s4 1983009808
      %v2760 = vunpack.c.0.s8 %v2759
      %v2761 = vlaneseq
      %v2762 = vshrl.u32 %v2761, 7
      %v2763 = vsub.s32 %v2760, %v2762
      %v2764 = vrot.slane %v2750, %v2763
      %v2765 = vcombine.high %v2757, %v2757
      %v2766 = vcombine.high %v2764, %v2764
      %v2767 = vcombine.high %v2173, %v2173
      %v2769 = vunpack.c.l.s4 1983009808
      %v2770 = vunpack.c.0.s8 %v2769
      %v2771 = vlaneseq
      %v2772 = vshrl.u32 %v2771, 7
      %v2773 = vsub.s32 %v2770, %v2772
      %v2774 = vrot.slane %v2173, %v2773
      %v2776 = vunpack.c.l.s4 1983009808
      %v2777 = vunpack.c.0.s8 %v2776
      %v2778 = vlaneseq
      %v2779 = vshrl.u32 %v2778, 7
      %v2780 = vsub.s32 %v2777, %v2779
      %v2781 = vrot.slane %v2767, %v2780
      %v2782 = vcombine.high %v2774, %v2774
      %v2783 = vcombine.high %v2781, %v2781
      %v2784 = vcombine.high %v2174, %v2174
      %v2786 = vunpack.c.l.s4 1983009808
      %v2787 = vunpack.c.0.s8 %v2786
      %v2788 = vlaneseq
      %v2789 = vshrl.u32 %v2788, 7
      %v2790 = vsub.s32 %v2787, %v2789
      %v2791 = vrot.slane %v2174, %v2790
      %v2793 = vunpack.c.l.s4 1983009808
      %v2794 = vunpack.c.0.s8 %v2793
      %v2795 = vlaneseq
      %v2796 = vshrl.u32 %v2795, 7
      %v2797 = vsub.s32 %v2794, %v2796
      %v2798 = vrot.slane %v2784, %v2797
      %v2799 = vcombine.high %v2791, %v2791
      %v2800 = vcombine.high %v2798, %v2798
      %v2801 = vcombine.high %v2175, %v2175
      %v2803 = vunpack.c.l.s4 1983009808
      %v2804 = vunpack.c.0.s8 %v2803
      %v2805 = vlaneseq
      %v2806 = vshrl.u32 %v2805, 7
      %v2807 = vsub.s32 %v2804, %v2806
      %v2808 = vrot.slane %v2175, %v2807
      %v2810 = vunpack.c.l.s4 1983009808
      %v2811 = vunpack.c.0.s8 %v2810
      %v2812 = vlaneseq
      %v2813 = vshrl.u32 %v2812, 7
      %v2814 = vsub.s32 %v2811, %v2813
      %v2815 = vrot.slane %v2801, %v2814
      %v2816 = vcombine.high %v2808, %v2808
      %v2817 = vcombine.high %v2815, %v2815
      %v2818 = vcombine.high %v2176, %v2176
      %v2820 = vunpack.c.l.s4 1983009808
      %v2821 = vunpack.c.0.s8 %v2820
      %v2822 = vlaneseq
      %v2823 = vshrl.u32 %v2822, 7
      %v2824 = vsub.s32 %v2821, %v2823
      %v2825 = vrot.slane %v2176, %v2824
      %v2827 = vunpack.c.l.s4 1983009808
      %v2828 = vunpack.c.0.s8 %v2827
      %v2829 = vlaneseq
      %v2830 = vshrl.u32 %v2829, 7
      %v2831 = vsub.s32 %v2828, %v2830
      %v2832 = vrot.slane %v2818, %v2831
      %v2833 = vcombine.high %v2825, %v2825
      %v2834 = vcombine.high %v2832, %v2832
      %v2835 = vcombine.high %v2177, %v2177
      %v2837 = vunpack.c.l.s4 1983009808
      %v2838 = vunpack.c.0.s8 %v2837
      %v2839 = vlaneseq
      %v2840 = vshrl.u32 %v2839, 7
      %v2841 = vsub.s32 %v2838, %v2840
      %v2842 = vrot.slane %v2177, %v2841
      %v2844 = vunpack.c.l.s4 1983009808
      %v2845 = vunpack.c.0.s8 %v2844
      %v2846 = vlaneseq
      %v2847 = vshrl.u32 %v2846, 7
      %v2848 = vsub.s32 %v2845, %v2847
      %v2849 = vrot.slane %v2835, %v2848
      %v2850 = vcombine.high %v2842, %v2842
      %v2851 = vcombine.high %v2849, %v2849
      %v2852 = vcombine.high %v2178, %v2178
      %v2854 = vunpack.c.l.s4 1983009808
      %v2855 = vunpack.c.0.s8 %v2854
      %v2856 = vlaneseq
      %v2857 = vshrl.u32 %v2856, 7
      %v2858 = vsub.s32 %v2855, %v2857
      %v2859 = vrot.slane %v2178, %v2858
      %v2861 = vunpack.c.l.s4 1983009808
      %v2862 = vunpack.c.0.s8 %v2861
      %v2863 = vlaneseq
      %v2864 = vshrl.u32 %v2863, 7
      %v2865 = vsub.s32 %v2862, %v2864
      %v2866 = vrot.slane %v2852, %v2865
      %v2867 = vcombine.high %v2859, %v2859
      %v2868 = vcombine.high %v2866, %v2866
      %v2869 = vcombine.high %v2179, %v2179
      %v2871 = vunpack.c.l.s4 1983009808
      %v2872 = vunpack.c.0.s8 %v2871
      %v2873 = vlaneseq
      %v2874 = vshrl.u32 %v2873, 7
      %v2875 = vsub.s32 %v2872, %v2874
      %v2876 = vrot.slane %v2179, %v2875
      %v2878 = vunpack.c.l.s4 1983009808
      %v2879 = vunpack.c.0.s8 %v2878
      %v2880 = vlaneseq
      %v2881 = vshrl.u32 %v2880, 7
      %v2882 = vsub.s32 %v2879, %v2881
      %v2883 = vrot.slane %v2869, %v2882
      %v2884 = vcombine.high %v2876, %v2876
      %v2885 = vcombine.high %v2883, %v2883
      %v2886 = vcombine.high %v2180, %v2180
      %v2888 = vunpack.c.l.s4 1983009808
      %v2889 = vunpack.c.0.s8 %v2888
      %v2890 = vlaneseq
      %v2891 = vshrl.u32 %v2890, 7
      %v2892 = vsub.s32 %v2889, %v2891
      %v2893 = vrot.slane %v2180, %v2892
      %v2895 = vunpack.c.l.s4 1983009808
      %v2896 = vunpack.c.0.s8 %v2895
      %v2897 = vlaneseq
      %v2898 = vshrl.u32 %v2897, 7
      %v2899 = vsub.s32 %v2896, %v2898
      %v2900 = vrot.slane %v2886, %v2899
      %v2901 = vcombine.high %v2893, %v2893
      %v2902 = vcombine.high %v2900, %v2900
      %v2904 = vunpack.c.l.s4 1983009808
      %v2905 = vunpack.c.0.s8 %v2904
      %v2906 = vlaneseq
      %v2907 = vshrl.u32 %v2906, 7
      %v2908 = vsub.s32 %v2905, %v2907
      %v2909 = vrot.slane %v2181, %v2908
      %v2910 = vcombine.high %v2909, %v2909
      %v2911 = vstv %s243
      %v2912 = vadd.s32 %v2911, 1
      %v2913 = vadd.s32 %v2911, 2
      %v2914 = vadd.s32 %v2911, 3
      %v2915 = vadd.s32 %v2911, 4
      %v2916 = vadd.s32 %v2911, 5
      %v2917 = vadd.s32 %v2911, 6
      %v2918 = vadd.s32 %v2911, 7
      %v2919 = vadd.s32 %v2911, 8
      %v2920 = vadd.s32 %v2911, 9
      %v2921 = vadd.s32 %v2911, 10
      %v2922 = vadd.s32 %v2911, 11
      %v2923 = vadd.s32 %v2911, 12
      %v2924 = vadd.s32 %v2911, 13
      %v2925 = vadd.s32 %v2911, 14
      %v2926 = vadd.s32 %v2911, 15
      %v2927 = vadd.s32 %v2911, 16
      %v2928 = vadd.s32 %v2911, 17
      %v2929 = vlaneseq
      %v2930 = vshrl.u32 %v2929, 7
      %v2931 = vadd.s32 %v2930, 8
      %v2932 = vadd.s32 %v2930, 16
      %vm2933 = vcmp.gt.s32.totalorder %v2911, 0
      %vm2934 = vcmp.gt.s32.totalorder %v2912, 0
      %vm2935 = vcmp.gt.s32.totalorder %v2913, 0
      %vm2936 = vcmp.gt.s32.totalorder %v2914, 0
      %vm2937 = vcmp.gt.s32.totalorder %v2915, 0
      %vm2938 = vcmp.gt.s32.totalorder %v2916, 0
      %vm2939 = vcmp.gt.s32.totalorder %v2917, 0
      %vm2940 = vcmp.gt.s32.totalorder %v2918, 0
      %vm2941 = vcmp.gt.s32.totalorder %v2919, 0
      %vm2942 = vcmp.gt.s32.totalorder %v2920, 0
      %vm2943 = vcmp.gt.s32.totalorder %v2921, 0
      %vm2944 = vcmp.gt.s32.totalorder %v2922, 0
      %vm2945 = vcmp.gt.s32.totalorder %v2923, 0
      %vm2946 = vcmp.gt.s32.totalorder %v2924, 0
      %vm2947 = vcmp.gt.s32.totalorder %v2925, 0
      %vm2948 = vcmp.gt.s32.totalorder %v2926, 0
      %vm2949 = vcmp.gt.s32.totalorder %v2927, 0
      %vm2950 = vcmp.gt.s32.totalorder %v2928, 0
      %vm2951 = vcmp.lt.s32.totalorder %v2911, 17
      %vm2952 = vcmp.lt.s32.totalorder %v2912, 17
      %vm2953 = vcmp.lt.s32.totalorder %v2913, 17
      %vm2954 = vcmp.lt.s32.totalorder %v2914, 17
      %vm2955 = vcmp.lt.s32.totalorder %v2915, 17
      %vm2956 = vcmp.lt.s32.totalorder %v2916, 17
      %vm2957 = vcmp.lt.s32.totalorder %v2917, 17
      %vm2958 = vcmp.lt.s32.totalorder %v2918, 17
      %vm2959 = vcmp.lt.s32.totalorder %v2919, 17
      %vm2960 = vcmp.lt.s32.totalorder %v2920, 17
      %vm2961 = vcmp.lt.s32.totalorder %v2921, 17
      %vm2962 = vcmp.lt.s32.totalorder %v2922, 17
      %vm2963 = vcmp.lt.s32.totalorder %v2923, 17
      %vm2964 = vcmp.lt.s32.totalorder %v2924, 17
      %vm2965 = vcmp.lt.s32.totalorder %v2925, 17
      %vm2966 = vcmp.lt.s32.totalorder %v2926, 17
      %vm2967 = vcmp.lt.s32.totalorder %v2927, 17
      %vm2968 = vcmp.lt.s32.totalorder %v2928, 17
      %vm2969 = vmand %vm2933, %vm2951
      %vm2970 = vmand %vm2934, %vm2952
      %vm2971 = vmand %vm2935, %vm2953
      %vm2972 = vmand %vm2936, %vm2954
      %vm2973 = vmand %vm2937, %vm2955
      %vm2974 = vmand %vm2938, %vm2956
      %vm2975 = vmand %vm2939, %vm2957
      %vm2976 = vmand %vm2940, %vm2958
      %vm2977 = vmand %vm2941, %vm2959
      %vm2978 = vmand %vm2942, %vm2960
      %vm2979 = vmand %vm2943, %vm2961
      %vm2980 = vmand %vm2944, %vm2962
      %vm2981 = vmand %vm2945, %vm2963
      %vm2982 = vmand %vm2946, %vm2964
      %vm2983 = vmand %vm2947, %vm2965
      %vm2984 = vmand %vm2948, %vm2966
      %vm2985 = vmand %vm2949, %vm2967
      %vm2986 = vmand %vm2950, %vm2968
      %vm2987 = vcmp.gt.s32.totalorder %v2930, 0
      %vm2988 = vcmp.gt.s32.totalorder %v2931, 0
      %vm2989 = vcmp.gt.s32.totalorder %v2932, 0
      %vm2990 = vmand %vm2969, %vm2987
      %vm2991 = vmand %vm2969, %vm2988
      %vm2992 = vmand %vm2969, %vm2989
      %vm2993 = vmand %vm2970, %vm2987
      %vm2994 = vmand %vm2970, %vm2988
      %vm2995 = vmand %vm2970, %vm2989
      %vm2996 = vmand %vm2971, %vm2987
      %vm2997 = vmand %vm2971, %vm2988
      %vm2998 = vmand %vm2971, %vm2989
      %vm2999 = vmand %vm2972, %vm2987
      %vm3000 = vmand %vm2972, %vm2988
      %vm3001 = vmand %vm2972, %vm2989
      %vm3002 = vmand %vm2973, %vm2987
      %vm3003 = vmand %vm2973, %vm2988
      %vm3004 = vmand %vm2973, %vm2989
      %vm3005 = vmand %vm2974, %vm2987
      %vm3006 = vmand %vm2974, %vm2988
      %vm3007 = vmand %vm2974, %vm2989
      %vm3008 = vmand %vm2975, %vm2987
      %vm3009 = vmand %vm2975, %vm2988
      %vm3010 = vmand %vm2975, %vm2989
      %vm3011 = vmand %vm2976, %vm2987
      %vm3012 = vmand %vm2976, %vm2988
      %vm3013 = vmand %vm2976, %vm2989
      %vm3014 = vmand %vm2977, %vm2987
      %vm3015 = vmand %vm2977, %vm2988
      %vm3016 = vmand %vm2977, %vm2989
      %vm3017 = vmand %vm2978, %vm2987
      %vm3018 = vmand %vm2978, %vm2988
      %vm3019 = vmand %vm2978, %vm2989
      %vm3020 = vmand %vm2979, %vm2987
      %vm3021 = vmand %vm2979, %vm2988
      %vm3022 = vmand %vm2979, %vm2989
      %vm3023 = vmand %vm2980, %vm2987
      %vm3024 = vmand %vm2980, %vm2988
      %vm3025 = vmand %vm2980, %vm2989
      %vm3026 = vmand %vm2981, %vm2987
      %vm3027 = vmand %vm2981, %vm2988
      %vm3028 = vmand %vm2981, %vm2989
      %vm3029 = vmand %vm2982, %vm2987
      %vm3030 = vmand %vm2982, %vm2988
      %vm3031 = vmand %vm2982, %vm2989
      %vm3032 = vmand %vm2983, %vm2987
      %vm3033 = vmand %vm2983, %vm2988
      %vm3034 = vmand %vm2983, %vm2989
      %vm3035 = vmand %vm2984, %vm2987
      %vm3036 = vmand %vm2984, %vm2988
      %vm3037 = vmand %vm2984, %vm2989
      %vm3038 = vmand %vm2985, %vm2987
      %vm3039 = vmand %vm2985, %vm2988
      %vm3040 = vmand %vm2985, %vm2989
      %vm3041 = vmand %vm2986, %vm2987
      %vm3042 = vmand %vm2986, %vm2988
      %vm3043 = vmand %vm2986, %vm2989
      %vm3044 = vcmp.lt.s32.totalorder %v2930, 17
      %vm3045 = vcmp.lt.s32.totalorder %v2931, 17
      %vm3046 = vcmp.lt.s32.totalorder %v2932, 17
      %vm3047 = vmand %vm2990, %vm3044
      %vm3048 = vmand %vm2991, %vm3045
      %vm3049 = vmand %vm2992, %vm3046
      %vm3050 = vmand %vm2993, %vm3044
      %vm3051 = vmand %vm2994, %vm3045
      %vm3052 = vmand %vm2995, %vm3046
      %vm3053 = vmand %vm2996, %vm3044
      %vm3054 = vmand %vm2997, %vm3045
      %vm3055 = vmand %vm2998, %vm3046
      %vm3056 = vmand %vm2999, %vm3044
      %vm3057 = vmand %vm3000, %vm3045
      %vm3058 = vmand %vm3001, %vm3046
      %vm3059 = vmand %vm3002, %vm3044
      %vm3060 = vmand %vm3003, %vm3045
      %vm3061 = vmand %vm3004, %vm3046
      %vm3062 = vmand %vm3005, %vm3044
      %vm3063 = vmand %vm3006, %vm3045
      %vm3064 = vmand %vm3007, %vm3046
      %vm3065 = vmand %vm3008, %vm3044
      %vm3066 = vmand %vm3009, %vm3045
      %vm3067 = vmand %vm3010, %vm3046
      %vm3068 = vmand %vm3011, %vm3044
      %vm3069 = vmand %vm3012, %vm3045
      %vm3070 = vmand %vm3013, %vm3046
      %vm3071 = vmand %vm3014, %vm3044
      %vm3072 = vmand %vm3015, %vm3045
      %vm3073 = vmand %vm3016, %vm3046
      %vm3074 = vmand %vm3017, %vm3044
      %vm3075 = vmand %vm3018, %vm3045
      %vm3076 = vmand %vm3019, %vm3046
      %vm3077 = vmand %vm3020, %vm3044
      %vm3078 = vmand %vm3021, %vm3045
      %vm3079 = vmand %vm3022, %vm3046
      %vm3080 = vmand %vm3023, %vm3044
      %vm3081 = vmand %vm3024, %vm3045
      %vm3082 = vmand %vm3025, %vm3046
      %vm3083 = vmand %vm3026, %vm3044
      %vm3084 = vmand %vm3027, %vm3045
      %vm3085 = vmand %vm3028, %vm3046
      %vm3086 = vmand %vm3029, %vm3044
      %vm3087 = vmand %vm3030, %vm3045
      %vm3088 = vmand %vm3031, %vm3046
      %vm3089 = vmand %vm3032, %vm3044
      %vm3090 = vmand %vm3033, %vm3045
      %vm3091 = vmand %vm3034, %vm3046
      %vm3092 = vmand %vm3035, %vm3044
      %vm3093 = vmand %vm3036, %vm3045
      %vm3094 = vmand %vm3037, %vm3046
      %vm3095 = vmand %vm3038, %vm3044
      %vm3096 = vmand %vm3039, %vm3045
      %vm3097 = vmand %vm3040, %vm3046
      %vm3098 = vmand %vm3041, %vm3044
      %vm3099 = vmand %vm3042, %vm3045
      %vm3100 = vmand %vm3043, %vm3046
      %v3101 = vsel %vm3047, 1, 0
      %v3102 = vsel %vm3048, 1, 0
      %v3103 = vsel %vm3049, 1, 0
      %v3104 = vsel %vm3050, 1, 0
      %v3105 = vsel %vm3051, 1, 0
      %v3106 = vsel %vm3052, 1, 0
      %v3107 = vsel %vm3053, 1, 0
      %v3108 = vsel %vm3054, 1, 0
      %v3109 = vsel %vm3055, 1, 0
      %v3110 = vsel %vm3056, 1, 0
      %v3111 = vsel %vm3057, 1, 0
      %v3112 = vsel %vm3058, 1, 0
      %v3113 = vsel %vm3059, 1, 0
      %v3114 = vsel %vm3060, 1, 0
      %v3115 = vsel %vm3061, 1, 0
      %v3116 = vsel %vm3062, 1, 0
      %v3117 = vsel %vm3063, 1, 0
      %v3118 = vsel %vm3064, 1, 0
      %v3119 = vsel %vm3065, 1, 0
      %v3120 = vsel %vm3066, 1, 0
      %v3121 = vsel %vm3067, 1, 0
      %v3122 = vsel %vm3068, 1, 0
      %v3123 = vsel %vm3069, 1, 0
      %v3124 = vsel %vm3070, 1, 0
      %v3125 = vsel %vm3071, 1, 0
      %v3126 = vsel %vm3072, 1, 0
      %v3127 = vsel %vm3073, 1, 0
      %v3128 = vsel %vm3074, 1, 0
      %v3129 = vsel %vm3075, 1, 0
      %v3130 = vsel %vm3076, 1, 0
      %v3131 = vsel %vm3077, 1, 0
      %v3132 = vsel %vm3078, 1, 0
      %v3133 = vsel %vm3079, 1, 0
      %v3134 = vsel %vm3080, 1, 0
      %v3135 = vsel %vm3081, 1, 0
      %v3136 = vsel %vm3082, 1, 0
      %v3137 = vsel %vm3083, 1, 0
      %v3138 = vsel %vm3084, 1, 0
      %v3139 = vsel %vm3085, 1, 0
      %v3140 = vsel %vm3086, 1, 0
      %v3141 = vsel %vm3087, 1, 0
      %v3142 = vsel %vm3088, 1, 0
      %v3143 = vsel %vm3089, 1, 0
      %v3144 = vsel %vm3090, 1, 0
      %v3145 = vsel %vm3091, 1, 0
      %v3146 = vsel %vm3092, 1, 0
      %v3147 = vsel %vm3093, 1, 0
      %v3148 = vsel %vm3094, 1, 0
      %v3149 = vsel %vm3095, 1, 0
      %v3150 = vsel %vm3096, 1, 0
      %v3151 = vsel %vm3097, 1, 0
      %v3152 = vsel %vm3098, 1, 0
      %v3153 = vsel %vm3099, 1, 0
      %v3154 = vsel %vm3100, 1, 0
      %vm3155 = vcmp.eq.s32.totalorder %v3101, 1
      %vm3156 = vcmp.eq.s32.totalorder %v3102, 1
      %vm3157 = vcmp.eq.s32.totalorder %v3103, 1
      %vm3158 = vcmp.eq.s32.totalorder %v3104, 1
      %vm3159 = vcmp.eq.s32.totalorder %v3105, 1
      %vm3160 = vcmp.eq.s32.totalorder %v3106, 1
      %vm3161 = vcmp.eq.s32.totalorder %v3107, 1
      %vm3162 = vcmp.eq.s32.totalorder %v3108, 1
      %vm3163 = vcmp.eq.s32.totalorder %v3109, 1
      %vm3164 = vcmp.eq.s32.totalorder %v3110, 1
      %vm3165 = vcmp.eq.s32.totalorder %v3111, 1
      %vm3166 = vcmp.eq.s32.totalorder %v3112, 1
      %vm3167 = vcmp.eq.s32.totalorder %v3113, 1
      %vm3168 = vcmp.eq.s32.totalorder %v3114, 1
      %vm3169 = vcmp.eq.s32.totalorder %v3115, 1
      %vm3170 = vcmp.eq.s32.totalorder %v3116, 1
      %vm3171 = vcmp.eq.s32.totalorder %v3117, 1
      %vm3172 = vcmp.eq.s32.totalorder %v3118, 1
      %vm3173 = vcmp.eq.s32.totalorder %v3119, 1
      %vm3174 = vcmp.eq.s32.totalorder %v3120, 1
      %vm3175 = vcmp.eq.s32.totalorder %v3121, 1
      %vm3176 = vcmp.eq.s32.totalorder %v3122, 1
      %vm3177 = vcmp.eq.s32.totalorder %v3123, 1
      %vm3178 = vcmp.eq.s32.totalorder %v3124, 1
      %vm3179 = vcmp.eq.s32.totalorder %v3125, 1
      %vm3180 = vcmp.eq.s32.totalorder %v3126, 1
      %vm3181 = vcmp.eq.s32.totalorder %v3127, 1
      %vm3182 = vcmp.eq.s32.totalorder %v3128, 1
      %vm3183 = vcmp.eq.s32.totalorder %v3129, 1
      %vm3184 = vcmp.eq.s32.totalorder %v3130, 1
      %vm3185 = vcmp.eq.s32.totalorder %v3131, 1
      %vm3186 = vcmp.eq.s32.totalorder %v3132, 1
      %vm3187 = vcmp.eq.s32.totalorder %v3133, 1
      %vm3188 = vcmp.eq.s32.totalorder %v3134, 1
      %vm3189 = vcmp.eq.s32.totalorder %v3135, 1
      %vm3190 = vcmp.eq.s32.totalorder %v3136, 1
      %vm3191 = vcmp.eq.s32.totalorder %v3137, 1
      %vm3192 = vcmp.eq.s32.totalorder %v3138, 1
      %vm3193 = vcmp.eq.s32.totalorder %v3139, 1
      %vm3194 = vcmp.eq.s32.totalorder %v3140, 1
      %vm3195 = vcmp.eq.s32.totalorder %v3141, 1
      %vm3196 = vcmp.eq.s32.totalorder %v3142, 1
      %vm3197 = vcmp.eq.s32.totalorder %v3143, 1
      %vm3198 = vcmp.eq.s32.totalorder %v3144, 1
      %vm3199 = vcmp.eq.s32.totalorder %v3145, 1
      %vm3200 = vcmp.eq.s32.totalorder %v3146, 1
      %vm3201 = vcmp.eq.s32.totalorder %v3147, 1
      %vm3202 = vcmp.eq.s32.totalorder %v3148, 1
      %vm3203 = vcmp.eq.s32.totalorder %v3149, 1
      %vm3204 = vcmp.eq.s32.totalorder %v3150, 1
      %vm3205 = vcmp.eq.s32.totalorder %v3151, 1
      %vm3206 = vcmp.eq.s32.totalorder %v3152, 1
      %vm3207 = vcmp.eq.s32.totalorder %v3153, 1
      %vm3208 = vcmp.eq.s32.totalorder %v3154, 1
      %v3209 = vcombine.low %v2230, %v2238
      %v3210 = vcombine.low %v2237, %v2239
      %v3212 = vunpack.c.l.s4 1983009808
      %v3213 = vunpack.c.0.s8 %v3212
      %v3214 = vlaneseq
      %v3215 = vshrl.u32 %v3214, 7
      %v3216 = vsub.s32 %v3213, %v3215
      %v3217 = vrot.slane %v3209, %v3216
      %v3219 = vunpack.c.l.s4 1983009808
      %v3220 = vunpack.c.0.s8 %v3219
      %v3221 = vlaneseq
      %v3222 = vshrl.u32 %v3221, 7
      %v3223 = vsub.s32 %v3220, %v3222
      %v3224 = vrot.slane %v3210, %v3223
      %v3225 = vcombine.low %v3217, %v3224
      %v3226 = vcombine.low %v2247, %v2255
      %v3227 = vcombine.low %v2254, %v2256
      %v3229 = vunpack.c.l.s4 1983009808
      %v3230 = vunpack.c.0.s8 %v3229
      %v3231 = vlaneseq
      %v3232 = vshrl.u32 %v3231, 7
      %v3233 = vsub.s32 %v3230, %v3232
      %v3234 = vrot.slane %v3226, %v3233
      %v3236 = vunpack.c.l.s4 1983009808
      %v3237 = vunpack.c.0.s8 %v3236
      %v3238 = vlaneseq
      %v3239 = vshrl.u32 %v3238, 7
      %v3240 = vsub.s32 %v3237, %v3239
      %v3241 = vrot.slane %v3227, %v3240
      %v3242 = vcombine.low %v3234, %v3241
      %v3244 = vunpack.c.l.s4 1983009808
      %v3245 = vunpack.c.0.s8 %v3244
      %v3246 = vlaneseq
      %v3247 = vshrl.u32 %v3246, 7
      %v3248 = vsub.s32 %v3245, %v3247
      %v3249 = vrot.slane %v2264, %v3248
      %v3250 = vcombine.low %v2272, %v2271
      %v3251 = vcombine.low %v2273, %v2281
      %v3253 = vunpack.c.l.s4 1983009808
      %v3254 = vunpack.c.0.s8 %v3253
      %v3255 = vlaneseq
      %v3256 = vshrl.u32 %v3255, 7
      %v3257 = vsub.s32 %v3254, %v3256
      %v3258 = vrot.slane %v3250, %v3257
      %v3260 = vunpack.c.l.s4 1983009808
      %v3261 = vunpack.c.0.s8 %v3260
      %v3262 = vlaneseq
      %v3263 = vshrl.u32 %v3262, 7
      %v3264 = vsub.s32 %v3261, %v3263
      %v3265 = vrot.slane %v3251, %v3264
      %v3266 = vcombine.low %v3258, %v3265
      %v3267 = vcombine.low %v2289, %v2288
      %v3268 = vcombine.low %v2290, %v2298
      %v3270 = vunpack.c.l.s4 1983009808
      %v3271 = vunpack.c.0.s8 %v3270
      %v3272 = vlaneseq
      %v3273 = vshrl.u32 %v3272, 7
      %v3274 = vsub.s32 %v3271, %v3273
      %v3275 = vrot.slane %v3267, %v3274
      %v3277 = vunpack.c.l.s4 1983009808
      %v3278 = vunpack.c.0.s8 %v3277
      %v3279 = vlaneseq
      %v3280 = vshrl.u32 %v3279, 7
      %v3281 = vsub.s32 %v3278, %v3280
      %v3282 = vrot.slane %v3268, %v3281
      %v3283 = vcombine.low %v3275, %v3282
      %v3285 = vunpack.c.l.s4 1983009808
      %v3286 = vunpack.c.0.s8 %v3285
      %v3287 = vlaneseq
      %v3288 = vshrl.u32 %v3287, 7
      %v3289 = vsub.s32 %v3286, %v3288
      %v3290 = vrot.slane %v2306, %v3289
      %v3291 = vcombine.low %v2305, %v2307
      %v3292 = vcombine.low %v2315, %v2323
      %v3294 = vunpack.c.l.s4 1983009808
      %v3295 = vunpack.c.0.s8 %v3294
      %v3296 = vlaneseq
      %v3297 = vshrl.u32 %v3296, 7
      %v3298 = vsub.s32 %v3295, %v3297
      %v3299 = vrot.slane %v3291, %v3298
      %v3301 = vunpack.c.l.s4 1983009808
      %v3302 = vunpack.c.0.s8 %v3301
      %v3303 = vlaneseq
      %v3304 = vshrl.u32 %v3303, 7
      %v3305 = vsub.s32 %v3302, %v3304
      %v3306 = vrot.slane %v3292, %v3305
      %v3307 = vcombine.low %v3299, %v3306
      %v3308 = vcombine.low %v2322, %v2324
      %v3309 = vcombine.low %v2332, %v2340
      %v3311 = vunpack.c.l.s4 1983009808
      %v3312 = vunpack.c.0.s8 %v3311
      %v3313 = vlaneseq
      %v3314 = vshrl.u32 %v3313, 7
      %v3315 = vsub.s32 %v3312, %v3314
      %v3316 = vrot.slane %v3308, %v3315
      %v3318 = vunpack.c.l.s4 1983009808
      %v3319 = vunpack.c.0.s8 %v3318
      %v3320 = vlaneseq
      %v3321 = vshrl.u32 %v3320, 7
      %v3322 = vsub.s32 %v3319, %v3321
      %v3323 = vrot.slane %v3309, %v3322
      %v3324 = vcombine.low %v3316, %v3323
      %v3326 = vunpack.c.l.s4 1983009808
      %v3327 = vunpack.c.0.s8 %v3326
      %v3328 = vlaneseq
      %v3329 = vshrl.u32 %v3328, 7
      %v3330 = vsub.s32 %v3327, %v3329
      %v3331 = vrot.slane %v2339, %v3330
      %v3332 = vcombine.low %v2341, %v2349
      %v3333 = vcombine.low %v2357, %v2356
      %v3335 = vunpack.c.l.s4 1983009808
      %v3336 = vunpack.c.0.s8 %v3335
      %v3337 = vlaneseq
      %v3338 = vshrl.u32 %v3337, 7
      %v3339 = vsub.s32 %v3336, %v3338
      %v3340 = vrot.slane %v3332, %v3339
      %v3342 = vunpack.c.l.s4 1983009808
      %v3343 = vunpack.c.0.s8 %v3342
      %v3344 = vlaneseq
      %v3345 = vshrl.u32 %v3344, 7
      %v3346 = vsub.s32 %v3343, %v3345
      %v3347 = vrot.slane %v3333, %v3346
      %v3348 = vcombine.low %v3340, %v3347
      %v3349 = vcombine.low %v2358, %v2366
      %v3350 = vcombine.low %v2374, %v2373
      %v3352 = vunpack.c.l.s4 1983009808
      %v3353 = vunpack.c.0.s8 %v3352
      %v3354 = vlaneseq
      %v3355 = vshrl.u32 %v3354, 7
      %v3356 = vsub.s32 %v3353, %v3355
      %v3357 = vrot.slane %v3349, %v3356
      %v3359 = vunpack.c.l.s4 1983009808
      %v3360 = vunpack.c.0.s8 %v3359
      %v3361 = vlaneseq
      %v3362 = vshrl.u32 %v3361, 7
      %v3363 = vsub.s32 %v3360, %v3362
      %v3364 = vrot.slane %v3350, %v3363
      %v3365 = vcombine.low %v3357, %v3364
      %v3367 = vunpack.c.l.s4 1983009808
      %v3368 = vunpack.c.0.s8 %v3367
      %v3369 = vlaneseq
      %v3370 = vshrl.u32 %v3369, 7
      %v3371 = vsub.s32 %v3368, %v3370
      %v3372 = vrot.slane %v2375, %v3371
      %v3373 = vcombine.low %v2383, %v2391
      %v3374 = vcombine.low %v2390, %v2392
      %v3376 = vunpack.c.l.s4 1983009808
      %v3377 = vunpack.c.0.s8 %v3376
      %v3378 = vlaneseq
      %v3379 = vshrl.u32 %v3378, 7
      %v3380 = vsub.s32 %v3377, %v3379
      %v3381 = vrot.slane %v3373, %v3380
      %v3383 = vunpack.c.l.s4 1983009808
      %v3384 = vunpack.c.0.s8 %v3383
      %v3385 = vlaneseq
      %v3386 = vshrl.u32 %v3385, 7
      %v3387 = vsub.s32 %v3384, %v3386
      %v3388 = vrot.slane %v3374, %v3387
      %v3389 = vcombine.low %v3381, %v3388
      %v3390 = vcombine.low %v2400, %v2408
      %v3391 = vcombine.low %v2407, %v2409
      %v3393 = vunpack.c.l.s4 1983009808
      %v3394 = vunpack.c.0.s8 %v3393
      %v3395 = vlaneseq
      %v3396 = vshrl.u32 %v3395, 7
      %v3397 = vsub.s32 %v3394, %v3396
      %v3398 = vrot.slane %v3390, %v3397
      %v3400 = vunpack.c.l.s4 1983009808
      %v3401 = vunpack.c.0.s8 %v3400
      %v3402 = vlaneseq
      %v3403 = vshrl.u32 %v3402, 7
      %v3404 = vsub.s32 %v3401, %v3403
      %v3405 = vrot.slane %v3391, %v3404
      %v3406 = vcombine.low %v3398, %v3405
      %v3408 = vunpack.c.l.s4 1983009808
      %v3409 = vunpack.c.0.s8 %v3408
      %v3410 = vlaneseq
      %v3411 = vshrl.u32 %v3410, 7
      %v3412 = vsub.s32 %v3409, %v3411
      %v3413 = vrot.slane %v2417, %v3412
      %v3414 = vcombine.low %v2425, %v2424
      %v3415 = vcombine.low %v2426, %v2434
      %v3417 = vunpack.c.l.s4 1983009808
      %v3418 = vunpack.c.0.s8 %v3417
      %v3419 = vlaneseq
      %v3420 = vshrl.u32 %v3419, 7
      %v3421 = vsub.s32 %v3418, %v3420
      %v3422 = vrot.slane %v3414, %v3421
      %v3424 = vunpack.c.l.s4 1983009808
      %v3425 = vunpack.c.0.s8 %v3424
      %v3426 = vlaneseq
      %v3427 = vshrl.u32 %v3426, 7
      %v3428 = vsub.s32 %v3425, %v3427
      %v3429 = vrot.slane %v3415, %v3428
      %v3430 = vcombine.low %v3422, %v3429
      %v3431 = vcombine.low %v2442, %v2441
      %v3432 = vcombine.low %v2443, %v2451
      %v3434 = vunpack.c.l.s4 1983009808
      %v3435 = vunpack.c.0.s8 %v3434
      %v3436 = vlaneseq
      %v3437 = vshrl.u32 %v3436, 7
      %v3438 = vsub.s32 %v3435, %v3437
      %v3439 = vrot.slane %v3431, %v3438
      %v3441 = vunpack.c.l.s4 1983009808
      %v3442 = vunpack.c.0.s8 %v3441
      %v3443 = vlaneseq
      %v3444 = vshrl.u32 %v3443, 7
      %v3445 = vsub.s32 %v3442, %v3444
      %v3446 = vrot.slane %v3432, %v3445
      %v3447 = vcombine.low %v3439, %v3446
      %v3449 = vunpack.c.l.s4 1983009808
      %v3450 = vunpack.c.0.s8 %v3449
      %v3451 = vlaneseq
      %v3452 = vshrl.u32 %v3451, 7
      %v3453 = vsub.s32 %v3450, %v3452
      %v3454 = vrot.slane %v2459, %v3453
      %v3455 = vcombine.low %v2458, %v2460
      %v3456 = vcombine.low %v2468, %v2476
      %v3458 = vunpack.c.l.s4 1983009808
      %v3459 = vunpack.c.0.s8 %v3458
      %v3460 = vlaneseq
      %v3461 = vshrl.u32 %v3460, 7
      %v3462 = vsub.s32 %v3459, %v3461
      %v3463 = vrot.slane %v3455, %v3462
      %v3465 = vunpack.c.l.s4 1983009808
      %v3466 = vunpack.c.0.s8 %v3465
      %v3467 = vlaneseq
      %v3468 = vshrl.u32 %v3467, 7
      %v3469 = vsub.s32 %v3466, %v3468
      %v3470 = vrot.slane %v3456, %v3469
      %v3471 = vcombine.low %v3463, %v3470
      %v3472 = vcombine.low %v2475, %v2477
      %v3473 = vcombine.low %v2485, %v2493
      %v3475 = vunpack.c.l.s4 1983009808
      %v3476 = vunpack.c.0.s8 %v3475
      %v3477 = vlaneseq
      %v3478 = vshrl.u32 %v3477, 7
      %v3479 = vsub.s32 %v3476, %v3478
      %v3480 = vrot.slane %v3472, %v3479
      %v3482 = vunpack.c.l.s4 1983009808
      %v3483 = vunpack.c.0.s8 %v3482
      %v3484 = vlaneseq
      %v3485 = vshrl.u32 %v3484, 7
      %v3486 = vsub.s32 %v3483, %v3485
      %v3487 = vrot.slane %v3473, %v3486
      %v3488 = vcombine.low %v3480, %v3487
      %v3490 = vunpack.c.l.s4 1983009808
      %v3491 = vunpack.c.0.s8 %v3490
      %v3492 = vlaneseq
      %v3493 = vshrl.u32 %v3492, 7
      %v3494 = vsub.s32 %v3491, %v3493
      %v3495 = vrot.slane %v2492, %v3494
      %v3496 = vcombine.low %v2494, %v2502
      %v3497 = vcombine.low %v2510, %v2509
      %v3499 = vunpack.c.l.s4 1983009808
      %v3500 = vunpack.c.0.s8 %v3499
      %v3501 = vlaneseq
      %v3502 = vshrl.u32 %v3501, 7
      %v3503 = vsub.s32 %v3500, %v3502
      %v3504 = vrot.slane %v3496, %v3503
      %v3506 = vunpack.c.l.s4 1983009808
      %v3507 = vunpack.c.0.s8 %v3506
      %v3508 = vlaneseq
      %v3509 = vshrl.u32 %v3508, 7
      %v3510 = vsub.s32 %v3507, %v3509
      %v3511 = vrot.slane %v3497, %v3510
      %v3512 = vcombine.low %v3504, %v3511
      %v3513 = vcombine.low %v2511, %v2519
      %v3514 = vcombine.low %v2527, %v2526
      %v3516 = vunpack.c.l.s4 1983009808
      %v3517 = vunpack.c.0.s8 %v3516
      %v3518 = vlaneseq
      %v3519 = vshrl.u32 %v3518, 7
      %v3520 = vsub.s32 %v3517, %v3519
      %v3521 = vrot.slane %v3513, %v3520
      %v3523 = vunpack.c.l.s4 1983009808
      %v3524 = vunpack.c.0.s8 %v3523
      %v3525 = vlaneseq
      %v3526 = vshrl.u32 %v3525, 7
      %v3527 = vsub.s32 %v3524, %v3526
      %v3528 = vrot.slane %v3514, %v3527
      %v3529 = vcombine.low %v3521, %v3528
      %v3531 = vunpack.c.l.s4 1983009808
      %v3532 = vunpack.c.0.s8 %v3531
      %v3533 = vlaneseq
      %v3534 = vshrl.u32 %v3533, 7
      %v3535 = vsub.s32 %v3532, %v3534
      %v3536 = vrot.slane %v2528, %v3535
      %v3537 = vcombine.low %v2536, %v2544
      %v3538 = vcombine.low %v2543, %v2545
      %v3540 = vunpack.c.l.s4 1983009808
      %v3541 = vunpack.c.0.s8 %v3540
      %v3542 = vlaneseq
      %v3543 = vshrl.u32 %v3542, 7
      %v3544 = vsub.s32 %v3541, %v3543
      %v3545 = vrot.slane %v3537, %v3544
      %v3547 = vunpack.c.l.s4 1983009808
      %v3548 = vunpack.c.0.s8 %v3547
      %v3549 = vlaneseq
      %v3550 = vshrl.u32 %v3549, 7
      %v3551 = vsub.s32 %v3548, %v3550
      %v3552 = vrot.slane %v3538, %v3551
      %v3553 = vcombine.low %v3545, %v3552
      %v3554 = vcombine.low %v2553, %v2561
      %v3555 = vcombine.low %v2560, %v2562
      %v3557 = vunpack.c.l.s4 1983009808
      %v3558 = vunpack.c.0.s8 %v3557
      %v3559 = vlaneseq
      %v3560 = vshrl.u32 %v3559, 7
      %v3561 = vsub.s32 %v3558, %v3560
      %v3562 = vrot.slane %v3554, %v3561
      %v3564 = vunpack.c.l.s4 1983009808
      %v3565 = vunpack.c.0.s8 %v3564
      %v3566 = vlaneseq
      %v3567 = vshrl.u32 %v3566, 7
      %v3568 = vsub.s32 %v3565, %v3567
      %v3569 = vrot.slane %v3555, %v3568
      %v3570 = vcombine.low %v3562, %v3569
      %v3572 = vunpack.c.l.s4 1983009808
      %v3573 = vunpack.c.0.s8 %v3572
      %v3574 = vlaneseq
      %v3575 = vshrl.u32 %v3574, 7
      %v3576 = vsub.s32 %v3573, %v3575
      %v3577 = vrot.slane %v2570, %v3576
      %v3578 = vcombine.low %v2578, %v2577
      %v3579 = vcombine.low %v2579, %v2587
      %v3581 = vunpack.c.l.s4 1983009808
      %v3582 = vunpack.c.0.s8 %v3581
      %v3583 = vlaneseq
      %v3584 = vshrl.u32 %v3583, 7
      %v3585 = vsub.s32 %v3582, %v3584
      %v3586 = vrot.slane %v3578, %v3585
      %v3588 = vunpack.c.l.s4 1983009808
      %v3589 = vunpack.c.0.s8 %v3588
      %v3590 = vlaneseq
      %v3591 = vshrl.u32 %v3590, 7
      %v3592 = vsub.s32 %v3589, %v3591
      %v3593 = vrot.slane %v3579, %v3592
      %v3594 = vcombine.low %v3586, %v3593
      %v3595 = vcombine.low %v2595, %v2594
      %v3596 = vcombine.low %v2596, %v2604
      %v3598 = vunpack.c.l.s4 1983009808
      %v3599 = vunpack.c.0.s8 %v3598
      %v3600 = vlaneseq
      %v3601 = vshrl.u32 %v3600, 7
      %v3602 = vsub.s32 %v3599, %v3601
      %v3603 = vrot.slane %v3595, %v3602
      %v3605 = vunpack.c.l.s4 1983009808
      %v3606 = vunpack.c.0.s8 %v3605
      %v3607 = vlaneseq
      %v3608 = vshrl.u32 %v3607, 7
      %v3609 = vsub.s32 %v3606, %v3608
      %v3610 = vrot.slane %v3596, %v3609
      %v3611 = vcombine.low %v3603, %v3610
      %v3613 = vunpack.c.l.s4 1983009808
      %v3614 = vunpack.c.0.s8 %v3613
      %v3615 = vlaneseq
      %v3616 = vshrl.u32 %v3615, 7
      %v3617 = vsub.s32 %v3614, %v3616
      %v3618 = vrot.slane %v2612, %v3617
      %v3619 = vcombine.low %v2611, %v2613
      %v3620 = vcombine.low %v2621, %v2629
      %v3622 = vunpack.c.l.s4 1983009808
      %v3623 = vunpack.c.0.s8 %v3622
      %v3624 = vlaneseq
      %v3625 = vshrl.u32 %v3624, 7
      %v3626 = vsub.s32 %v3623, %v3625
      %v3627 = vrot.slane %v3619, %v3626
      %v3629 = vunpack.c.l.s4 1983009808
      %v3630 = vunpack.c.0.s8 %v3629
      %v3631 = vlaneseq
      %v3632 = vshrl.u32 %v3631, 7
      %v3633 = vsub.s32 %v3630, %v3632
      %v3634 = vrot.slane %v3620, %v3633
      %v3635 = vcombine.low %v3627, %v3634
      %v3636 = vcombine.low %v2628, %v2630
      %v3637 = vcombine.low %v2638, %v2646
      %v3639 = vunpack.c.l.s4 1983009808
      %v3640 = vunpack.c.0.s8 %v3639
      %v3641 = vlaneseq
      %v3642 = vshrl.u32 %v3641, 7
      %v3643 = vsub.s32 %v3640, %v3642
      %v3644 = vrot.slane %v3636, %v3643
      %v3646 = vunpack.c.l.s4 1983009808
      %v3647 = vunpack.c.0.s8 %v3646
      %v3648 = vlaneseq
      %v3649 = vshrl.u32 %v3648, 7
      %v3650 = vsub.s32 %v3647, %v3649
      %v3651 = vrot.slane %v3637, %v3650
      %v3652 = vcombine.low %v3644, %v3651
      %v3654 = vunpack.c.l.s4 1983009808
      %v3655 = vunpack.c.0.s8 %v3654
      %v3656 = vlaneseq
      %v3657 = vshrl.u32 %v3656, 7
      %v3658 = vsub.s32 %v3655, %v3657
      %v3659 = vrot.slane %v2645, %v3658
      %v3660 = vcombine.low %v2647, %v2655
      %v3661 = vcombine.low %v2663, %v2662
      %v3663 = vunpack.c.l.s4 1983009808
      %v3664 = vunpack.c.0.s8 %v3663
      %v3665 = vlaneseq
      %v3666 = vshrl.u32 %v3665, 7
      %v3667 = vsub.s32 %v3664, %v3666
      %v3668 = vrot.slane %v3660, %v3667
      %v3670 = vunpack.c.l.s4 1983009808
      %v3671 = vunpack.c.0.s8 %v3670
      %v3672 = vlaneseq
      %v3673 = vshrl.u32 %v3672, 7
      %v3674 = vsub.s32 %v3671, %v3673
      %v3675 = vrot.slane %v3661, %v3674
      %v3676 = vcombine.low %v3668, %v3675
      %v3677 = vcombine.low %v2664, %v2672
      %v3678 = vcombine.low %v2680, %v2679
      %v3680 = vunpack.c.l.s4 1983009808
      %v3681 = vunpack.c.0.s8 %v3680
      %v3682 = vlaneseq
      %v3683 = vshrl.u32 %v3682, 7
      %v3684 = vsub.s32 %v3681, %v3683
      %v3685 = vrot.slane %v3677, %v3684
      %v3687 = vunpack.c.l.s4 1983009808
      %v3688 = vunpack.c.0.s8 %v3687
      %v3689 = vlaneseq
      %v3690 = vshrl.u32 %v3689, 7
      %v3691 = vsub.s32 %v3688, %v3690
      %v3692 = vrot.slane %v3678, %v3691
      %v3693 = vcombine.low %v3685, %v3692
      %v3695 = vunpack.c.l.s4 1983009808
      %v3696 = vunpack.c.0.s8 %v3695
      %v3697 = vlaneseq
      %v3698 = vshrl.u32 %v3697, 7
      %v3699 = vsub.s32 %v3696, %v3698
      %v3700 = vrot.slane %v2681, %v3699
      %v3701 = vcombine.low %v2689, %v2697
      %v3702 = vcombine.low %v2696, %v2698
      %v3704 = vunpack.c.l.s4 1983009808
      %v3705 = vunpack.c.0.s8 %v3704
      %v3706 = vlaneseq
      %v3707 = vshrl.u32 %v3706, 7
      %v3708 = vsub.s32 %v3705, %v3707
      %v3709 = vrot.slane %v3701, %v3708
      %v3711 = vunpack.c.l.s4 1983009808
      %v3712 = vunpack.c.0.s8 %v3711
      %v3713 = vlaneseq
      %v3714 = vshrl.u32 %v3713, 7
      %v3715 = vsub.s32 %v3712, %v3714
      %v3716 = vrot.slane %v3702, %v3715
      %v3717 = vcombine.low %v3709, %v3716
      %v3718 = vcombine.low %v2706, %v2714
      %v3719 = vcombine.low %v2713, %v2715
      %v3721 = vunpack.c.l.s4 1983009808
      %v3722 = vunpack.c.0.s8 %v3721
      %v3723 = vlaneseq
      %v3724 = vshrl.u32 %v3723, 7
      %v3725 = vsub.s32 %v3722, %v3724
      %v3726 = vrot.slane %v3718, %v3725
      %v3728 = vunpack.c.l.s4 1983009808
      %v3729 = vunpack.c.0.s8 %v3728
      %v3730 = vlaneseq
      %v3731 = vshrl.u32 %v3730, 7
      %v3732 = vsub.s32 %v3729, %v3731
      %v3733 = vrot.slane %v3719, %v3732
      %v3734 = vcombine.low %v3726, %v3733
      %v3736 = vunpack.c.l.s4 1983009808
      %v3737 = vunpack.c.0.s8 %v3736
      %v3738 = vlaneseq
      %v3739 = vshrl.u32 %v3738, 7
      %v3740 = vsub.s32 %v3737, %v3739
      %v3741 = vrot.slane %v2723, %v3740
      %v3742 = vcombine.low %v2731, %v2730
      %v3743 = vcombine.low %v2732, %v2740
      %v3745 = vunpack.c.l.s4 1983009808
      %v3746 = vunpack.c.0.s8 %v3745
      %v3747 = vlaneseq
      %v3748 = vshrl.u32 %v3747, 7
      %v3749 = vsub.s32 %v3746, %v3748
      %v3750 = vrot.slane %v3742, %v3749
      %v3752 = vunpack.c.l.s4 1983009808
      %v3753 = vunpack.c.0.s8 %v3752
      %v3754 = vlaneseq
      %v3755 = vshrl.u32 %v3754, 7
      %v3756 = vsub.s32 %v3753, %v3755
      %v3757 = vrot.slane %v3743, %v3756
      %v3758 = vcombine.low %v3750, %v3757
      %v3759 = vcombine.low %v2748, %v2747
      %v3760 = vcombine.low %v2749, %v2757
      %v3762 = vunpack.c.l.s4 1983009808
      %v3763 = vunpack.c.0.s8 %v3762
      %v3764 = vlaneseq
      %v3765 = vshrl.u32 %v3764, 7
      %v3766 = vsub.s32 %v3763, %v3765
      %v3767 = vrot.slane %v3759, %v3766
      %v3769 = vunpack.c.l.s4 1983009808
      %v3770 = vunpack.c.0.s8 %v3769
      %v3771 = vlaneseq
      %v3772 = vshrl.u32 %v3771, 7
      %v3773 = vsub.s32 %v3770, %v3772
      %v3774 = vrot.slane %v3760, %v3773
      %v3775 = vcombine.low %v3767, %v3774
      %v3777 = vunpack.c.l.s4 1983009808
      %v3778 = vunpack.c.0.s8 %v3777
      %v3779 = vlaneseq
      %v3780 = vshrl.u32 %v3779, 7
      %v3781 = vsub.s32 %v3778, %v3780
      %v3782 = vrot.slane %v2765, %v3781
      %v3783 = vcombine.low %v2764, %v2766
      %v3784 = vcombine.low %v2774, %v2782
      %v3786 = vunpack.c.l.s4 1983009808
      %v3787 = vunpack.c.0.s8 %v3786
      %v3788 = vlaneseq
      %v3789 = vshrl.u32 %v3788, 7
      %v3790 = vsub.s32 %v3787, %v3789
      %v3791 = vrot.slane %v3783, %v3790
      %v3793 = vunpack.c.l.s4 1983009808
      %v3794 = vunpack.c.0.s8 %v3793
      %v3795 = vlaneseq
      %v3796 = vshrl.u32 %v3795, 7
      %v3797 = vsub.s32 %v3794, %v3796
      %v3798 = vrot.slane %v3784, %v3797
      %v3799 = vcombine.low %v3791, %v3798
      %v3800 = vcombine.low %v2781, %v2783
      %v3801 = vcombine.low %v2791, %v2799
      %v3803 = vunpack.c.l.s4 1983009808
      %v3804 = vunpack.c.0.s8 %v3803
      %v3805 = vlaneseq
      %v3806 = vshrl.u32 %v3805, 7
      %v3807 = vsub.s32 %v3804, %v3806
      %v3808 = vrot.slane %v3800, %v3807
      %v3810 = vunpack.c.l.s4 1983009808
      %v3811 = vunpack.c.0.s8 %v3810
      %v3812 = vlaneseq
      %v3813 = vshrl.u32 %v3812, 7
      %v3814 = vsub.s32 %v3811, %v3813
      %v3815 = vrot.slane %v3801, %v3814
      %v3816 = vcombine.low %v3808, %v3815
      %v3818 = vunpack.c.l.s4 1983009808
      %v3819 = vunpack.c.0.s8 %v3818
      %v3820 = vlaneseq
      %v3821 = vshrl.u32 %v3820, 7
      %v3822 = vsub.s32 %v3819, %v3821
      %v3823 = vrot.slane %v2798, %v3822
      %v3824 = vcombine.low %v2800, %v2808
      %v3825 = vcombine.low %v2816, %v2815
      %v3827 = vunpack.c.l.s4 1983009808
      %v3828 = vunpack.c.0.s8 %v3827
      %v3829 = vlaneseq
      %v3830 = vshrl.u32 %v3829, 7
      %v3831 = vsub.s32 %v3828, %v3830
      %v3832 = vrot.slane %v3824, %v3831
      %v3834 = vunpack.c.l.s4 1983009808
      %v3835 = vunpack.c.0.s8 %v3834
      %v3836 = vlaneseq
      %v3837 = vshrl.u32 %v3836, 7
      %v3838 = vsub.s32 %v3835, %v3837
      %v3839 = vrot.slane %v3825, %v3838
      %v3840 = vcombine.low %v3832, %v3839
      %v3841 = vcombine.low %v2817, %v2825
      %v3842 = vcombine.low %v2833, %v2832
      %v3844 = vunpack.c.l.s4 1983009808
      %v3845 = vunpack.c.0.s8 %v3844
      %v3846 = vlaneseq
      %v3847 = vshrl.u32 %v3846, 7
      %v3848 = vsub.s32 %v3845, %v3847
      %v3849 = vrot.slane %v3841, %v3848
      %v3851 = vunpack.c.l.s4 1983009808
      %v3852 = vunpack.c.0.s8 %v3851
      %v3853 = vlaneseq
      %v3854 = vshrl.u32 %v3853, 7
      %v3855 = vsub.s32 %v3852, %v3854
      %v3856 = vrot.slane %v3842, %v3855
      %v3857 = vcombine.low %v3849, %v3856
      %v3859 = vunpack.c.l.s4 1983009808
      %v3860 = vunpack.c.0.s8 %v3859
      %v3861 = vlaneseq
      %v3862 = vshrl.u32 %v3861, 7
      %v3863 = vsub.s32 %v3860, %v3862
      %v3864 = vrot.slane %v2834, %v3863
      %v3865 = vcombine.low %v2842, %v2850
      %v3866 = vcombine.low %v2849, %v2851
      %v3868 = vunpack.c.l.s4 1983009808
      %v3869 = vunpack.c.0.s8 %v3868
      %v3870 = vlaneseq
      %v3871 = vshrl.u32 %v3870, 7
      %v3872 = vsub.s32 %v3869, %v3871
      %v3873 = vrot.slane %v3865, %v3872
      %v3875 = vunpack.c.l.s4 1983009808
      %v3876 = vunpack.c.0.s8 %v3875
      %v3877 = vlaneseq
      %v3878 = vshrl.u32 %v3877, 7
      %v3879 = vsub.s32 %v3876, %v3878
      %v3880 = vrot.slane %v3866, %v3879
      %v3881 = vcombine.low %v3873, %v3880
      %v3882 = vcombine.low %v2859, %v2867
      %v3883 = vcombine.low %v2866, %v2868
      %v3885 = vunpack.c.l.s4 1983009808
      %v3886 = vunpack.c.0.s8 %v3885
      %v3887 = vlaneseq
      %v3888 = vshrl.u32 %v3887, 7
      %v3889 = vsub.s32 %v3886, %v3888
      %v3890 = vrot.slane %v3882, %v3889
      %v3892 = vunpack.c.l.s4 1983009808
      %v3893 = vunpack.c.0.s8 %v3892
      %v3894 = vlaneseq
      %v3895 = vshrl.u32 %v3894, 7
      %v3896 = vsub.s32 %v3893, %v3895
      %v3897 = vrot.slane %v3883, %v3896
      %v3898 = vcombine.low %v3890, %v3897
      %v3900 = vunpack.c.l.s4 1983009808
      %v3901 = vunpack.c.0.s8 %v3900
      %v3902 = vlaneseq
      %v3903 = vshrl.u32 %v3902, 7
      %v3904 = vsub.s32 %v3901, %v3903
      %v3905 = vrot.slane %v2876, %v3904
      %v3906 = vcombine.low %v2884, %v2883
      %v3907 = vcombine.low %v2885, %v2893
      %v3909 = vunpack.c.l.s4 1983009808
      %v3910 = vunpack.c.0.s8 %v3909
      %v3911 = vlaneseq
      %v3912 = vshrl.u32 %v3911, 7
      %v3913 = vsub.s32 %v3910, %v3912
      %v3914 = vrot.slane %v3906, %v3913
      %v3916 = vunpack.c.l.s4 1983009808
      %v3917 = vunpack.c.0.s8 %v3916
      %v3918 = vlaneseq
      %v3919 = vshrl.u32 %v3918, 7
      %v3920 = vsub.s32 %v3917, %v3919
      %v3921 = vrot.slane %v3907, %v3920
      %v3922 = vcombine.low %v3914, %v3921
      %v3923 = vcombine.low %v2901, %v2900
      %v3924 = vcombine.low %v2902, %v2909
      %v3926 = vunpack.c.l.s4 1983009808
      %v3927 = vunpack.c.0.s8 %v3926
      %v3928 = vlaneseq
      %v3929 = vshrl.u32 %v3928, 7
      %v3930 = vsub.s32 %v3927, %v3929
      %v3931 = vrot.slane %v3923, %v3930
      %v3933 = vunpack.c.l.s4 1983009808
      %v3934 = vunpack.c.0.s8 %v3933
      %v3935 = vlaneseq
      %v3936 = vshrl.u32 %v3935, 7
      %v3937 = vsub.s32 %v3934, %v3936
      %v3938 = vrot.slane %v3924, %v3937
      %v3939 = vcombine.low %v3931, %v3938
      %v3941 = vunpack.c.l.s4 1983009808
      %v3942 = vunpack.c.0.s8 %v3941
      %v3943 = vlaneseq
      %v3944 = vshrl.u32 %v3943, 7
      %v3945 = vsub.s32 %v3942, %v3944
      %v3946 = vrot.slane %v2910, %v3945
      %v4001 = vsel %vm3155, %v3225, 0.0
      %v4002 = vsel %vm3156, %v3242, 0.0
      %v4003 = vsel %vm3157, %v3249, 0.0
      %v4004 = vsel %vm3158, %v3266, 0.0
      %v4005 = vsel %vm3159, %v3283, 0.0
      %v4006 = vsel %vm3160, %v3290, 0.0
      %v4007 = vsel %vm3161, %v3307, 0.0
      %v4008 = vsel %vm3162, %v3324, 0.0
      %v4009 = vsel %vm3163, %v3331, 0.0
      %v4010 = vsel %vm3164, %v3348, 0.0
      %v4011 = vsel %vm3165, %v3365, 0.0
      %v4012 = vsel %vm3166, %v3372, 0.0
      %v4013 = vsel %vm3167, %v3389, 0.0
      %v4014 = vsel %vm3168, %v3406, 0.0
      %v4015 = vsel %vm3169, %v3413, 0.0
      %v4016 = vsel %vm3170, %v3430, 0.0
      %v4017 = vsel %vm3171, %v3447, 0.0
      %v4018 = vsel %vm3172, %v3454, 0.0
      %v4019 = vsel %vm3173, %v3471, 0.0
      %v4020 = vsel %vm3174, %v3488, 0.0
      %v4021 = vsel %vm3175, %v3495, 0.0
      %v4022 = vsel %vm3176, %v3512, 0.0
      %v4023 = vsel %vm3177, %v3529, 0.0
      %v4024 = vsel %vm3178, %v3536, 0.0
      %v4025 = vsel %vm3179, %v3553, 0.0
      %v4026 = vsel %vm3180, %v3570, 0.0
      %v4027 = vsel %vm3181, %v3577, 0.0
      %v4028 = vsel %vm3182, %v3594, 0.0
      %v4029 = vsel %vm3183, %v3611, 0.0
      %v4030 = vsel %vm3184, %v3618, 0.0
      %v4031 = vsel %vm3185, %v3635, 0.0
      %v4032 = vsel %vm3186, %v3652, 0.0
      %v4033 = vsel %vm3187, %v3659, 0.0
      %v4034 = vsel %vm3188, %v3676, 0.0
      %v4035 = vsel %vm3189, %v3693, 0.0
      %v4036 = vsel %vm3190, %v3700, 0.0
      %v4037 = vsel %vm3191, %v3717, 0.0
      %v4038 = vsel %vm3192, %v3734, 0.0
      %v4039 = vsel %vm3193, %v3741, 0.0
      %v4040 = vsel %vm3194, %v3758, 0.0
      %v4041 = vsel %vm3195, %v3775, 0.0
      %v4042 = vsel %vm3196, %v3782, 0.0
      %v4043 = vsel %vm3197, %v3799, 0.0
      %v4044 = vsel %vm3198, %v3816, 0.0
      %v4045 = vsel %vm3199, %v3823, 0.0
      %v4046 = vsel %vm3200, %v3840, 0.0
      %v4047 = vsel %vm3201, %v3857, 0.0
      %v4048 = vsel %vm3202, %v3864, 0.0
      %v4049 = vsel %vm3203, %v3881, 0.0
      %v4050 = vsel %vm3204, %v3898, 0.0
      %v4051 = vsel %vm3205, %v3905, 0.0
      %v4052 = vsel %vm3206, %v3922, 0.0
      %v4053 = vsel %vm3207, %v3939, 0.0
      %v4054 = vsel %vm3208, %v3946, 0.0
      %vm4103 = vcmask 1046528
      %v4104 = vrot.slane %v4001, 1
      %v4105 = vrot.slane %v4002, 1
      %v4106 = vsel %vm4103, %v4104, %v4105
      %v4107 = vrot.slane %v4003, 1
      %v4108 = vsel %vm4103, %v4105, %v4107
      %v4109 = vrot.slane %v4004, 1
      %v4110 = vrot.slane %v4005, 1
      %v4111 = vsel %vm4103, %v4109, %v4110
      %v4112 = vrot.slane %v4006, 1
      %v4113 = vsel %vm4103, %v4110, %v4112
      %v4114 = vrot.slane %v4007, 1
      %v4115 = vrot.slane %v4008, 1
      %v4116 = vsel %vm4103, %v4114, %v4115
      %v4117 = vrot.slane %v4009, 1
      %v4118 = vsel %vm4103, %v4115, %v4117
      %v4119 = vrot.slane %v4010, 1
      %v4120 = vrot.slane %v4011, 1
      %v4121 = vsel %vm4103, %v4119, %v4120
      %v4122 = vrot.slane %v4012, 1
      %v4123 = vsel %vm4103, %v4120, %v4122
      %v4124 = vrot.slane %v4013, 1
      %v4125 = vrot.slane %v4014, 1
      %v4126 = vsel %vm4103, %v4124, %v4125
      %v4127 = vrot.slane %v4015, 1
      %v4128 = vsel %vm4103, %v4125, %v4127
      %v4129 = vrot.slane %v4016, 1
      %v4130 = vrot.slane %v4017, 1
      %v4131 = vsel %vm4103, %v4129, %v4130
      %v4132 = vrot.slane %v4018, 1
      %v4133 = vsel %vm4103, %v4130, %v4132
      %v4134 = vrot.slane %v4019, 1
      %v4135 = vrot.slane %v4020, 1
      %v4136 = vsel %vm4103, %v4134, %v4135
      %v4137 = vrot.slane %v4021, 1
      %v4138 = vsel %vm4103, %v4135, %v4137
      %v4139 = vrot.slane %v4022, 1
      %v4140 = vrot.slane %v4023, 1
      %v4141 = vsel %vm4103, %v4139, %v4140
      %v4142 = vrot.slane %v4024, 1
      %v4143 = vsel %vm4103, %v4140, %v4142
      %v4144 = vrot.slane %v4025, 1
      %v4145 = vrot.slane %v4026, 1
      %v4146 = vsel %vm4103, %v4144, %v4145
      %v4147 = vrot.slane %v4027, 1
      %v4148 = vsel %vm4103, %v4145, %v4147
      %v4149 = vrot.slane %v4028, 1
      %v4150 = vrot.slane %v4029, 1
      %v4151 = vsel %vm4103, %v4149, %v4150
      %v4152 = vrot.slane %v4030, 1
      %v4153 = vsel %vm4103, %v4150, %v4152
      %v4154 = vrot.slane %v4031, 1
      %v4155 = vrot.slane %v4032, 1
      %v4156 = vsel %vm4103, %v4154, %v4155
      %v4157 = vrot.slane %v4033, 1
      %v4158 = vsel %vm4103, %v4155, %v4157
      %v4159 = vrot.slane %v4034, 1
      %v4160 = vrot.slane %v4035, 1
      %v4161 = vsel %vm4103, %v4159, %v4160
      %v4162 = vrot.slane %v4036, 1
      %v4163 = vsel %vm4103, %v4160, %v4162
      %v4164 = vrot.slane %v4037, 1
      %v4165 = vrot.slane %v4038, 1
      %v4166 = vsel %vm4103, %v4164, %v4165
      %v4167 = vrot.slane %v4039, 1
      %v4168 = vsel %vm4103, %v4165, %v4167
      %v4169 = vrot.slane %v4040, 1
      %v4170 = vrot.slane %v4041, 1
      %v4171 = vsel %vm4103, %v4169, %v4170
      %v4172 = vrot.slane %v4042, 1
      %v4173 = vsel %vm4103, %v4170, %v4172
      %v4174 = vrot.slane %v4043, 1
      %v4175 = vrot.slane %v4044, 1
      %v4176 = vsel %vm4103, %v4174, %v4175
      %v4177 = vrot.slane %v4045, 1
      %v4178 = vsel %vm4103, %v4175, %v4177
      %v4179 = vrot.slane %v4046, 1
      %v4180 = vrot.slane %v4047, 1
      %v4181 = vsel %vm4103, %v4179, %v4180
      %v4182 = vrot.slane %v4048, 1
      %v4183 = vsel %vm4103, %v4180, %v4182
      %4184 = vrot.lane.b32.xlu0 %v4106, 8
      %v4185 = vpop.permute.xlu0 %4184
      %4186 = vrot.lane.b32.xlu0 %v4108, 8
      %v4187 = vpop.permute.xlu0 %4186
      %4188 = vrot.lane.b32.xlu0 %v4111, 8
      %v4189 = vpop.permute.xlu0 %4188
      %4190 = vrot.lane.b32.xlu0 %v4113, 8
      %v4191 = vpop.permute.xlu0 %4190
      %4192 = vrot.lane.b32.xlu0 %v4116, 8
      %v4193 = vpop.permute.xlu0 %4192
      %4194 = vrot.lane.b32.xlu0 %v4118, 8
      %v4195 = vpop.permute.xlu0 %4194
      %4196 = vrot.lane.b32.xlu0 %v4121, 8
      %v4197 = vpop.permute.xlu0 %4196
      %4198 = vrot.lane.b32.xlu0 %v4123, 8
      %v4199 = vpop.permute.xlu0 %4198
      %4200 = vrot.lane.b32.xlu0 %v4126, 8
      %v4201 = vpop.permute.xlu0 %4200
      %4202 = vrot.lane.b32.xlu0 %v4128, 8
      %v4203 = vpop.permute.xlu0 %4202
      %4204 = vrot.lane.b32.xlu0 %v4131, 8
      %v4205 = vpop.permute.xlu0 %4204
      %4206 = vrot.lane.b32.xlu0 %v4133, 8
      %v4207 = vpop.permute.xlu0 %4206
      %4208 = vrot.lane.b32.xlu0 %v4136, 8
      %v4209 = vpop.permute.xlu0 %4208
      %4210 = vrot.lane.b32.xlu0 %v4138, 8
      %v4211 = vpop.permute.xlu0 %4210
      %4212 = vrot.lane.b32.xlu0 %v4141, 8
      %v4213 = vpop.permute.xlu0 %4212
      %4214 = vrot.lane.b32.xlu0 %v4143, 8
      %v4215 = vpop.permute.xlu0 %4214
      %4216 = vrot.lane.b32.xlu0 %v4146, 8
      %v4217 = vpop.permute.xlu0 %4216
      %4218 = vrot.lane.b32.xlu0 %v4148, 8
      %v4219 = vpop.permute.xlu0 %4218
      %4220 = vrot.lane.b32.xlu0 %v4151, 8
      %v4221 = vpop.permute.xlu0 %4220
      %4222 = vrot.lane.b32.xlu0 %v4153, 8
      %v4223 = vpop.permute.xlu0 %4222
      %4224 = vrot.lane.b32.xlu0 %v4156, 8
      %v4225 = vpop.permute.xlu0 %4224
      %4226 = vrot.lane.b32.xlu0 %v4158, 8
      %v4227 = vpop.permute.xlu0 %4226
      %4228 = vrot.lane.b32.xlu0 %v4161, 8
      %v4229 = vpop.permute.xlu0 %4228
      %4230 = vrot.lane.b32.xlu0 %v4163, 8
      %v4231 = vpop.permute.xlu0 %4230
      %4232 = vrot.lane.b32.xlu0 %v4166, 8
      %v4233 = vpop.permute.xlu0 %4232
      %4234 = vrot.lane.b32.xlu0 %v4168, 8
      %v4235 = vpop.permute.xlu0 %4234
      %4236 = vrot.lane.b32.xlu0 %v4171, 8
      %v4237 = vpop.permute.xlu0 %4236
      %4238 = vrot.lane.b32.xlu0 %v4173, 8
      %v4239 = vpop.permute.xlu0 %4238
      %4240 = vrot.lane.b32.xlu0 %v4176, 8
      %v4241 = vpop.permute.xlu0 %4240
      %4242 = vrot.lane.b32.xlu0 %v4178, 8
      %v4243 = vpop.permute.xlu0 %4242
      %4244 = vrot.lane.b32.xlu0 %v4181, 8
      %v4245 = vpop.permute.xlu0 %4244
      %4246 = vrot.lane.b32.xlu0 %v4183, 8
      %v4247 = vpop.permute.xlu0 %4246
      %vm4280 = vcmask 1045504
      %v4281 = vrot.slane %v4001, 2
      %v4282 = vrot.slane %v4002, 2
      %v4283 = vsel %vm4280, %v4281, %v4282
      %v4284 = vrot.slane %v4003, 2
      %v4285 = vsel %vm4280, %v4282, %v4284
      %v4286 = vrot.slane %v4004, 2
      %v4287 = vrot.slane %v4005, 2
      %v4288 = vsel %vm4280, %v4286, %v4287
      %v4289 = vrot.slane %v4006, 2
      %v4290 = vsel %vm4280, %v4287, %v4289
      %v4291 = vrot.slane %v4007, 2
      %v4292 = vrot.slane %v4008, 2
      %v4293 = vsel %vm4280, %v4291, %v4292
      %v4294 = vrot.slane %v4009, 2
      %v4295 = vsel %vm4280, %v4292, %v4294
      %v4296 = vrot.slane %v4010, 2
      %v4297 = vrot.slane %v4011, 2
      %v4298 = vsel %vm4280, %v4296, %v4297
      %v4299 = vrot.slane %v4012, 2
      %v4300 = vsel %vm4280, %v4297, %v4299
      %v4301 = vrot.slane %v4013, 2
      %v4302 = vrot.slane %v4014, 2
      %v4303 = vsel %vm4280, %v4301, %v4302
      %v4304 = vrot.slane %v4015, 2
      %v4305 = vsel %vm4280, %v4302, %v4304
      %v4306 = vrot.slane %v4016, 2
      %v4307 = vrot.slane %v4017, 2
      %v4308 = vsel %vm4280, %v4306, %v4307
      %v4309 = vrot.slane %v4018, 2
      %v4310 = vsel %vm4280, %v4307, %v4309
      %v4311 = vrot.slane %v4019, 2
      %v4312 = vrot.slane %v4020, 2
      %v4313 = vsel %vm4280, %v4311, %v4312
      %v4314 = vrot.slane %v4021, 2
      %v4315 = vsel %vm4280, %v4312, %v4314
      %v4316 = vrot.slane %v4022, 2
      %v4317 = vrot.slane %v4023, 2
      %v4318 = vsel %vm4280, %v4316, %v4317
      %v4319 = vrot.slane %v4024, 2
      %v4320 = vsel %vm4280, %v4317, %v4319
      %v4321 = vrot.slane %v4025, 2
      %v4322 = vrot.slane %v4026, 2
      %v4323 = vsel %vm4280, %v4321, %v4322
      %v4324 = vrot.slane %v4027, 2
      %v4325 = vsel %vm4280, %v4322, %v4324
      %v4326 = vrot.slane %v4028, 2
      %v4327 = vrot.slane %v4029, 2
      %v4328 = vsel %vm4280, %v4326, %v4327
      %v4329 = vrot.slane %v4030, 2
      %v4330 = vsel %vm4280, %v4327, %v4329
      %v4331 = vrot.slane %v4031, 2
      %v4332 = vrot.slane %v4032, 2
      %v4333 = vsel %vm4280, %v4331, %v4332
      %v4334 = vrot.slane %v4033, 2
      %v4335 = vsel %vm4280, %v4332, %v4334
      %v4336 = vrot.slane %v4034, 2
      %v4337 = vrot.slane %v4035, 2
      %v4338 = vsel %vm4280, %v4336, %v4337
      %v4339 = vrot.slane %v4036, 2
      %v4340 = vsel %vm4280, %v4337, %v4339
      %v4341 = vrot.slane %v4037, 2
      %v4342 = vrot.slane %v4038, 2
      %v4343 = vsel %vm4280, %v4341, %v4342
      %v4344 = vrot.slane %v4039, 2
      %v4345 = vsel %vm4280, %v4342, %v4344
      %v4346 = vrot.slane %v4040, 2
      %v4347 = vrot.slane %v4041, 2
      %v4348 = vsel %vm4280, %v4346, %v4347
      %v4349 = vrot.slane %v4042, 2
      %v4350 = vsel %vm4280, %v4347, %v4349
      %v4351 = vrot.slane %v4043, 2
      %v4352 = vrot.slane %v4044, 2
      %v4353 = vsel %vm4280, %v4351, %v4352
      %v4354 = vrot.slane %v4045, 2
      %v4355 = vsel %vm4280, %v4352, %v4354
      %v4356 = vrot.slane %v4046, 2
      %v4357 = vrot.slane %v4047, 2
      %v4358 = vsel %vm4280, %v4356, %v4357
      %v4359 = vrot.slane %v4048, 2
      %v4360 = vsel %vm4280, %v4357, %v4359
      %4361 = vrot.lane.b32.xlu0 %v4283, 16
      %v4362 = vpop.permute.xlu0 %4361
      %4363 = vrot.lane.b32.xlu0 %v4285, 16
      %v4364 = vpop.permute.xlu0 %4363
      %4365 = vrot.lane.b32.xlu0 %v4288, 16
      %v4366 = vpop.permute.xlu0 %4365
      %4367 = vrot.lane.b32.xlu0 %v4290, 16
      %v4368 = vpop.permute.xlu0 %4367
      %4369 = vrot.lane.b32.xlu0 %v4293, 16
      %v4370 = vpop.permute.xlu0 %4369
      %4371 = vrot.lane.b32.xlu0 %v4295, 16
      %v4372 = vpop.permute.xlu0 %4371
      %4373 = vrot.lane.b32.xlu0 %v4298, 16
      %v4374 = vpop.permute.xlu0 %4373
      %4375 = vrot.lane.b32.xlu0 %v4300, 16
      %v4376 = vpop.permute.xlu0 %4375
      %4377 = vrot.lane.b32.xlu0 %v4303, 16
      %v4378 = vpop.permute.xlu0 %4377
      %4379 = vrot.lane.b32.xlu0 %v4305, 16
      %v4380 = vpop.permute.xlu0 %4379
      %4381 = vrot.lane.b32.xlu0 %v4308, 16
      %v4382 = vpop.permute.xlu0 %4381
      %4383 = vrot.lane.b32.xlu0 %v4310, 16
      %v4384 = vpop.permute.xlu0 %4383
      %4385 = vrot.lane.b32.xlu0 %v4313, 16
      %v4386 = vpop.permute.xlu0 %4385
      %4387 = vrot.lane.b32.xlu0 %v4315, 16
      %v4388 = vpop.permute.xlu0 %4387
      %4389 = vrot.lane.b32.xlu0 %v4318, 16
      %v4390 = vpop.permute.xlu0 %4389
      %4391 = vrot.lane.b32.xlu0 %v4320, 16
      %v4392 = vpop.permute.xlu0 %4391
      %4393 = vrot.lane.b32.xlu0 %v4323, 16
      %v4394 = vpop.permute.xlu0 %4393
      %4395 = vrot.lane.b32.xlu0 %v4325, 16
      %v4396 = vpop.permute.xlu0 %4395
      %4397 = vrot.lane.b32.xlu0 %v4328, 16
      %v4398 = vpop.permute.xlu0 %4397
      %4399 = vrot.lane.b32.xlu0 %v4330, 16
      %v4400 = vpop.permute.xlu0 %4399
      %4401 = vrot.lane.b32.xlu0 %v4333, 16
      %v4402 = vpop.permute.xlu0 %4401
      %4403 = vrot.lane.b32.xlu0 %v4335, 16
      %v4404 = vpop.permute.xlu0 %4403
      %4405 = vrot.lane.b32.xlu0 %v4338, 16
      %v4406 = vpop.permute.xlu0 %4405
      %4407 = vrot.lane.b32.xlu0 %v4340, 16
      %v4408 = vpop.permute.xlu0 %4407
      %4409 = vrot.lane.b32.xlu0 %v4343, 16
      %v4410 = vpop.permute.xlu0 %4409
      %4411 = vrot.lane.b32.xlu0 %v4345, 16
      %v4412 = vpop.permute.xlu0 %4411
      %4413 = vrot.lane.b32.xlu0 %v4348, 16
      %v4414 = vpop.permute.xlu0 %4413
      %4415 = vrot.lane.b32.xlu0 %v4350, 16
      %v4416 = vpop.permute.xlu0 %4415
      %4417 = vrot.lane.b32.xlu0 %v4353, 16
      %v4418 = vpop.permute.xlu0 %4417
      %4419 = vrot.lane.b32.xlu0 %v4355, 16
      %v4420 = vpop.permute.xlu0 %4419
      %4421 = vrot.lane.b32.xlu0 %v4358, 16
      %v4422 = vpop.permute.xlu0 %4421
      %4423 = vrot.lane.b32.xlu0 %v4360, 16
      %v4424 = vpop.permute.xlu0 %4423
      %4459 = vrot.lane.b32.xlu0 %v4004, 24
      %v4460 = vpop.permute.xlu0 %4459
      %4461 = vrot.lane.b32.xlu0 %v4005, 24
      %v4462 = vpop.permute.xlu0 %4461
      %4463 = vrot.lane.b32.xlu0 %v4007, 24
      %v4464 = vpop.permute.xlu0 %4463
      %4465 = vrot.lane.b32.xlu0 %v4008, 24
      %v4466 = vpop.permute.xlu0 %4465
      %4467 = vrot.lane.b32.xlu0 %v4010, 24
      %v4468 = vpop.permute.xlu0 %4467
      %4469 = vrot.lane.b32.xlu0 %v4011, 24
      %v4470 = vpop.permute.xlu0 %4469
      %4471 = vrot.lane.b32.xlu0 %v4013, 24
      %v4472 = vpop.permute.xlu0 %4471
      %4473 = vrot.lane.b32.xlu0 %v4014, 24
      %v4474 = vpop.permute.xlu0 %4473
      %4475 = vrot.lane.b32.xlu0 %v4016, 24
      %v4476 = vpop.permute.xlu0 %4475
      %4477 = vrot.lane.b32.xlu0 %v4017, 24
      %v4478 = vpop.permute.xlu0 %4477
      %4479 = vrot.lane.b32.xlu0 %v4019, 24
      %v4480 = vpop.permute.xlu0 %4479
      %4481 = vrot.lane.b32.xlu0 %v4020, 24
      %v4482 = vpop.permute.xlu0 %4481
      %4483 = vrot.lane.b32.xlu0 %v4022, 24
      %v4484 = vpop.permute.xlu0 %4483
      %4485 = vrot.lane.b32.xlu0 %v4023, 24
      %v4486 = vpop.permute.xlu0 %4485
      %4487 = vrot.lane.b32.xlu0 %v4025, 24
      %v4488 = vpop.permute.xlu0 %4487
      %4489 = vrot.lane.b32.xlu0 %v4026, 24
      %v4490 = vpop.permute.xlu0 %4489
      %4491 = vrot.lane.b32.xlu0 %v4028, 24
      %v4492 = vpop.permute.xlu0 %4491
      %4493 = vrot.lane.b32.xlu0 %v4029, 24
      %v4494 = vpop.permute.xlu0 %4493
      %4495 = vrot.lane.b32.xlu0 %v4031, 24
      %v4496 = vpop.permute.xlu0 %4495
      %4497 = vrot.lane.b32.xlu0 %v4032, 24
      %v4498 = vpop.permute.xlu0 %4497
      %4499 = vrot.lane.b32.xlu0 %v4034, 24
      %v4500 = vpop.permute.xlu0 %4499
      %4501 = vrot.lane.b32.xlu0 %v4035, 24
      %v4502 = vpop.permute.xlu0 %4501
      %4503 = vrot.lane.b32.xlu0 %v4037, 24
      %v4504 = vpop.permute.xlu0 %4503
      %4505 = vrot.lane.b32.xlu0 %v4038, 24
      %v4506 = vpop.permute.xlu0 %4505
      %4507 = vrot.lane.b32.xlu0 %v4040, 24
      %v4508 = vpop.permute.xlu0 %4507
      %4509 = vrot.lane.b32.xlu0 %v4041, 24
      %v4510 = vpop.permute.xlu0 %4509
      %4511 = vrot.lane.b32.xlu0 %v4043, 24
      %v4512 = vpop.permute.xlu0 %4511
      %4513 = vrot.lane.b32.xlu0 %v4044, 24
      %v4514 = vpop.permute.xlu0 %4513
      %4515 = vrot.lane.b32.xlu0 %v4046, 24
      %v4516 = vpop.permute.xlu0 %4515
      %4517 = vrot.lane.b32.xlu0 %v4047, 24
      %v4518 = vpop.permute.xlu0 %4517
      %4519 = vrot.lane.b32.xlu0 %v4049, 24
      %v4520 = vpop.permute.xlu0 %4519
      %4521 = vrot.lane.b32.xlu0 %v4050, 24
      %v4522 = vpop.permute.xlu0 %4521
      %v4556 = vrot.slane %v4049, 1
      %v4557 = vrot.slane %v4050, 1
      %v4558 = vsel %vm4103, %v4556, %v4557
      %v4559 = vrot.slane %v4051, 1
      %v4560 = vsel %vm4103, %v4557, %v4559
      %4561 = vrot.lane.b32.xlu0 %v4111, 32
      %v4562 = vpop.permute.xlu0 %4561
      %4563 = vrot.lane.b32.xlu0 %v4113, 32
      %v4564 = vpop.permute.xlu0 %4563
      %4565 = vrot.lane.b32.xlu0 %v4116, 32
      %v4566 = vpop.permute.xlu0 %4565
      %4567 = vrot.lane.b32.xlu0 %v4118, 32
      %v4568 = vpop.permute.xlu0 %4567
      %4569 = vrot.lane.b32.xlu0 %v4121, 32
      %v4570 = vpop.permute.xlu0 %4569
      %4571 = vrot.lane.b32.xlu0 %v4123, 32
      %v4572 = vpop.permute.xlu0 %4571
      %4573 = vrot.lane.b32.xlu0 %v4126, 32
      %v4574 = vpop.permute.xlu0 %4573
      %4575 = vrot.lane.b32.xlu0 %v4128, 32
      %v4576 = vpop.permute.xlu0 %4575
      %4577 = vrot.lane.b32.xlu0 %v4131, 32
      %v4578 = vpop.permute.xlu0 %4577
      %4579 = vrot.lane.b32.xlu0 %v4133, 32
      %v4580 = vpop.permute.xlu0 %4579
      %4581 = vrot.lane.b32.xlu0 %v4136, 32
      %v4582 = vpop.permute.xlu0 %4581
      %4583 = vrot.lane.b32.xlu0 %v4138, 32
      %v4584 = vpop.permute.xlu0 %4583
      %4585 = vrot.lane.b32.xlu0 %v4141, 32
      %v4586 = vpop.permute.xlu0 %4585
      %4587 = vrot.lane.b32.xlu0 %v4143, 32
      %v4588 = vpop.permute.xlu0 %4587
      %4589 = vrot.lane.b32.xlu0 %v4146, 32
      %v4590 = vpop.permute.xlu0 %4589
      %4591 = vrot.lane.b32.xlu0 %v4148, 32
      %v4592 = vpop.permute.xlu0 %4591
      %4593 = vrot.lane.b32.xlu0 %v4151, 32
      %v4594 = vpop.permute.xlu0 %4593
      %4595 = vrot.lane.b32.xlu0 %v4153, 32
      %v4596 = vpop.permute.xlu0 %4595
      %4597 = vrot.lane.b32.xlu0 %v4156, 32
      %v4598 = vpop.permute.xlu0 %4597
      %4599 = vrot.lane.b32.xlu0 %v4158, 32
      %v4600 = vpop.permute.xlu0 %4599
      %4601 = vrot.lane.b32.xlu0 %v4161, 32
      %v4602 = vpop.permute.xlu0 %4601
      %4603 = vrot.lane.b32.xlu0 %v4163, 32
      %v4604 = vpop.permute.xlu0 %4603
      %4605 = vrot.lane.b32.xlu0 %v4166, 32
      %v4606 = vpop.permute.xlu0 %4605
      %4607 = vrot.lane.b32.xlu0 %v4168, 32
      %v4608 = vpop.permute.xlu0 %4607
      %4609 = vrot.lane.b32.xlu0 %v4171, 32
      %v4610 = vpop.permute.xlu0 %4609
      %4611 = vrot.lane.b32.xlu0 %v4173, 32
      %v4612 = vpop.permute.xlu0 %4611
      %4613 = vrot.lane.b32.xlu0 %v4176, 32
      %v4614 = vpop.permute.xlu0 %4613
      %4615 = vrot.lane.b32.xlu0 %v4178, 32
      %v4616 = vpop.permute.xlu0 %4615
      %4617 = vrot.lane.b32.xlu0 %v4181, 32
      %v4618 = vpop.permute.xlu0 %4617
      %4619 = vrot.lane.b32.xlu0 %v4183, 32
      %v4620 = vpop.permute.xlu0 %4619
      %4621 = vrot.lane.b32.xlu0 %v4558, 32
      %v4622 = vpop.permute.xlu0 %4621
      %4623 = vrot.lane.b32.xlu0 %v4560, 32
      %v4624 = vpop.permute.xlu0 %4623
      %v4657 = vrot.slane %v4049, 2
      %v4658 = vrot.slane %v4050, 2
      %v4659 = vsel %vm4280, %v4657, %v4658
      %v4660 = vrot.slane %v4051, 2
      %v4661 = vsel %vm4280, %v4658, %v4660
      %4662 = vrot.lane.b32.xlu0 %v4288, 40
      %v4663 = vpop.permute.xlu0 %4662
      %4664 = vrot.lane.b32.xlu0 %v4290, 40
      %v4665 = vpop.permute.xlu0 %4664
      %4666 = vrot.lane.b32.xlu0 %v4293, 40
      %v4667 = vpop.permute.xlu0 %4666
      %4668 = vrot.lane.b32.xlu0 %v4295, 40
      %v4669 = vpop.permute.xlu0 %4668
      %4670 = vrot.lane.b32.xlu0 %v4298, 40
      %v4671 = vpop.permute.xlu0 %4670
      %4672 = vrot.lane.b32.xlu0 %v4300, 40
      %v4673 = vpop.permute.xlu0 %4672
      %4674 = vrot.lane.b32.xlu0 %v4303, 40
      %v4675 = vpop.permute.xlu0 %4674
      %4676 = vrot.lane.b32.xlu0 %v4305, 40
      %v4677 = vpop.permute.xlu0 %4676
      %4678 = vrot.lane.b32.xlu0 %v4308, 40
      %v4679 = vpop.permute.xlu0 %4678
      %4680 = vrot.lane.b32.xlu0 %v4310, 40
      %v4681 = vpop.permute.xlu0 %4680
      %4682 = vrot.lane.b32.xlu0 %v4313, 40
      %v4683 = vpop.permute.xlu0 %4682
      %4684 = vrot.lane.b32.xlu0 %v4315, 40
      %v4685 = vpop.permute.xlu0 %4684
      %4686 = vrot.lane.b32.xlu0 %v4318, 40
      %v4687 = vpop.permute.xlu0 %4686
      %4688 = vrot.lane.b32.xlu0 %v4320, 40
      %v4689 = vpop.permute.xlu0 %4688
      %4690 = vrot.lane.b32.xlu0 %v4323, 40
      %v4691 = vpop.permute.xlu0 %4690
      %4692 = vrot.lane.b32.xlu0 %v4325, 40
      %v4693 = vpop.permute.xlu0 %4692
      %4694 = vrot.lane.b32.xlu0 %v4328, 40
      %v4695 = vpop.permute.xlu0 %4694
      %4696 = vrot.lane.b32.xlu0 %v4330, 40
      %v4697 = vpop.permute.xlu0 %4696
      %4698 = vrot.lane.b32.xlu0 %v4333, 40
      %v4699 = vpop.permute.xlu0 %4698
      %4700 = vrot.lane.b32.xlu0 %v4335, 40
      %v4701 = vpop.permute.xlu0 %4700
      %4702 = vrot.lane.b32.xlu0 %v4338, 40
      %v4703 = vpop.permute.xlu0 %4702
      %4704 = vrot.lane.b32.xlu0 %v4340, 40
      %v4705 = vpop.permute.xlu0 %4704
      %4706 = vrot.lane.b32.xlu0 %v4343, 40
      %v4707 = vpop.permute.xlu0 %4706
      %4708 = vrot.lane.b32.xlu0 %v4345, 40
      %v4709 = vpop.permute.xlu0 %4708
      %4710 = vrot.lane.b32.xlu0 %v4348, 40
      %v4711 = vpop.permute.xlu0 %4710
      %4712 = vrot.lane.b32.xlu0 %v4350, 40
      %v4713 = vpop.permute.xlu0 %4712
      %4714 = vrot.lane.b32.xlu0 %v4353, 40
      %v4715 = vpop.permute.xlu0 %4714
      %4716 = vrot.lane.b32.xlu0 %v4355, 40
      %v4717 = vpop.permute.xlu0 %4716
      %4718 = vrot.lane.b32.xlu0 %v4358, 40
      %v4719 = vpop.permute.xlu0 %4718
      %4720 = vrot.lane.b32.xlu0 %v4360, 40
      %v4721 = vpop.permute.xlu0 %4720
      %4722 = vrot.lane.b32.xlu0 %v4659, 40
      %v4723 = vpop.permute.xlu0 %4722
      %4724 = vrot.lane.b32.xlu0 %v4661, 40
      %v4725 = vpop.permute.xlu0 %4724
      %4760 = vrot.lane.b32.xlu0 %v4007, 48
      %v4761 = vpop.permute.xlu0 %4760
      %4762 = vrot.lane.b32.xlu0 %v4008, 48
      %v4763 = vpop.permute.xlu0 %4762
      %4764 = vrot.lane.b32.xlu0 %v4010, 48
      %v4765 = vpop.permute.xlu0 %4764
      %4766 = vrot.lane.b32.xlu0 %v4011, 48
      %v4767 = vpop.permute.xlu0 %4766
      %4768 = vrot.lane.b32.xlu0 %v4013, 48
      %v4769 = vpop.permute.xlu0 %4768
      %4770 = vrot.lane.b32.xlu0 %v4014, 48
      %v4771 = vpop.permute.xlu0 %4770
      %4772 = vrot.lane.b32.xlu0 %v4016, 48
      %v4773 = vpop.permute.xlu0 %4772
      %4774 = vrot.lane.b32.xlu0 %v4017, 48
      %v4775 = vpop.permute.xlu0 %4774
      %4776 = vrot.lane.b32.xlu0 %v4019, 48
      %v4777 = vpop.permute.xlu0 %4776
      %4778 = vrot.lane.b32.xlu0 %v4020, 48
      %v4779 = vpop.permute.xlu0 %4778
      %4780 = vrot.lane.b32.xlu0 %v4022, 48
      %v4781 = vpop.permute.xlu0 %4780
      %4782 = vrot.lane.b32.xlu0 %v4023, 48
      %v4783 = vpop.permute.xlu0 %4782
      %4784 = vrot.lane.b32.xlu0 %v4025, 48
      %v4785 = vpop.permute.xlu0 %4784
      %4786 = vrot.lane.b32.xlu0 %v4026, 48
      %v4787 = vpop.permute.xlu0 %4786
      %4788 = vrot.lane.b32.xlu0 %v4028, 48
      %v4789 = vpop.permute.xlu0 %4788
      %4790 = vrot.lane.b32.xlu0 %v4029, 48
      %v4791 = vpop.permute.xlu0 %4790
      %4792 = vrot.lane.b32.xlu0 %v4031, 48
      %v4793 = vpop.permute.xlu0 %4792
      %4794 = vrot.lane.b32.xlu0 %v4032, 48
      %v4795 = vpop.permute.xlu0 %4794
      %4796 = vrot.lane.b32.xlu0 %v4034, 48
      %v4797 = vpop.permute.xlu0 %4796
      %4798 = vrot.lane.b32.xlu0 %v4035, 48
      %v4799 = vpop.permute.xlu0 %4798
      %4800 = vrot.lane.b32.xlu0 %v4037, 48
      %v4801 = vpop.permute.xlu0 %4800
      %4802 = vrot.lane.b32.xlu0 %v4038, 48
      %v4803 = vpop.permute.xlu0 %4802
      %4804 = vrot.lane.b32.xlu0 %v4040, 48
      %v4805 = vpop.permute.xlu0 %4804
      %4806 = vrot.lane.b32.xlu0 %v4041, 48
      %v4807 = vpop.permute.xlu0 %4806
      %4808 = vrot.lane.b32.xlu0 %v4043, 48
      %v4809 = vpop.permute.xlu0 %4808
      %4810 = vrot.lane.b32.xlu0 %v4044, 48
      %v4811 = vpop.permute.xlu0 %4810
      %4812 = vrot.lane.b32.xlu0 %v4046, 48
      %v4813 = vpop.permute.xlu0 %4812
      %4814 = vrot.lane.b32.xlu0 %v4047, 48
      %v4815 = vpop.permute.xlu0 %4814
      %4816 = vrot.lane.b32.xlu0 %v4049, 48
      %v4817 = vpop.permute.xlu0 %4816
      %4818 = vrot.lane.b32.xlu0 %v4050, 48
      %v4819 = vpop.permute.xlu0 %4818
      %4820 = vrot.lane.b32.xlu0 %v4052, 48
      %v4821 = vpop.permute.xlu0 %4820
      %4822 = vrot.lane.b32.xlu0 %v4053, 48
      %v4823 = vpop.permute.xlu0 %4822
      %v4857 = vrot.slane %v4052, 1
      %v4858 = vrot.slane %v4053, 1
      %v4859 = vsel %vm4103, %v4857, %v4858
      %v4860 = vrot.slane %v4054, 1
      %v4861 = vsel %vm4103, %v4858, %v4860
      %4862 = vrot.lane.b32.xlu0 %v4116, 56
      %v4863 = vpop.permute.xlu0 %4862
      %4864 = vrot.lane.b32.xlu0 %v4118, 56
      %v4865 = vpop.permute.xlu0 %4864
      %4866 = vrot.lane.b32.xlu0 %v4121, 56
      %v4867 = vpop.permute.xlu0 %4866
      %4868 = vrot.lane.b32.xlu0 %v4123, 56
      %v4869 = vpop.permute.xlu0 %4868
      %4870 = vrot.lane.b32.xlu0 %v4126, 56
      %v4871 = vpop.permute.xlu0 %4870
      %4872 = vrot.lane.b32.xlu0 %v4128, 56
      %v4873 = vpop.permute.xlu0 %4872
      %4874 = vrot.lane.b32.xlu0 %v4131, 56
      %v4875 = vpop.permute.xlu0 %4874
      %4876 = vrot.lane.b32.xlu0 %v4133, 56
      %v4877 = vpop.permute.xlu0 %4876
      %4878 = vrot.lane.b32.xlu0 %v4136, 56
      %v4879 = vpop.permute.xlu0 %4878
      %4880 = vrot.lane.b32.xlu0 %v4138, 56
      %v4881 = vpop.permute.xlu0 %4880
      %4882 = vrot.lane.b32.xlu0 %v4141, 56
      %v4883 = vpop.permute.xlu0 %4882
      %4884 = vrot.lane.b32.xlu0 %v4143, 56
      %v4885 = vpop.permute.xlu0 %4884
      %4886 = vrot.lane.b32.xlu0 %v4146, 56
      %v4887 = vpop.permute.xlu0 %4886
      %4888 = vrot.lane.b32.xlu0 %v4148, 56
      %v4889 = vpop.permute.xlu0 %4888
      %4890 = vrot.lane.b32.xlu0 %v4151, 56
      %v4891 = vpop.permute.xlu0 %4890
      %4892 = vrot.lane.b32.xlu0 %v4153, 56
      %v4893 = vpop.permute.xlu0 %4892
      %4894 = vrot.lane.b32.xlu0 %v4156, 56
      %v4895 = vpop.permute.xlu0 %4894
      %4896 = vrot.lane.b32.xlu0 %v4158, 56
      %v4897 = vpop.permute.xlu0 %4896
      %4898 = vrot.lane.b32.xlu0 %v4161, 56
      %v4899 = vpop.permute.xlu0 %4898
      %4900 = vrot.lane.b32.xlu0 %v4163, 56
      %v4901 = vpop.permute.xlu0 %4900
      %4902 = vrot.lane.b32.xlu0 %v4166, 56
      %v4903 = vpop.permute.xlu0 %4902
      %4904 = vrot.lane.b32.xlu0 %v4168, 56
      %v4905 = vpop.permute.xlu0 %4904
      %4906 = vrot.lane.b32.xlu0 %v4171, 56
      %v4907 = vpop.permute.xlu0 %4906
      %4908 = vrot.lane.b32.xlu0 %v4173, 56
      %v4909 = vpop.permute.xlu0 %4908
      %4910 = vrot.lane.b32.xlu0 %v4176, 56
      %v4911 = vpop.permute.xlu0 %4910
      %4912 = vrot.lane.b32.xlu0 %v4178, 56
      %v4913 = vpop.permute.xlu0 %4912
      %4914 = vrot.lane.b32.xlu0 %v4181, 56
      %v4915 = vpop.permute.xlu0 %4914
      %4916 = vrot.lane.b32.xlu0 %v4183, 56
      %v4917 = vpop.permute.xlu0 %4916
      %4918 = vrot.lane.b32.xlu0 %v4558, 56
      %v4919 = vpop.permute.xlu0 %4918
      %4920 = vrot.lane.b32.xlu0 %v4560, 56
      %v4921 = vpop.permute.xlu0 %4920
      %4922 = vrot.lane.b32.xlu0 %v4859, 56
      %v4923 = vpop.permute.xlu0 %4922
      %4924 = vrot.lane.b32.xlu0 %v4861, 56
      %v4925 = vpop.permute.xlu0 %4924
      %v4958 = vrot.slane %v4052, 2
      %v4959 = vrot.slane %v4053, 2
      %v4960 = vsel %vm4280, %v4958, %v4959
      %v4961 = vrot.slane %v4054, 2
      %v4962 = vsel %vm4280, %v4959, %v4961
      %4963 = vrot.lane.b32.xlu0 %v4293, 64
      %v4964 = vpop.permute.xlu0 %4963
      %4965 = vrot.lane.b32.xlu0 %v4295, 64
      %v4966 = vpop.permute.xlu0 %4965
      %4967 = vrot.lane.b32.xlu0 %v4298, 64
      %v4968 = vpop.permute.xlu0 %4967
      %4969 = vrot.lane.b32.xlu0 %v4300, 64
      %v4970 = vpop.permute.xlu0 %4969
      %4971 = vrot.lane.b32.xlu0 %v4303, 64
      %v4972 = vpop.permute.xlu0 %4971
      %4973 = vrot.lane.b32.xlu0 %v4305, 64
      %v4974 = vpop.permute.xlu0 %4973
      %4975 = vrot.lane.b32.xlu0 %v4308, 64
      %v4976 = vpop.permute.xlu0 %4975
      %4977 = vrot.lane.b32.xlu0 %v4310, 64
      %v4978 = vpop.permute.xlu0 %4977
      %4979 = vrot.lane.b32.xlu0 %v4313, 64
      %v4980 = vpop.permute.xlu0 %4979
      %4981 = vrot.lane.b32.xlu0 %v4315, 64
      %v4982 = vpop.permute.xlu0 %4981
      %4983 = vrot.lane.b32.xlu0 %v4318, 64
      %v4984 = vpop.permute.xlu0 %4983
      %4985 = vrot.lane.b32.xlu0 %v4320, 64
      %v4986 = vpop.permute.xlu0 %4985
      %4987 = vrot.lane.b32.xlu0 %v4323, 64
      %v4988 = vpop.permute.xlu0 %4987
      %4989 = vrot.lane.b32.xlu0 %v4325, 64
      %v4990 = vpop.permute.xlu0 %4989
      %4991 = vrot.lane.b32.xlu0 %v4328, 64
      %v4992 = vpop.permute.xlu0 %4991
      %4993 = vrot.lane.b32.xlu0 %v4330, 64
      %v4994 = vpop.permute.xlu0 %4993
      %4995 = vrot.lane.b32.xlu0 %v4333, 64
      %v4996 = vpop.permute.xlu0 %4995
      %4997 = vrot.lane.b32.xlu0 %v4335, 64
      %v4998 = vpop.permute.xlu0 %4997
      %4999 = vrot.lane.b32.xlu0 %v4338, 64
      %v5000 = vpop.permute.xlu0 %4999
      %5001 = vrot.lane.b32.xlu0 %v4340, 64
      %v5002 = vpop.permute.xlu0 %5001
      %5003 = vrot.lane.b32.xlu0 %v4343, 64
      %v5004 = vpop.permute.xlu0 %5003
      %5005 = vrot.lane.b32.xlu0 %v4345, 64
      %v5006 = vpop.permute.xlu0 %5005
      %5007 = vrot.lane.b32.xlu0 %v4348, 64
      %v5008 = vpop.permute.xlu0 %5007
      %5009 = vrot.lane.b32.xlu0 %v4350, 64
      %v5010 = vpop.permute.xlu0 %5009
      %5011 = vrot.lane.b32.xlu0 %v4353, 64
      %v5012 = vpop.permute.xlu0 %5011
      %5013 = vrot.lane.b32.xlu0 %v4355, 64
      %v5014 = vpop.permute.xlu0 %5013
      %5015 = vrot.lane.b32.xlu0 %v4358, 64
      %v5016 = vpop.permute.xlu0 %5015
      %5017 = vrot.lane.b32.xlu0 %v4360, 64
      %v5018 = vpop.permute.xlu0 %5017
      %5019 = vrot.lane.b32.xlu0 %v4659, 64
      %v5020 = vpop.permute.xlu0 %5019
      %5021 = vrot.lane.b32.xlu0 %v4661, 64
      %v5022 = vpop.permute.xlu0 %5021
      %5023 = vrot.lane.b32.xlu0 %v4960, 64
      %v5024 = vpop.permute.xlu0 %5023
      %5025 = vrot.lane.b32.xlu0 %v4962, 64
      %v5026 = vpop.permute.xlu0 %5025
      %v5059 = vsel %vm1788, %v4001, %v4185
      %v5060 = vsel %vm1788, %v4002, %v4187
      %v5061 = vsel %vm1788, %v4004, %v4189
      %v5062 = vsel %vm1788, %v4005, %v4191
      %v5063 = vsel %vm1788, %v4007, %v4193
      %v5064 = vsel %vm1788, %v4008, %v4195
      %v5065 = vsel %vm1788, %v4010, %v4197
      %v5066 = vsel %vm1788, %v4011, %v4199
      %v5067 = vsel %vm1788, %v4013, %v4201
      %v5068 = vsel %vm1788, %v4014, %v4203
      %v5069 = vsel %vm1788, %v4016, %v4205
      %v5070 = vsel %vm1788, %v4017, %v4207
      %v5071 = vsel %vm1788, %v4019, %v4209
      %v5072 = vsel %vm1788, %v4020, %v4211
      %v5073 = vsel %vm1788, %v4022, %v4213
      %v5074 = vsel %vm1788, %v4023, %v4215
      %v5075 = vsel %vm1788, %v4025, %v4217
      %v5076 = vsel %vm1788, %v4026, %v4219
      %v5077 = vsel %vm1788, %v4028, %v4221
      %v5078 = vsel %vm1788, %v4029, %v4223
      %v5079 = vsel %vm1788, %v4031, %v4225
      %v5080 = vsel %vm1788, %v4032, %v4227
      %v5081 = vsel %vm1788, %v4034, %v4229
      %v5082 = vsel %vm1788, %v4035, %v4231
      %v5083 = vsel %vm1788, %v4037, %v4233
      %v5084 = vsel %vm1788, %v4038, %v4235
      %v5085 = vsel %vm1788, %v4040, %v4237
      %v5086 = vsel %vm1788, %v4041, %v4239
      %v5087 = vsel %vm1788, %v4043, %v4241
      %v5088 = vsel %vm1788, %v4044, %v4243
      %v5089 = vsel %vm1788, %v4046, %v4245
      %v5090 = vsel %vm1788, %v4047, %v4247
      %vm5091 = vcmask 130048
      %v5092 = vsel %vm5091, %v5059, %v4362
      %v5093 = vsel %vm5091, %v5060, %v4364
      %v5094 = vsel %vm5091, %v5061, %v4366
      %v5095 = vsel %vm5091, %v5062, %v4368
      %v5096 = vsel %vm5091, %v5063, %v4370
      %v5097 = vsel %vm5091, %v5064, %v4372
      %v5098 = vsel %vm5091, %v5065, %v4374
      %v5099 = vsel %vm5091, %v5066, %v4376
      %v5100 = vsel %vm5091, %v5067, %v4378
      %v5101 = vsel %vm5091, %v5068, %v4380
      %v5102 = vsel %vm5091, %v5069, %v4382
      %v5103 = vsel %vm5091, %v5070, %v4384
      %v5104 = vsel %vm5091, %v5071, %v4386
      %v5105 = vsel %vm5091, %v5072, %v4388
      %v5106 = vsel %vm5091, %v5073, %v4390
      %v5107 = vsel %vm5091, %v5074, %v4392
      %v5108 = vsel %vm5091, %v5075, %v4394
      %v5109 = vsel %vm5091, %v5076, %v4396
      %v5110 = vsel %vm5091, %v5077, %v4398
      %v5111 = vsel %vm5091, %v5078, %v4400
      %v5112 = vsel %vm5091, %v5079, %v4402
      %v5113 = vsel %vm5091, %v5080, %v4404
      %v5114 = vsel %vm5091, %v5081, %v4406
      %v5115 = vsel %vm5091, %v5082, %v4408
      %v5116 = vsel %vm5091, %v5083, %v4410
      %v5117 = vsel %vm5091, %v5084, %v4412
      %v5118 = vsel %vm5091, %v5085, %v4414
      %v5119 = vsel %vm5091, %v5086, %v4416
      %v5120 = vsel %vm5091, %v5087, %v4418
      %v5121 = vsel %vm5091, %v5088, %v4420
      %v5122 = vsel %vm5091, %v5089, %v4422
      %v5123 = vsel %vm5091, %v5090, %v4424
      %vm5124 = vcmask 195584
      %v5125 = vsel %vm5124, %v5092, %v4460
      %v5126 = vsel %vm5124, %v5093, %v4462
      %v5127 = vsel %vm5124, %v5094, %v4464
      %v5128 = vsel %vm5124, %v5095, %v4466
      %v5129 = vsel %vm5124, %v5096, %v4468
      %v5130 = vsel %vm5124, %v5097, %v4470
      %v5131 = vsel %vm5124, %v5098, %v4472
      %v5132 = vsel %vm5124, %v5099, %v4474
      %v5133 = vsel %vm5124, %v5100, %v4476
      %v5134 = vsel %vm5124, %v5101, %v4478
      %v5135 = vsel %vm5124, %v5102, %v4480
      %v5136 = vsel %vm5124, %v5103, %v4482
      %v5137 = vsel %vm5124, %v5104, %v4484
      %v5138 = vsel %vm5124, %v5105, %v4486
      %v5139 = vsel %vm5124, %v5106, %v4488
      %v5140 = vsel %vm5124, %v5107, %v4490
      %v5141 = vsel %vm5124, %v5108, %v4492
      %v5142 = vsel %vm5124, %v5109, %v4494
      %v5143 = vsel %vm5124, %v5110, %v4496
      %v5144 = vsel %vm5124, %v5111, %v4498
      %v5145 = vsel %vm5124, %v5112, %v4500
      %v5146 = vsel %vm5124, %v5113, %v4502
      %v5147 = vsel %vm5124, %v5114, %v4504
      %v5148 = vsel %vm5124, %v5115, %v4506
      %v5149 = vsel %vm5124, %v5116, %v4508
      %v5150 = vsel %vm5124, %v5117, %v4510
      %v5151 = vsel %vm5124, %v5118, %v4512
      %v5152 = vsel %vm5124, %v5119, %v4514
      %v5153 = vsel %vm5124, %v5120, %v4516
      %v5154 = vsel %vm5124, %v5121, %v4518
      %v5155 = vsel %vm5124, %v5122, %v4520
      %v5156 = vsel %vm5124, %v5123, %v4522
      %vm5157 = vcmask 261120
      %v5158 = vsel %vm5157, %v5125, %v4562
      %v5159 = vsel %vm5157, %v5126, %v4564
      %v5160 = vsel %vm5157, %v5127, %v4566
      %v5161 = vsel %vm5157, %v5128, %v4568
      %v5162 = vsel %vm5157, %v5129, %v4570
      %v5163 = vsel %vm5157, %v5130, %v4572
      %v5164 = vsel %vm5157, %v5131, %v4574
      %v5165 = vsel %vm5157, %v5132, %v4576
      %v5166 = vsel %vm5157, %v5133, %v4578
      %v5167 = vsel %vm5157, %v5134, %v4580
      %v5168 = vsel %vm5157, %v5135, %v4582
      %v5169 = vsel %vm5157, %v5136, %v4584
      %v5170 = vsel %vm5157, %v5137, %v4586
      %v5171 = vsel %vm5157, %v5138, %v4588
      %v5172 = vsel %vm5157, %v5139, %v4590
      %v5173 = vsel %vm5157, %v5140, %v4592
      %v5174 = vsel %vm5157, %v5141, %v4594
      %v5175 = vsel %vm5157, %v5142, %v4596
      %v5176 = vsel %vm5157, %v5143, %v4598
      %v5177 = vsel %vm5157, %v5144, %v4600
      %v5178 = vsel %vm5157, %v5145, %v4602
      %v5179 = vsel %vm5157, %v5146, %v4604
      %v5180 = vsel %vm5157, %v5147, %v4606
      %v5181 = vsel %vm5157, %v5148, %v4608
      %v5182 = vsel %vm5157, %v5149, %v4610
      %v5183 = vsel %vm5157, %v5150, %v4612
      %v5184 = vsel %vm5157, %v5151, %v4614
      %v5185 = vsel %vm5157, %v5152, %v4616
      %v5186 = vsel %vm5157, %v5153, %v4618
      %v5187 = vsel %vm5157, %v5154, %v4620
      %v5188 = vsel %vm5157, %v5155, %v4622
      %v5189 = vsel %vm5157, %v5156, %v4624
      %vm5190 = vcmask 326656
      %v5191 = vsel %vm5190, %v5158, %v4663
      %v5192 = vsel %vm5190, %v5159, %v4665
      %v5193 = vsel %vm5190, %v5160, %v4667
      %v5194 = vsel %vm5190, %v5161, %v4669
      %v5195 = vsel %vm5190, %v5162, %v4671
      %v5196 = vsel %vm5190, %v5163, %v4673
      %v5197 = vsel %vm5190, %v5164, %v4675
      %v5198 = vsel %vm5190, %v5165, %v4677
      %v5199 = vsel %vm5190, %v5166, %v4679
      %v5200 = vsel %vm5190, %v5167, %v4681
      %v5201 = vsel %vm5190, %v5168, %v4683
      %v5202 = vsel %vm5190, %v5169, %v4685
      %v5203 = vsel %vm5190, %v5170, %v4687
      %v5204 = vsel %vm5190, %v5171, %v4689
      %v5205 = vsel %vm5190, %v5172, %v4691
      %v5206 = vsel %vm5190, %v5173, %v4693
      %v5207 = vsel %vm5190, %v5174, %v4695
      %v5208 = vsel %vm5190, %v5175, %v4697
      %v5209 = vsel %vm5190, %v5176, %v4699
      %v5210 = vsel %vm5190, %v5177, %v4701
      %v5211 = vsel %vm5190, %v5178, %v4703
      %v5212 = vsel %vm5190, %v5179, %v4705
      %v5213 = vsel %vm5190, %v5180, %v4707
      %v5214 = vsel %vm5190, %v5181, %v4709
      %v5215 = vsel %vm5190, %v5182, %v4711
      %v5216 = vsel %vm5190, %v5183, %v4713
      %v5217 = vsel %vm5190, %v5184, %v4715
      %v5218 = vsel %vm5190, %v5185, %v4717
      %v5219 = vsel %vm5190, %v5186, %v4719
      %v5220 = vsel %vm5190, %v5187, %v4721
      %v5221 = vsel %vm5190, %v5188, %v4723
      %v5222 = vsel %vm5190, %v5189, %v4725
      %vm5223 = vcmask 392192
      %v5224 = vsel %vm5223, %v5191, %v4761
      %v5225 = vsel %vm5223, %v5192, %v4763
      %v5226 = vsel %vm5223, %v5193, %v4765
      %v5227 = vsel %vm5223, %v5194, %v4767
      %v5228 = vsel %vm5223, %v5195, %v4769
      %v5229 = vsel %vm5223, %v5196, %v4771
      %v5230 = vsel %vm5223, %v5197, %v4773
      %v5231 = vsel %vm5223, %v5198, %v4775
      %v5232 = vsel %vm5223, %v5199, %v4777
      %v5233 = vsel %vm5223, %v5200, %v4779
      %v5234 = vsel %vm5223, %v5201, %v4781
      %v5235 = vsel %vm5223, %v5202, %v4783
      %v5236 = vsel %vm5223, %v5203, %v4785
      %v5237 = vsel %vm5223, %v5204, %v4787
      %v5238 = vsel %vm5223, %v5205, %v4789
      %v5239 = vsel %vm5223, %v5206, %v4791
      %v5240 = vsel %vm5223, %v5207, %v4793
      %v5241 = vsel %vm5223, %v5208, %v4795
      %v5242 = vsel %vm5223, %v5209, %v4797
      %v5243 = vsel %vm5223, %v5210, %v4799
      %v5244 = vsel %vm5223, %v5211, %v4801
      %v5245 = vsel %vm5223, %v5212, %v4803
      %v5246 = vsel %vm5223, %v5213, %v4805
      %v5247 = vsel %vm5223, %v5214, %v4807
      %v5248 = vsel %vm5223, %v5215, %v4809
      %v5249 = vsel %vm5223, %v5216, %v4811
      %v5250 = vsel %vm5223, %v5217, %v4813
      %v5251 = vsel %vm5223, %v5218, %v4815
      %v5252 = vsel %vm5223, %v5219, %v4817
      %v5253 = vsel %vm5223, %v5220, %v4819
      %v5254 = vsel %vm5223, %v5221, %v4821
      %v5255 = vsel %vm5223, %v5222, %v4823
      %vm5256 = vcmask 457728
      %v5257 = vsel %vm5256, %v5224, %v4863
      %v5258 = vsel %vm5256, %v5225, %v4865
      %v5259 = vsel %vm5256, %v5226, %v4867
      %v5260 = vsel %vm5256, %v5227, %v4869
      %v5261 = vsel %vm5256, %v5228, %v4871
      %v5262 = vsel %vm5256, %v5229, %v4873
      %v5263 = vsel %vm5256, %v5230, %v4875
      %v5264 = vsel %vm5256, %v5231, %v4877
      %v5265 = vsel %vm5256, %v5232, %v4879
      %v5266 = vsel %vm5256, %v5233, %v4881
      %v5267 = vsel %vm5256, %v5234, %v4883
      %v5268 = vsel %vm5256, %v5235, %v4885
      %v5269 = vsel %vm5256, %v5236, %v4887
      %v5270 = vsel %vm5256, %v5237, %v4889
      %v5271 = vsel %vm5256, %v5238, %v4891
      %v5272 = vsel %vm5256, %v5239, %v4893
      %v5273 = vsel %vm5256, %v5240, %v4895
      %v5274 = vsel %vm5256, %v5241, %v4897
      %v5275 = vsel %vm5256, %v5242, %v4899
      %v5276 = vsel %vm5256, %v5243, %v4901
      %v5277 = vsel %vm5256, %v5244, %v4903
      %v5278 = vsel %vm5256, %v5245, %v4905
      %v5279 = vsel %vm5256, %v5246, %v4907
      %v5280 = vsel %vm5256, %v5247, %v4909
      %v5281 = vsel %vm5256, %v5248, %v4911
      %v5282 = vsel %vm5256, %v5249, %v4913
      %v5283 = vsel %vm5256, %v5250, %v4915
      %v5284 = vsel %vm5256, %v5251, %v4917
      %v5285 = vsel %vm5256, %v5252, %v4919
      %v5286 = vsel %vm5256, %v5253, %v4921
      %v5287 = vsel %vm5256, %v5254, %v4923
      %v5288 = vsel %vm5256, %v5255, %v4925
      %vm5289 = vcmask 523264
      %v5290 = vsel %vm5289, %v5257, %v4964
      %v5291 = vsel %vm5289, %v5258, %v4966
      %v5292 = vsel %vm5289, %v5259, %v4968
      %v5293 = vsel %vm5289, %v5260, %v4970
      %v5294 = vsel %vm5289, %v5261, %v4972
      %v5295 = vsel %vm5289, %v5262, %v4974
      %v5296 = vsel %vm5289, %v5263, %v4976
      %v5297 = vsel %vm5289, %v5264, %v4978
      %v5298 = vsel %vm5289, %v5265, %v4980
      %v5299 = vsel %vm5289, %v5266, %v4982
      %v5300 = vsel %vm5289, %v5267, %v4984
      %v5301 = vsel %vm5289, %v5268, %v4986
      %v5302 = vsel %vm5289, %v5269, %v4988
      %v5303 = vsel %vm5289, %v5270, %v4990
      %v5304 = vsel %vm5289, %v5271, %v4992
      %v5305 = vsel %vm5289, %v5272, %v4994
      %v5306 = vsel %vm5289, %v5273, %v4996
      %v5307 = vsel %vm5289, %v5274, %v4998
      %v5308 = vsel %vm5289, %v5275, %v5000
      %v5309 = vsel %vm5289, %v5276, %v5002
      %v5310 = vsel %vm5289, %v5277, %v5004
      %v5311 = vsel %vm5289, %v5278, %v5006
      %v5312 = vsel %vm5289, %v5279, %v5008
      %v5313 = vsel %vm5289, %v5280, %v5010
      %v5314 = vsel %vm5289, %v5281, %v5012
      %v5315 = vsel %vm5289, %v5282, %v5014
      %v5316 = vsel %vm5289, %v5283, %v5016
      %v5317 = vsel %vm5289, %v5284, %v5018
      %v5318 = vsel %vm5289, %v5285, %v5020
      %v5319 = vsel %vm5289, %v5286, %v5022
      %v5320 = vsel %vm5289, %v5287, %v5024
      %v5321 = vsel %vm5289, %v5288, %v5026
      %v5322 = vld [vmem:[%s3] sm:$0xff]
      %v5323 = vld [vmem:[%s3 + $0x8] sm:$0xff]
      %v5324 = vld [vmem:[%s3 + $0x10] sm:$0xff]
      %v5325 = vld [vmem:[%s3 + $0x18] sm:$0xff]
      %v5326 = vld [vmem:[%s3 + $0x20] sm:$0xff]
      %v5327 = vld [vmem:[%s3 + $0x28] sm:$0xff]
      %v5328 = vld [vmem:[%s3 + $0x30] sm:$0xff]
      %v5329 = vld [vmem:[%s3 + $0x38] sm:$0xff]
      %v5330 = vld [vmem:[%s3 + $0x40] sm:$0xff]
      %v5331 = vld [vmem:[%s4] sm:$0x1]
      %v5333 = vlaneseq
      %v5334 = vshrl.u32 %v5333, 7
      %v5335 = vsub.s32 0, %v5334
      %v5336 = vrot.slane %v5331, %v5335
      %vm5338 = vcmask 588800
      %v5340 = vsel %vm5338, %v5290, 0
      %v5343 = vsel %vm5338, %v5291, 0
      %v5346 = vsel %vm5338, %v5292, 0
      %v5349 = vsel %vm5338, %v5293, 0
      %v5352 = vsel %vm5338, %v5294, 0
      %v5355 = vsel %vm5338, %v5295, 0
      %v5358 = vsel %vm5338, %v5296, 0
      %v5361 = vsel %vm5338, %v5297, 0
      %v5364 = vsel %vm5338, %v5298, 0
      %v5367 = vsel %vm5338, %v5299, 0
      %v5370 = vsel %vm5338, %v5300, 0
      %v5373 = vsel %vm5338, %v5301, 0
      %v5376 = vsel %vm5338, %v5302, 0
      %v5379 = vsel %vm5338, %v5303, 0
      %v5382 = vsel %vm5338, %v5304, 0
      %v5385 = vsel %vm5338, %v5305, 0
      %v5388 = vsel %vm5338, %v5306, 0
      %v5391 = vsel %vm5338, %v5307, 0
      %v5394 = vsel %vm5338, %v5308, 0
      %v5397 = vsel %vm5338, %v5309, 0
      %v5400 = vsel %vm5338, %v5310, 0
      %v5403 = vsel %vm5338, %v5311, 0
      %v5406 = vsel %vm5338, %v5312, 0
      %v5409 = vsel %vm5338, %v5313, 0
      %v5412 = vsel %vm5338, %v5314, 0
      %v5415 = vsel %vm5338, %v5315, 0
      %v5418 = vsel %vm5338, %v5316, 0
      %v5421 = vsel %vm5338, %v5317, 0
      %v5424 = vsel %vm5338, %v5318, 0
      %v5427 = vsel %vm5338, %v5319, 0
      %v5430 = vsel %vm5338, %v5320, 0
      %v5433 = vsel %vm5338, %v5321, 0
      %5435 = vmatprep.subr.mxu0 0.0
      %5436 = vmatpush1.msra.mxu0 0.0
      %5437 = vmatprep.subr.mxu0 0.0
      %5438 = vmatpush1.msra.mxu0 0.0
      %5439 = vmatprep.subr.mxu0 0.0
      %5440 = vmatpush1.msra.mxu0 0.0
      %5441 = vmatprep.subr.mxu0 0.0
      %5442 = vmatpush1.msra.mxu0 0.0
      %5443 = vmatprep.subr.mxu0 0.0
      %5444 = vmatpush1.msra.mxu0 0.0
      %5445 = vmatprep.subr.mxu0 0.0
      %5446 = vmatpush1.msra.mxu0 0.0
      %5447 = vmatprep.subr.mxu0 0.0
      %5448 = vmatpush1.msra.mxu0 0.0
      %5449 = vmatprep.subr.mxu0 0.0
      %5450 = vmatpush1.msra.mxu0 %v5330
      %5451 = vmatprep.subr.mxu0 0.0
      %5452 = vmatpush1.msra.mxu0 %v5329
      %5453 = vmatprep.subr.mxu0 0.0
      %5454 = vmatpush1.msra.mxu0 %v5328
      %5455 = vmatprep.subr.mxu0 0.0
      %5456 = vmatpush1.msra.mxu0 %v5327
      %5457 = vmatprep.subr.mxu0 0.0
      %5458 = vmatpush1.msra.mxu0 %v5326
      %5459 = vmatprep.subr.mxu0 0.0
      %5460 = vmatpush1.msra.mxu0 %v5325
      %5461 = vmatprep.subr.mxu0 0.0
      %5462 = vmatpush1.msra.mxu0 %v5324
      %5463 = vmatprep.subr.mxu0 0.0
      %5464 = vmatpush1.msra.mxu0 %v5323
      %5465 = vmatprep.subr.mxu0 0.0
      %5466 = vmatpush1.msra.mxu0 %v5322
      %5467 = vmatprep.subr.mxu0 0.0
      %5468 = vmatpush2.msra.mxu0 0.0
      %5469 = vmatprep.subr.mxu0 0.0
      %5470 = vmatpush2.msra.mxu0 0.0
      %5471 = vmatprep.subr.mxu0 0.0
      %5472 = vmatpush2.msra.mxu0 0.0
      %5473 = vmatprep.subr.mxu0 0.0
      %5474 = vmatpush2.msra.mxu0 0.0
      %5475 = vmatprep.subr.mxu0 0.0
      %5476 = vmatpush2.msra.mxu0 0.0
      %5477 = vmatprep.subr.mxu0 0.0
      %5478 = vmatpush2.msra.mxu0 0.0
      %5479 = vmatprep.subr.mxu0 0.0
      %5480 = vmatpush2.msra.mxu0 0.0
      %5481 = vmatprep.subr.mxu0 0.0
      %5482 = vmatpush2.msra.mxu0 0.0
      %5483 = vmatprep.subr.mxu0 0.0
      %5484 = vmatpush2.msra.mxu0 0.0
      %5485 = vmatprep.subr.mxu0 0.0
      %5486 = vmatpush2.msra.mxu0 0.0
      %5487 = vmatprep.subr.mxu0 0.0
      %5488 = vmatpush2.msra.mxu0 0.0
      %5489 = vmatprep.subr.mxu0 0.0
      %5490 = vmatpush2.msra.mxu0 0.0
      %5491 = vmatprep.subr.mxu0 0.0
      %5492 = vmatpush2.msra.mxu0 0.0
      %5493 = vmatprep.subr.mxu0 0.0
      %5494 = vmatpush2.msra.mxu0 0.0
      %5495 = vmatprep.subr.mxu0 0.0
      %5496 = vmatpush2.msra.mxu0 0.0
      %5497 = vmatprep.subr.mxu0 0.0
      %5498 = vmatpush2.msra.mxu0 0.0
      %5499 = vmatprep.mubr.f32.mxu0 0.0
      %5500 = vmatmul.mubr.f32.gmra.mxu0 %v5340
      %v5501 = vpop.f32.mrf.mxu0
      %v5502 = vadd.f32 %v5336, %v5501
      %v5503 = vpop.f32.mrf.mxu0
      %5504 = vmatprep.mubr.f32.mxu0 0.0
      %5505 = vmatmul.mubr.f32.gmra.mxu0 %v5343
      %v5506 = vpop.f32.mrf.mxu0
      %v5507 = vadd.f32 %v5336, %v5506
      %v5508 = vpop.f32.mrf.mxu0
      %5509 = vmatprep.mubr.f32.mxu0 0.0
      %5510 = vmatmul.mubr.f32.gmra.mxu0 %v5346
      %v5511 = vpop.f32.mrf.mxu0
      %v5512 = vadd.f32 %v5336, %v5511
      %v5513 = vpop.f32.mrf.mxu0
      %5514 = vmatprep.mubr.f32.mxu0 0.0
      %5515 = vmatmul.mubr.f32.gmra.mxu0 %v5349
      %v5516 = vpop.f32.mrf.mxu0
      %v5517 = vadd.f32 %v5336, %v5516
      %v5518 = vpop.f32.mrf.mxu0
      %5519 = vmatprep.mubr.f32.mxu0 0.0
      %5520 = vmatmul.mubr.f32.gmra.mxu0 %v5352
      %v5521 = vpop.f32.mrf.mxu0
      %v5522 = vadd.f32 %v5336, %v5521
      %v5523 = vpop.f32.mrf.mxu0
      %5524 = vmatprep.mubr.f32.mxu0 0.0
      %5525 = vmatmul.mubr.f32.gmra.mxu0 %v5355
      %v5526 = vpop.f32.mrf.mxu0
      %v5527 = vadd.f32 %v5336, %v5526
      %v5528 = vpop.f32.mrf.mxu0
      %5529 = vmatprep.mubr.f32.mxu0 0.0
      %5530 = vmatmul.mubr.f32.gmra.mxu0 %v5358
      %v5531 = vpop.f32.mrf.mxu0
      %v5532 = vadd.f32 %v5336, %v5531
      %v5533 = vpop.f32.mrf.mxu0
      %5534 = vmatprep.mubr.f32.mxu0 0.0
      %5535 = vmatmul.mubr.f32.gmra.mxu0 %v5361
      %v5536 = vpop.f32.mrf.mxu0
      %v5537 = vadd.f32 %v5336, %v5536
      %v5538 = vpop.f32.mrf.mxu0
      %5539 = vmatprep.mubr.f32.mxu0 0.0
      %5540 = vmatmul.mubr.f32.gmra.mxu0 %v5364
      %v5541 = vpop.f32.mrf.mxu0
      %v5542 = vadd.f32 %v5336, %v5541
      %v5543 = vpop.f32.mrf.mxu0
      %5544 = vmatprep.mubr.f32.mxu0 0.0
      %5545 = vmatmul.mubr.f32.gmra.mxu0 %v5367
      %v5546 = vpop.f32.mrf.mxu0
      %v5547 = vadd.f32 %v5336, %v5546
      %v5548 = vpop.f32.mrf.mxu0
      %5549 = vmatprep.mubr.f32.mxu0 0.0
      %5550 = vmatmul.mubr.f32.gmra.mxu0 %v5370
      %v5551 = vpop.f32.mrf.mxu0
      %v5552 = vadd.f32 %v5336, %v5551
      %v5553 = vpop.f32.mrf.mxu0
      %5554 = vmatprep.mubr.f32.mxu0 0.0
      %5555 = vmatmul.mubr.f32.gmra.mxu0 %v5373
      %v5556 = vpop.f32.mrf.mxu0
      %v5557 = vadd.f32 %v5336, %v5556
      %v5558 = vpop.f32.mrf.mxu0
      %5559 = vmatprep.mubr.f32.mxu0 0.0
      %5560 = vmatmul.mubr.f32.gmra.mxu0 %v5376
      %v5561 = vpop.f32.mrf.mxu0
      %v5562 = vadd.f32 %v5336, %v5561
      %v5563 = vpop.f32.mrf.mxu0
      %5564 = vmatprep.mubr.f32.mxu0 0.0
      %5565 = vmatmul.mubr.f32.gmra.mxu0 %v5379
      %v5566 = vpop.f32.mrf.mxu0
      %v5567 = vadd.f32 %v5336, %v5566
      %v5568 = vpop.f32.mrf.mxu0
      %5569 = vmatprep.mubr.f32.mxu0 0.0
      %5570 = vmatmul.mubr.f32.gmra.mxu0 %v5382
      %v5571 = vpop.f32.mrf.mxu0
      %v5572 = vadd.f32 %v5336, %v5571
      %v5573 = vpop.f32.mrf.mxu0
      %5574 = vmatprep.mubr.f32.mxu0 0.0
      %5575 = vmatmul.mubr.f32.gmra.mxu0 %v5385
      %v5576 = vpop.f32.mrf.mxu0
      %v5577 = vadd.f32 %v5336, %v5576
      %v5578 = vpop.f32.mrf.mxu0
      %5579 = vmatprep.mubr.f32.mxu0 0.0
      %5580 = vmatmul.mubr.f32.gmra.mxu0 %v5388
      %v5581 = vpop.f32.mrf.mxu0
      %v5582 = vadd.f32 %v5336, %v5581
      %v5583 = vpop.f32.mrf.mxu0
      %5584 = vmatprep.mubr.f32.mxu0 0.0
      %5585 = vmatmul.mubr.f32.gmra.mxu0 %v5391
      %v5586 = vpop.f32.mrf.mxu0
      %v5587 = vadd.f32 %v5336, %v5586
      %v5588 = vpop.f32.mrf.mxu0
      %5589 = vmatprep.mubr.f32.mxu0 0.0
      %5590 = vmatmul.mubr.f32.gmra.mxu0 %v5394
      %v5591 = vpop.f32.mrf.mxu0
      %v5592 = vadd.f32 %v5336, %v5591
      %v5593 = vpop.f32.mrf.mxu0
      %5594 = vmatprep.mubr.f32.mxu0 0.0
      %5595 = vmatmul.mubr.f32.gmra.mxu0 %v5397
      %v5596 = vpop.f32.mrf.mxu0
      %v5597 = vadd.f32 %v5336, %v5596
      %v5598 = vpop.f32.mrf.mxu0
      %5599 = vmatprep.mubr.f32.mxu0 0.0
      %5600 = vmatmul.mubr.f32.gmra.mxu0 %v5400
      %v5601 = vpop.f32.mrf.mxu0
      %v5602 = vadd.f32 %v5336, %v5601
      %v5603 = vpop.f32.mrf.mxu0
      %5604 = vmatprep.mubr.f32.mxu0 0.0
      %5605 = vmatmul.mubr.f32.gmra.mxu0 %v5403
      %v5606 = vpop.f32.mrf.mxu0
      %v5607 = vadd.f32 %v5336, %v5606
      %v5608 = vpop.f32.mrf.mxu0
      %5609 = vmatprep.mubr.f32.mxu0 0.0
      %5610 = vmatmul.mubr.f32.gmra.mxu0 %v5406
      %v5611 = vpop.f32.mrf.mxu0
      %v5612 = vadd.f32 %v5336, %v5611
      %v5613 = vpop.f32.mrf.mxu0
      %5614 = vmatprep.mubr.f32.mxu0 0.0
      %5615 = vmatmul.mubr.f32.gmra.mxu0 %v5409
      %v5616 = vpop.f32.mrf.mxu0
      %v5617 = vadd.f32 %v5336, %v5616
      %v5618 = vpop.f32.mrf.mxu0
      %5619 = vmatprep.mubr.f32.mxu0 0.0
      %5620 = vmatmul.mubr.f32.gmra.mxu0 %v5412
      %v5621 = vpop.f32.mrf.mxu0
      %v5622 = vadd.f32 %v5336, %v5621
      %v5623 = vpop.f32.mrf.mxu0
      %5624 = vmatprep.mubr.f32.mxu0 0.0
      %5625 = vmatmul.mubr.f32.gmra.mxu0 %v5415
      %v5626 = vpop.f32.mrf.mxu0
      %v5627 = vadd.f32 %v5336, %v5626
      %v5628 = vpop.f32.mrf.mxu0
      %5629 = vmatprep.mubr.f32.mxu0 0.0
      %5630 = vmatmul.mubr.f32.gmra.mxu0 %v5418
      %v5631 = vpop.f32.mrf.mxu0
      %v5632 = vadd.f32 %v5336, %v5631
      %v5633 = vpop.f32.mrf.mxu0
      %5634 = vmatprep.mubr.f32.mxu0 0.0
      %5635 = vmatmul.mubr.f32.gmra.mxu0 %v5421
      %v5636 = vpop.f32.mrf.mxu0
      %v5637 = vadd.f32 %v5336, %v5636
      %v5638 = vpop.f32.mrf.mxu0
      %5639 = vmatprep.mubr.f32.mxu0 0.0
      %5640 = vmatmul.mubr.f32.gmra.mxu0 %v5424
      %v5641 = vpop.f32.mrf.mxu0
      %v5642 = vadd.f32 %v5336, %v5641
      %v5643 = vpop.f32.mrf.mxu0
      %5644 = vmatprep.mubr.f32.mxu0 0.0
      %5645 = vmatmul.mubr.f32.gmra.mxu0 %v5427
      %v5646 = vpop.f32.mrf.mxu0
      %v5647 = vadd.f32 %v5336, %v5646
      %v5648 = vpop.f32.mrf.mxu0
      %5649 = vmatprep.mubr.f32.mxu0 0.0
      %5650 = vmatmul.mubr.f32.gmra.mxu0 %v5430
      %v5651 = vpop.f32.mrf.mxu0
      %v5652 = vadd.f32 %v5336, %v5651
      %v5653 = vpop.f32.mrf.mxu0
      %5654 = vmatprep.mubr.f32.mxu0 0.0
      %5655 = vmatmul.mubr.f32.gmra.mxu0 %v5433
      %v5656 = vpop.f32.mrf.mxu0
      %v5657 = vadd.f32 %v5336, %v5656
      %v5658 = vpop.f32.mrf.mxu0
      %5659 = vdwg.mxu0
      %v5660 = vmax.f32 %v5502, 0.0
      %v5661 = vmax.f32 %v5507, 0.0
      %v5662 = vmax.f32 %v5512, 0.0
      %v5663 = vmax.f32 %v5517, 0.0
      %v5664 = vmax.f32 %v5522, 0.0
      %v5665 = vmax.f32 %v5527, 0.0
      %v5666 = vmax.f32 %v5532, 0.0
      %v5667 = vmax.f32 %v5537, 0.0
      %v5668 = vmax.f32 %v5542, 0.0
      %v5669 = vmax.f32 %v5547, 0.0
      %v5670 = vmax.f32 %v5552, 0.0
      %v5671 = vmax.f32 %v5557, 0.0
      %v5672 = vmax.f32 %v5562, 0.0
      %v5673 = vmax.f32 %v5567, 0.0
      %v5674 = vmax.f32 %v5572, 0.0
      %v5675 = vmax.f32 %v5577, 0.0
      %v5676 = vmax.f32 %v5582, 0.0
      %v5677 = vmax.f32 %v5587, 0.0
      %v5678 = vmax.f32 %v5592, 0.0
      %v5679 = vmax.f32 %v5597, 0.0
      %v5680 = vmax.f32 %v5602, 0.0
      %v5681 = vmax.f32 %v5607, 0.0
      %v5682 = vmax.f32 %v5612, 0.0
      %v5683 = vmax.f32 %v5617, 0.0
      %v5684 = vmax.f32 %v5622, 0.0
      %v5685 = vmax.f32 %v5627, 0.0
      %v5686 = vmax.f32 %v5632, 0.0
      %v5687 = vmax.f32 %v5637, 0.0
      %v5688 = vmax.f32 %v5642, 0.0
      %v5689 = vmax.f32 %v5647, 0.0
      %v5690 = vmax.f32 %v5652, 0.0
      %v5691 = vmax.f32 %v5657, 0.0
      %5692 = vst.msk [vmem:[%s240] sm:$0xff] %vm1788, %v5660
      %5693 = vst.msk [vmem:[%s240 + $0x8] sm:$0xff] %vm1788, %v5661
      %5694 = vst.msk [vmem:[%s240 + $0x10] sm:$0xff] %vm1788, %v5662
      %5695 = vst.msk [vmem:[%s240 + $0x18] sm:$0xff] %vm1788, %v5663
      %5696 = vst.msk [vmem:[%s240 + $0x20] sm:$0xff] %vm1788, %v5664
      %5697 = vst.msk [vmem:[%s240 + $0x28] sm:$0xff] %vm1788, %v5665
      %5698 = vst.msk [vmem:[%s240 + $0x30] sm:$0xff] %vm1788, %v5666
      %5699 = vst.msk [vmem:[%s240 + $0x38] sm:$0xff] %vm1788, %v5667
      %5700 = vst.msk [vmem:[%s240 + $0x40] sm:$0xff] %vm1788, %v5668
      %5701 = vst.msk [vmem:[%s240 + $0x48] sm:$0xff] %vm1788, %v5669
      %5702 = vst.msk [vmem:[%s240 + $0x50] sm:$0xff] %vm1788, %v5670
      %5703 = vst.msk [vmem:[%s240 + $0x58] sm:$0xff] %vm1788, %v5671
      %5704 = vst.msk [vmem:[%s240 + $0x60] sm:$0xff] %vm1788, %v5672
      %5705 = vst.msk [vmem:[%s240 + $0x68] sm:$0xff] %vm1788, %v5673
      %5706 = vst.msk [vmem:[%s240 + $0x70] sm:$0xff] %vm1788, %v5674
      %5707 = vst.msk [vmem:[%s240 + $0x78] sm:$0xff] %vm1788, %v5675
      %5708 = vst.msk [vmem:[%s240 + $0x80] sm:$0xff] %vm1788, %v5676
      %5709 = vst.msk [vmem:[%s240 + $0x88] sm:$0xff] %vm1788, %v5677
      %5710 = vst.msk [vmem:[%s240 + $0x90] sm:$0xff] %vm1788, %v5678
      %5711 = vst.msk [vmem:[%s240 + $0x98] sm:$0xff] %vm1788, %v5679
      %5712 = vst.msk [vmem:[%s240 + $0xa0] sm:$0xff] %vm1788, %v5680
      %5713 = vst.msk [vmem:[%s240 + $0xa8] sm:$0xff] %vm1788, %v5681
      %5714 = vst.msk [vmem:[%s240 + $0xb0] sm:$0xff] %vm1788, %v5682
      %5715 = vst.msk [vmem:[%s240 + $0xb8] sm:$0xff] %vm1788, %v5683
      %5716 = vst.msk [vmem:[%s240 + $0xc0] sm:$0xff] %vm1788, %v5684
      %5717 = vst.msk [vmem:[%s240 + $0xc8] sm:$0xff] %vm1788, %v5685
      %5718 = vst.msk [vmem:[%s240 + $0xd0] sm:$0xff] %vm1788, %v5686
      %5719 = vst.msk [vmem:[%s240 + $0xd8] sm:$0xff] %vm1788, %v5687
      %5720 = vst.msk [vmem:[%s240 + $0xe0] sm:$0xff] %vm1788, %v5688
      %5721 = vst.msk [vmem:[%s240 + $0xe8] sm:$0xff] %vm1788, %v5689
      %5722 = vst.msk [vmem:[%s240 + $0xf0] sm:$0xff] %vm1788, %v5690
      %5723 = vst.msk [vmem:[%s240 + $0xf8] sm:$0xff] %vm1788, %v5691
      %s5724 = sadd.s32 %s20, %s21
      %s5725 = smul.u32 32, %s5724
      %p5726 = scmp.lt.s32.totalorder %s5725, 63
      %s5727 = scalar_select %p5726, %s5725, 63
      %s5728 = smul.addr %s5727, 8
      %s5729 = scalar_lea.vmem %s5, %s5728
      // Predicated region
      $region41: #{tpu_custom_call.1} parent=39 // pred_check
        %p5730 = pneg %p158
      $region42: #{tpu_custom_call.1} parent=39 // pred_check_branch
        %5732 = sbr.rel (%p5730) target = $region44
      $region43: #{tpu_custom_call.1} parent=39 // pred_region
        %s5733 = sadd.s32 %s20, %s21
        %s5734 = smul.u32 32, %s5733
      $region44: #{tpu_custom_call.1} parent=39 // pred_fallthru
        _
    $region40: #{tpu_custom_call.1} parent=5 // pred_fallthru
      _
    %p5735 = scmp.le.s32.totalorder 2, %s11
    // Predicated region
    $region45: #{tpu_custom_call.1} parent=5 // pred_check
      %p5736 = pneg %p5735
    $region46: #{tpu_custom_call.1} parent=5 // pred_check_branch
      %5738 = sbr.rel (%p5736) target = $region48
    $region47: #{tpu_custom_call.1} parent=5 // pred_region
      %s5739 = ssub.s32 %s11, 2
      // Predicated region
      $region49: #{tpu_custom_call.1} parent=47 // pred_check
        %p5740 = pneg %p164
      $region50: #{tpu_custom_call.1} parent=47 // pred_check_branch
        %5742 = sbr.rel (%p5740) target = $region52
      $region51: #{tpu_custom_call.1} parent=47 // pred_region
        %s5743 = sadd.s32 %s22, %s23
        %s5744 = smul.u32 32, %s5743
        %p5745 = scmp.lt.s32.totalorder %s5744, 63
        %s5746 = scalar_select %p5745, %s5744, 63
        %s5747 = smul.addr %s5746, 8
        %s5748 = scalar_lea.vmem %s5, %s5747
      $region52: #{tpu_custom_call.1} parent=47 // pred_fallthru
        _
    $region48: #{tpu_custom_call.1} parent=5 // pred_fallthru
      _
  $region6: #{tpu_custom_call.1} parent=0 // loop_footer
    %s15 = sadd.s32 1, %s11
  $region7: #{tpu_custom_call.1} parent=0 // loop_footer_branch
    %10 = sbr.rel target = $region3
  $region8: #{tpu_custom_call.1} parent=0 // loop_exit
    _

</llo_original>
